<compile_context>
chip_gen: v5e
topology: v5e:2x2
jax: 0.10.0
libtpu: 0.0.40
codegen_flags: <defaults>
</compile_context>

<pallas_src>
import jax
import jax.numpy as jnp
from jax import lax
from jax.experimental import pallas as pl
from jax.experimental.pallas import tpu as pltpu

GN_GROUPS = 32
GN_EPS = 1e-6

_TARGET_TILE_ELEMS = 512 * 1024          # ~2 MiB of f32 activation per tile
_VMEM_LIMIT_BYTES = 32 * 1024 * 1024     # explicit scoped-VMEM limit (safe on v5e/v6e/v7x)


def _pick_rows(h_out, w_cols, c_big, *, even=False):
    """Largest row tile that divides h_out and fits the VMEM budget."""
    cap = max(8, _TARGET_TILE_ELEMS // max(1, w_cols * c_big))
    best = 2 if even else 1
    for d in range(1, h_out + 1):
        if h_out % d == 0 and d <= cap and (not even or d % 2 == 0):
            best = d
    return best


# ----------------------------------------------------------------------------
# GroupNorm statistics folding (stats normally come fused from the producer)
# ----------------------------------------------------------------------------
def gn_stats_kernel(x_ref, o_ref):
    # x_ref: (1, TH, W, C).  o_ref: (1, 2, C) accumulated over the row-tile axis.
    @pl.when(pl.program_id(1) == 0)
    def _():
        o_ref[...] = jnp.zeros_like(o_ref)

    th, w, c = x_ref.shape[1], x_ref.shape[2], x_ref.shape[3]
    x = x_ref[0].astype(jnp.float32).reshape(th * w, c)
    s1 = jnp.sum(x, axis=0, keepdims=True)          # (1, C)
    s2 = jnp.sum(x * x, axis=0, keepdims=True)      # (1, C)
    o_ref[0] += jnp.concatenate([s1, s2], axis=0)   # (2, C)


def gn_scale_shift(x, gamma, beta, stats=None):
    """Fold GroupNorm(32, eps=1e-6) + affine into per-(sample, channel) a, b.

    `stats` is an (N, 2, C) f32 tensor of (sum, sumsq) per channel.  In the
    decoder forward every producer kernel emits it fused, so the fallback
    stats pass below is never taken (kept for robustness only)."""
    N, H, W, C = x.shape
    if stats is None:
        th = _pick_rows(H, W, C)
        T = H // th
        stats = pl.pallas_call(
            gn_stats_kernel,
            out_shape=jax.ShapeDtypeStruct((N, 2, C), jnp.float32),
            grid=(N, T),
            in_specs=[pl.BlockSpec((1, th, W, C), lambda n, t: (n, t, 0, 0))],
            out_specs=pl.BlockSpec((1, 2, C), lambda n, t: (n, 0, 0)),
            compiler_params=pltpu.CompilerParams(
                dimension_semantics=("parallel", "arbitrary"),
                vmem_limit_bytes=_VMEM_LIMIT_BYTES),
        )(x)
    cg = C // GN_GROUPS
    s1 = stats[:, 0, :].reshape(N, GN_GROUPS, cg)
    s2 = stats[:, 1, :].reshape(N, GN_GROUPS, cg)
    cnt = float(H * W * cg)
    mean_g = jnp.sum(s1, axis=-1) / cnt
    # single-pass variance; clamp >= 0 so rsqrt can never see a negative value
    var_g = jnp.maximum(jnp.sum(s2, axis=-1) / cnt - mean_g * mean_g, 0.0)
    rstd_g = lax.rsqrt(var_g + GN_EPS)
    mean = jnp.repeat(mean_g, cg, axis=1)            # (N, C)
    rstd = jnp.repeat(rstd_g, cg, axis=1)
    a = rstd * gamma[None, :]
    b = beta[None, :] - mean * a
    return (a.reshape(N, 1, C).astype(jnp.float32),
            b.reshape(N, 1, C).astype(jnp.float32))


# ----------------------------------------------------------------------------
# Fused (GN-affine + Swish) -> (x2 nearest) -> 3x3 conv (+residual / channel_up)
# with optional fused (sum, sumsq) stats output for the NEXT GroupNorm.
# ----------------------------------------------------------------------------
def _make_conv_kernel(*, norm, swish, upsample, residual, chan_up, emit_stats,
                      th_out, th_in, w_in, cin, cout):
    def kernel(*refs):
        it = iter(refs)
        x_ref = next(it)
        halo_ref = next(it)
        a_ref = next(it) if norm else None
        b_ref = next(it) if norm else None
        w_ref = next(it)
        bias_ref = next(it)
        r_ref = next(it) if residual else None
        wu_ref = next(it) if (residual and chan_up) else None
        bu_ref = next(it) if (residual and chan_up) else None
        o_ref = next(it)
        st_ref = next(it) if emit_stats else None

        # --- row tile + 1 halo row above / below (raw activations, f32) ---
        x = x_ref[0].astype(jnp.float32)                  # (th_in, W, Cin)
        hal = halo_ref[0].astype(jnp.float32)             # (2, W, Cin)
        rows = jnp.concatenate([hal[0:1], x, hal[1:2]], axis=0)   # (th_in+2, W, Cin)

        # --- fused GroupNorm affine + Swish (stats precomputed, f32 math) ---
        if norm:
            rows = rows * a_ref[0] + b_ref[0]
        if swish:
            rows = rows * jax.nn.sigmoid(rows)

        # --- nearest x2 along H by row duplication (W handled by phase conv) ---
        if upsample:
            r0 = th_in + 2
            rows = jnp.broadcast_to(rows[:, None], (r0, 2, w_in, cin))
            rows = rows.reshape(2 * r0, w_in, cin)[1:th_out + 3]  # (th_out+2, W, Cin)

        # --- zero pad along W; zero halo rows that fall outside the image ---
        zcol = jnp.zeros((th_out + 2, 1, cin), jnp.float32)
        xp = jnp.concatenate([zcol, rows, zcol], axis=1)          # (th_out+2, W+2, Cin)
        t = pl.program_id(1)
        last = pl.num_programs(1) - 1
        rid = lax.broadcasted_iota(jnp.int32, (th_out + 2, 1, 1), 0)
        edge = ((rid == 0) & (t == 0)) | ((rid == th_out + 1) & (t == last))
        xp = jnp.where(edge, 0.0, xp)

        xb = xp.astype(jnp.bfloat16)                              # bf16 MXU operands
        wp2 = w_in + 2

        def acc_stats(s1, s2):
            st = jnp.concatenate([s1, s2], axis=0)                # (2, cout)

            @pl.when(pl.program_id(1) == 0)
            def _():
                st_ref[...] = jnp.zeros_like(st_ref)
            st_ref[0] += st

        if not upsample:
            # 9 full-width matmuls, shift-add on the OUTPUT (no per-tap im2col).
            # TODO(synk): for tiny Cin (e.g. 16) fold the 3 dx taps into one K=3*Cin
            # matmul to better fill the MXU (v5e).
            acc = jnp.zeros((th_out, w_in, cout), jnp.float32)
            for dy in range(3):
                flat = xb[dy:dy + th_out].reshape(th_out * wp2, cin)
                for dx in range(3):
                    full = jnp.dot(flat, w_ref[3 * dy + dx],
                                   preferred_element_type=jnp.float32)
                    full = full.reshape(th_out, wp2, cout)
                    acc = acc + full[:, dx:dx + w_in, :]
            acc = acc + bias_ref[...]
            if residual:
                res = r_ref[0].astype(jnp.float32)
                if chan_up:
                    cres = res.shape[-1]
                    rflat = res.astype(jnp.bfloat16).reshape(th_out * w_in, cres)
                    res = (jnp.dot(rflat, wu_ref[...],
                                   preferred_element_type=jnp.float32)
                           + bu_ref[...]).reshape(th_out, w_in, cout)
                acc = acc + res
            o_ref[0] = acc.astype(o_ref.dtype)
            if emit_stats:
                flatf = acc.reshape(th_out * w_in, cout)
                acc_stats(jnp.sum(flatf, axis=0, keepdims=True),
                          jnp.sum(flatf * flatf, axis=0, keepdims=True))
        else:
            # Fused nearest-x2 + 3x3 conv: W handled as an even/odd phase conv with
            # pre-combined weights (4 groups per dy), phases lane-concatenated; the
            # wrapper's free reshape interleaves them into the 2W-wide output.
            acc_e = jnp.zeros((th_out, w_in, cout), jnp.float32)
            acc_o = jnp.zeros((th_out, w_in, cout), jnp.float32)
            for dy in range(3):
                flat = xb[dy:dy + th_out].reshape(th_out * wp2, cin)
                f = [jnp.dot(flat, w_ref[4 * dy + g],
                             preferred_element_type=jnp.float32
                             ).reshape(th_out, wp2, cout) for g in range(4)]
                acc_e = acc_e + f[0][:, 0:w_in, :] + f[1][:, 1:w_in + 1, :]
                acc_o = acc_o + f[2][:, 1:w_in + 1, :] + f[3][:, 2:w_in + 2, :]
            acc_e = acc_e + bias_ref[...]
            acc_o = acc_o + bias_ref[...]
            out = jnp.concatenate([acc_e, acc_o], axis=-1)        # (th, W, 2*Cout)
            o_ref[0] = out.astype(o_ref.dtype)
            if emit_stats:
                fe = acc_e.reshape(th_out * w_in, cout)
                fo = acc_o.reshape(th_out * w_in, cout)
                acc_stats(jnp.sum(fe, axis=0, keepdims=True)
                          + jnp.sum(fo, axis=0, keepdims=True),
                          jnp.sum(fe * fe, axis=0, keepdims=True)
                          + jnp.sum(fo * fo, axis=0, keepdims=True))

    return kernel


def _build_halo(x, th_in):
    """Rows t*th_in - 1 and (t+1)*th_in for every row tile (clamped; the kernel
    zeroes the copies that fall outside the image)."""
    N, H, W, C = x.shape
    T = H // th_in
    tt = jnp.arange(T)
    top = jnp.clip(tt * th_in - 1, 0, H - 1)
    bot = jnp.clip((tt + 1) * th_in, 0, H - 1)
    idx = jnp.stack([top, bot], axis=1)               # (T, 2)
    return x[:, idx, :, :].reshape(N, 2 * T, W, C)    # (N, 2T, W, C)


def fused_conv(x, w, b, *, scale_shift=None, swish=False, upsample=False,
               residual=None, chan_up=None, out_pad=None, emit_stats=True):
    """Row-tiled fused (GN affine + Swish) -> (x2 nearest) -> conv3x3(pad=1)
    -> (+ residual / 1x1 channel_up skip).  x: NHWC; w: torch (Cout,Cin,3,3).
    Returns (out, stats) with stats = (N, 2, Cout) per-channel (sum, sumsq)
    of the output (for the next GroupNorm), or None if emit_stats=False."""
    N, H, W, Cin = x.shape
    Cout = int(w.shape[0])
    cout_p = Cout if out_pad is None else max(Cout, out_pad)
    norm = scale_shift is not None
    assert not (upsample and (norm or residual is not None))
    assert not (emit_stats and cout_p != Cout)
    H_out = 2 * H if upsample else H
    W_out = 2 * W if upsample else W

    th_out = _pick_rows(H_out, W_out, max(Cin, cout_p), even=upsample)
    th_in = th_out // 2 if upsample else th_out
    T = H_out // th_out

    halo = _build_halo(x, th_in)

    # torch conv weight -> 9 x (Cin, Cout) taps, bf16 for the MXU.
    w9 = jnp.transpose(w, (2, 3, 1, 0)).reshape(9, Cin, Cout)
    if cout_p != Cout:
        w9 = jnp.pad(w9, ((0, 0), (0, 0), (0, cout_p - Cout)))
        b = jnp.pad(b, ((0, cout_p - Cout),))
    if upsample:
        w9r = w9.reshape(3, 3, Cin, cout_p)
        wk = jnp.stack([w9r[:, 0], w9r[:, 1] + w9r[:, 2],
                        w9r[:, 0] + w9r[:, 1], w9r[:, 2]], axis=1)
        wk = wk.reshape(12, Cin, cout_p)
    else:
        wk = w9
    wk = wk.astype(jnp.bfloat16)
    bias = b.reshape(1, cout_p).astype(jnp.float32)

    args = [x, halo]
    in_specs = [
        pl.BlockSpec((1, th_in, W, Cin), lambda n, t: (n, t, 0, 0)),
        pl.BlockSpec((1, 2, W, Cin), lambda n, t: (n, t, 0, 0)),
    ]
    if norm:
        a_s, b_s = scale_shift
        args += [a_s, b_s]
        in_specs += [pl.BlockSpec((1, 1, Cin), lambda n, t: (n, 0, 0))] * 2
    args += [wk, bias]
    in_specs += [pl.BlockSpec(wk.shape, lambda n, t: (0, 0, 0)),
                 pl.BlockSpec((1, cout_p), lambda n, t: (0, 0))]

    has_chan_up = chan_up is not None
    cres = 0
    if residual is not None:
        cres = residual.shape[-1]
        args.append(residual)
        in_specs.append(pl.BlockSpec((1, th_out, W_out, cres),
                                     lambda n, t: (n, t, 0, 0)))
        if has_chan_up:
            wu, bu = chan_up
            wut = wu[:, :, 0, 0].T
            but = bu
            if cout_p != Cout:
                wut = jnp.pad(wut, ((0, 0), (0, cout_p - Cout)))
                but = jnp.pad(but, ((0, cout_p - Cout),))
            args += [wut.astype(jnp.bfloat16),
                     but.reshape(1, cout_p).astype(jnp.float32)]
            in_specs += [pl.BlockSpec((cres, cout_p), lambda n, t: (0, 0)),
                         pl.BlockSpec((1, cout_p), lambda n, t: (0, 0))]

    if upsample:
        main_shape = jax.ShapeDtypeStruct((N, H_out, W, 2 * cout_p), x.dtype)
        main_spec = pl.BlockSpec((1, th_out, W, 2 * cout_p), lambda n, t: (n, t, 0, 0))
    else:
        main_shape = jax.ShapeDtypeStruct((N, H_out, W_out, cout_p), x.dtype)
        main_spec = pl.BlockSpec((1, th_out, W_out, cout_p), lambda n, t: (n, t, 0, 0))

    if emit_stats:
        out_shape = (main_shape,
                     jax.ShapeDtypeStruct((N, 2, cout_p), jnp.float32))
        out_specs = [main_spec,
                     pl.BlockSpec((1, 2, cout_p), lambda n, t: (n, 0, 0))]
        # stats block is revisited along the row-tile axis -> must be arbitrary
        dims = ("parallel", "arbitrary")
    else:
        out_shape = main_shape
        out_specs = main_spec
        dims = ("parallel", "parallel")

    kern = _make_conv_kernel(norm=norm, swish=swish, upsample=upsample,
                             residual=residual is not None, chan_up=has_chan_up,
                             emit_stats=emit_stats,
                             th_out=th_out, th_in=th_in, w_in=W,
                             cin=Cin, cout=cout_p)

    taps = 12 if upsample else 9
    flops = 2 * N * H_out * (W + 2) * Cin * cout_p * taps
    if residual is not None and has_chan_up:
        flops += 2 * N * H_out * W_out * cres * cout_p
    bytes_accessed = 4 * (x.size + halo.size + N * H_out * W_out * cout_p
                          + (residual.size if residual is not None else 0)
                          + (2 * N * cout_p if emit_stats else 0)) + 2 * wk.size
    cost = pl.CostEstimate(flops=int(flops),
                           transcendentals=int(N * H * W * Cin if swish else 0),
                           bytes_accessed=int(bytes_accessed))

    res = pl.pallas_call(
        kern,
        out_shape=out_shape,
        grid=(N, T),
        in_specs=in_specs,
        out_specs=out_specs,
        compiler_params=pltpu.CompilerParams(
            dimension_semantics=dims,
            vmem_limit_bytes=_VMEM_LIMIT_BYTES),
        cost_estimate=cost,
    )(*args)

    if emit_stats:
        out, stats = res
    else:
        out, stats = res, None

    if upsample:
        out = out.reshape(N, H_out, W_out, cout_p)   # free interleave of W phases
    if cout_p != Cout:
        out = out[..., :Cout]
    return out, stats


# ----------------------------------------------------------------------------
# NonLocalBlock: fused GN-affine + q/k/v + softmax attention + proj + residual
# (also emits fused (sum, sumsq) stats of its output for the next GroupNorm)
# ----------------------------------------------------------------------------
def attention_kernel(x_ref, a_ref, b_ref, wq_ref, bq_ref, wk_ref, bk_ref,
                     wv_ref, bv_ref, wp_ref, bp_ref, o_ref, st_ref):
    c = x_ref.shape[2]
    x = x_ref[0].astype(jnp.float32)                  # (HW, C)
    h = x * a_ref[0] + b_ref[0]                       # folded GroupNorm affine (f32)
    hb = h.astype(jnp.bfloat16)
    q = jnp.dot(hb, wq_ref[...], preferred_element_type=jnp.float32) + bq_ref[...]
    k = jnp.dot(hb, wk_ref[...], preferred_element_type=jnp.float32) + bk_ref[...]
    v = jnp.dot(hb, wv_ref[...], preferred_element_type=jnp.float32) + bv_ref[...]
    # TODO(synk): flash-style KV tiling (online softmax) if latent_resolution > 32,
    # to keep the (HW, HW) score matrix out of VMEM on v7x.
    s = lax.dot_general(q.astype(jnp.bfloat16), k.astype(jnp.bfloat16),
                        (((1,), (1,)), ((), ())),
                        preferred_element_type=jnp.float32) * (float(c) ** -0.5)
    s = s - jnp.max(s, axis=-1, keepdims=True)        # f32 softmax
    p = jnp.exp(s)
    p = p * pl.reciprocal(jnp.sum(p, axis=-1, keepdims=True), approx=True)
    a = jnp.dot(p.astype(jnp.bfloat16), v.astype(jnp.bfloat16),
                preferred_element_type=jnp.float32)
    out = x + jnp.dot(a.astype(jnp.bfloat16), wp_ref[...],
                      preferred_element_type=jnp.float32) + bp_ref[...]
    o_ref[0] = out.astype(o_ref.dtype)
    s1 = jnp.sum(out, axis=0, keepdims=True)          # fused GN stats of output
    s2 = jnp.sum(out * out, axis=0, keepdims=True)
    st_ref[0] = jnp.concatenate([s1, s2], axis=0)


def attention_block(x, p, stats_in=None):
    N, H, W, C = x.shape
    hw = H * W
    a_s, b_s = gn_scale_shift(x, p['gn']['g'], p['gn']['b'], stats=stats_in)

    def pw(cp):
        wc, bc = cp
        return (wc[:, :, 0, 0].T.astype(jnp.bfloat16),
                bc.reshape(1, C).astype(jnp.float32))

    wq, bq = pw(p['q']); wk, bk = pw(p['k']); wv, bv = pw(p['v']); wp, bp = pw(p['proj'])
    mat = pl.BlockSpec((C, C), lambda n: (0, 0))
    vec = pl.BlockSpec((1, C), lambda n: (0, 0))
    ab = pl.BlockSpec((1, 1, C), lambda n: (n, 0, 0))
    cost = pl.CostEstimate(
        flops=int(2 * N * (4 * hw * C * C + 2 * hw * hw * C)),
        transcendentals=int(N * hw * hw),
        bytes_accessed=int(4 * 2 * N * hw * C + 2 * 4 * C * C + 4 * 2 * N * C))
    out, stats = pl.pallas_call(
        attention_kernel,
        out_shape=(jax.ShapeDtypeStruct((N, hw, C), x.dtype),
                   jax.ShapeDtypeStruct((N, 2, C), jnp.float32)),
        grid=(N,),
        in_specs=[pl.BlockSpec((1, hw, C), lambda n: (n, 0, 0)),
                  ab, ab, mat, vec, mat, vec, mat, vec, mat, vec],
        out_specs=[pl.BlockSpec((1, hw, C), lambda n: (n, 0, 0)),
                   pl.BlockSpec((1, 2, C), lambda n: (n, 0, 0))],
        compiler_params=pltpu.CompilerParams(
            dimension_semantics=("parallel",),
            vmem_limit_bytes=_VMEM_LIMIT_BYTES),
        cost_estimate=cost,
    )(x.reshape(N, hw, C), a_s, b_s, wq, bq, wk, bk, wv, bv, wp, bp)
    return out.reshape(N, H, W, C), stats


# ----------------------------------------------------------------------------
# Parameters (deterministic, mirrors nn.Module __init__ shapes)
# ----------------------------------------------------------------------------
def conv_params(key, cin, cout, ksize):
    kw, kb = jax.random.split(key)
    bound = 1.0 / (cin * ksize * ksize) ** 0.5
    w = jax.random.uniform(kw, (cout, cin, ksize, ksize), jnp.float32, -bound, bound)
    b = jax.random.uniform(kb, (cout,), jnp.float32, -bound, bound)
    return (w, b)


def gn_params(c):
    return {'g': jnp.ones((c,), jnp.float32), 'b': jnp.zeros((c,), jnp.float32)}


def res_params(key, cin, cout):
    k1, k2, k3 = jax.random.split(key, 3)
    p = {'gn1': gn_params(cin), 'conv1': conv_params(k1, cin, cout, 3),
         'gn2': gn_params(cout), 'conv2': conv_params(k2, cout, cout, 3)}
    if cin != cout:
        p['chan_up'] = conv_params(k3, cin, cout, 1)
    return p


def attn_params(key, c):
    ks = jax.random.split(key, 4)
    return {'gn': gn_params(c),
            'q': conv_params(ks[0], c, c, 1), 'k': conv_params(ks[1], c, c, 1),
            'v': conv_params(ks[2], c, c, 1), 'proj': conv_params(ks[3], c, c, 1)}


def build_decoder(key, configs):
    channels = configs['dec_channels']
    num_ch = len(channels)
    attn_res = [configs['latent_resolution']]
    curr_res = configs['latent_resolution']
    cnt = [0]

    def nk():
        cnt[0] += 1
        return jax.random.fold_in(key, cnt[0])

    layers = [('conv3', conv_params(nk(), configs['latent_dim'], channels[-1], 3)),
              ('res', res_params(nk(), channels[-1], channels[-1])),
              ('attn', attn_params(nk(), channels[-1])),
              ('res', res_params(nk(), channels[-1], channels[-1]))]
    in_ch = channels[num_ch - 1]
    for i in reversed(range(num_ch)):
        out_ch = channels[i]
        for _ in range(3):
            layers.append(('res', res_params(nk(), in_ch, out_ch)))
            in_ch = out_ch
            if curr_res in attn_res:
                layers.append(('attn', attn_params(nk(), in_ch)))
        if i == 4 or i == 2:
            layers.append(('up', conv_params(nk(), in_ch, in_ch, 3)))
            curr_res *= 2
    layers.append(('final', {'gn': gn_params(in_ch),
                             'conv': conv_params(nk(), in_ch,
                                                 configs['image_channels'], 3)}))
    return layers


# ----------------------------------------------------------------------------
# Forward pass
# ----------------------------------------------------------------------------
def residual_block(x, p, stats_x=None):
    a1, b1 = gn_scale_shift(x, p['gn1']['g'], p['gn1']['b'], stats=stats_x)
    h, stats_h = fused_conv(x, *p['conv1'], scale_shift=(a1, b1), swish=True)
    a2, b2 = gn_scale_shift(h, p['gn2']['g'], p['gn2']['b'], stats=stats_h)
    # GN2 + Swish + conv2 + residual (and the 1x1 channel_up skip) in one kernel
    return fused_conv(h, *p['conv2'], scale_shift=(a2, b2), swish=True,
                      residual=x, chan_up=p.get('chan_up'))


def decoder_forward(x_nchw, layers):
    x = jnp.transpose(x_nchw, (0, 2, 3, 1))          # NCHW -> NHWC for the kernels
    stats = None                                      # fused (sum, sumsq) of x
    for kind, p in layers:
        if kind == 'conv3':
            x, stats = fused_conv(x, *p)
        elif kind == 'res':
            x, stats = residual_block(x, p, stats)
        elif kind == 'attn':
            x, stats = attention_block(x, p, stats)
        elif kind == 'up':
            # fused nearest-x2 upsample + 3x3 conv (no 4x HBM intermediate)
            x, stats = fused_conv(x, *p, upsample=True)
        elif kind == 'final':
            # final GroupNorm (no Swish) fused into the last conv; output channels
            # padded to a lane-dense 128 (dense stores) and sliced back outside.
            a_s, b_s = gn_scale_shift(x, p['gn']['g'], p['gn']['b'], stats=stats)
            x, _ = fused_conv(x, *p['conv'], scale_shift=(a_s, b_s), swish=False,
                              out_pad=128, emit_stats=False)
    return jnp.transpose(x, (0, 3, 1, 2))             # back to NCHW


if __name__ == "__main__":
    configs = {
        'latent_dim': 16,
        'latent_resolution': 8,
        'dec_channels': [32, 64, 64],   # channels must be multiples of 32 (GN groups)
        'image_channels': 3,
    }
    key = jax.random.PRNGKey(0)
    layers = build_decoder(key, configs)

    B = 2
    x = jax.random.normal(jax.random.fold_in(key, 12345),
                          (B, configs['latent_dim'],
                           configs['latent_resolution'],
                           configs['latent_resolution']),
                          jnp.float32)

    y = decoder_forward(x, layers)
    y = jax.block_until_ready(y)

    # one upsample (only i==2 triggers for len-3 dec_channels): 8 -> 16
    assert y.shape == (B, configs['image_channels'], 16, 16), y.shape
    assert bool(jnp.all(jnp.isfinite(y)))
    print("KERNEL_OK")
</pallas_src>

<mosaic_0001>
module attributes {stable_mosaic.version = 11 : i64} {
  func.func @kernel(%arg0: i32, %arg1: i32, %arg2: memref<1x8x8x16xf32, #tpu.memory_space<vmem>>, %arg3: memref<1x2x8x16xf32, #tpu.memory_space<vmem>>, %arg4: memref<9x16x64xbf16, #tpu.memory_space<vmem>>, %arg5: memref<1x64xf32, #tpu.memory_space<vmem>>, %arg6: memref<1x8x8x64xf32, #tpu.memory_space<vmem>>, %arg7: memref<1x2x64xf32, #tpu.memory_space<vmem>>) attributes {dimension_semantics = [#tpu.dimension_semantics<parallel>, #tpu.dimension_semantics<arbitrary>], iteration_bounds = array<i64: 2, 1>, scalar_prefetch = 0 : i64, scratch_operands = 0 : i64, tpu.core_type = #tpu.core_type<tc>, window_params = [{transform_indices = @transform_0, window_bounds = array<i64: 1, 8, 8, 16>}, {transform_indices = @transform_1, window_bounds = array<i64: 1, 2, 8, 16>}, {pipeline_mode = #tpu.pipeline_mode<synchronous>, transform_indices = @transform_2, window_bounds = array<i64: 9, 16, 64>}, {pipeline_mode = #tpu.pipeline_mode<synchronous>, transform_indices = @transform_3, window_bounds = array<i64: 1, 64>}, {transform_indices = @transform_4, window_bounds = array<i64: 1, 8, 8, 64>}, {transform_indices = @transform_5, window_bounds = array<i64: 1, 2, 64>}]} {
    %c0 = arith.constant 0 : index
    %c0_0 = arith.constant 0 : index
    %c0_1 = arith.constant 0 : index
    %c0_2 = arith.constant 0 : index
    %0 = vector.load %arg2[%c0, %c0_0, %c0_1, %c0_2] : memref<1x8x8x16xf32, #tpu.memory_space<vmem>>, vector<1x8x8x16xf32>
    %1 = vector.shape_cast %0 : vector<1x8x8x16xf32> to vector<8x8x16xf32>
    %c0_3 = arith.constant 0 : index
    %c0_4 = arith.constant 0 : index
    %c0_5 = arith.constant 0 : index
    %c0_6 = arith.constant 0 : index
    %2 = vector.load %arg3[%c0_3, %c0_4, %c0_5, %c0_6] : memref<1x2x8x16xf32, #tpu.memory_space<vmem>>, vector<1x2x8x16xf32>
    %3 = vector.shape_cast %2 : vector<1x2x8x16xf32> to vector<2x8x16xf32>
    %4 = vector.extract_strided_slice %3 {offsets = [0, 0, 0], sizes = [1, 8, 16], strides = [1, 1, 1]} : vector<2x8x16xf32> to vector<1x8x16xf32>
    %5 = vector.extract_strided_slice %3 {offsets = [1, 0, 0], sizes = [1, 8, 16], strides = [1, 1, 1]} : vector<2x8x16xf32> to vector<1x8x16xf32>
    %6 = tpu.concatenate %4, %1, %5 in 0 : vector<1x8x16xf32>, vector<8x8x16xf32>, vector<1x8x16xf32> -> vector<10x8x16xf32>
    %cst = arith.constant 0.000000e+00 : f32
    %7 = vector.broadcast %cst : f32 to vector<10x1x16xf32>
    %8 = tpu.concatenate %7, %6, %7 in 1 : vector<10x1x16xf32>, vector<10x8x16xf32>, vector<10x1x16xf32> -> vector<10x10x16xf32>
    %9 = tpu.iota {dimensions = array<i32: 0>} : vector<10x1x1xi32>
    %c0_i32 = arith.constant 0 : i32
    %10 = vector.broadcast %c0_i32 : i32 to vector<10x1x1xi32>
    %11 = arith.cmpi eq, %9, %10 : vector<10x1x1xi32>
    %c0_i32_7 = arith.constant 0 : i32
    %12 = arith.cmpi eq, %arg1, %c0_i32_7 : i32
    %13 = vector.broadcast %12 : i1 to vector<10x1x1xi1>
    %14 = arith.andi %11, %13 : vector<10x1x1xi1>
    %c9_i32 = arith.constant 9 : i32
    %15 = vector.broadcast %c9_i32 : i32 to vector<10x1x1xi32>
    %16 = arith.cmpi eq, %9, %15 : vector<10x1x1xi32>
    %c0_i32_8 = arith.constant 0 : i32
    %17 = arith.cmpi eq, %arg1, %c0_i32_8 : i32
    %18 = vector.broadcast %17 : i1 to vector<10x1x1xi1>
    %19 = arith.andi %16, %18 : vector<10x1x1xi1>
    %20 = arith.ori %14, %19 : vector<10x1x1xi1>
    %cst_9 = arith.constant 0.000000e+00 : f32
    %21 = vector.shape_cast %20 : vector<10x1x1xi1> to vector<10x1x1xi1>
    %22 = vector.broadcast %21 : vector<10x1x1xi1> to vector<10x10x16xi1>
    %23 = vector.broadcast %cst_9 : f32 to vector<10x10x16xf32>
    %24 = arith.select %22, %23, %8 : vector<10x10x16xi1>, vector<10x10x16xf32>
    %25 = arith.truncf %24 : vector<10x10x16xf32> to vector<10x10x16xbf16>
    %cst_10 = arith.constant 0.000000e+00 : f32
    %26 = vector.broadcast %cst_10 : f32 to vector<8x8x64xf32>
    %27 = vector.extract_strided_slice %25 {offsets = [0, 0, 0], sizes = [8, 10, 16], strides = [1, 1, 1]} : vector<10x10x16xbf16> to vector<8x10x16xbf16>
    %28 = vector.shape_cast %27 : vector<8x10x16xbf16> to vector<80x16xbf16>
    %c0_11 = arith.constant 0 : index
    %c0_12 = arith.constant 0 : index
    %c0_13 = arith.constant 0 : index
    %29 = vector.load %arg4[%c0_11, %c0_12, %c0_13] : memref<9x16x64xbf16, #tpu.memory_space<vmem>>, vector<1x16x64xbf16>
    %30 = vector.shape_cast %29 : vector<1x16x64xbf16> to vector<16x64xbf16>
    %cst_14 = arith.constant dense<0.000000e+00> : vector<80x64xf32>
    %31 = tpu.matmul %28, %30, %cst_14 {dimension_numbers = #tpu.dot_dimension_numbers<[1], [0], [0], [1], [0, 0, 1, 1], [], []>} : vector<80x16xbf16>, vector<16x64xbf16>, vector<80x64xf32> -> vector<80x64xf32>
    %32 = vector.shape_cast %31 : vector<80x64xf32> to vector<8x10x64xf32>
    %33 = vector.extract_strided_slice %32 {offsets = [0, 0, 0], sizes = [8, 8, 64], strides = [1, 1, 1]} : vector<8x10x64xf32> to vector<8x8x64xf32>
    %34 = arith.addf %26, %33 : vector<8x8x64xf32>
    %c1 = arith.constant 1 : index
    %c0_15 = arith.constant 0 : index
    %c0_16 = arith.constant 0 : index
    %35 = vector.load %arg4[%c1, %c0_15, %c0_16] : memref<9x16x64xbf16, #tpu.memory_space<vmem>>, vector<1x16x64xbf16>
    %36 = vector.shape_cast %35 : vector<1x16x64xbf16> to vector<16x64xbf16>
    %cst_17 = arith.constant dense<0.000000e+00> : vector<80x64xf32>
    %37 = tpu.matmul %28, %36, %cst_17 {dimension_numbers = #tpu.dot_dimension_numbers<[1], [0], [0], [1], [0, 0, 1, 1], [], []>} : vector<80x16xbf16>, vector<16x64xbf16>, vector<80x64xf32> -> vector<80x64xf32>
    %38 = vector.shape_cast %37 : vector<80x64xf32> to vector<8x10x64xf32>
    %39 = vector.extract_strided_slice %38 {offsets = [0, 1, 0], sizes = [8, 8, 64], strides = [1, 1, 1]} : vector<8x10x64xf32> to vector<8x8x64xf32>
    %40 = arith.addf %34, %39 : vector<8x8x64xf32>
    %c2 = arith.constant 2 : index
    %c0_18 = arith.constant 0 : index
    %c0_19 = arith.constant 0 : index
    %41 = vector.load %arg4[%c2, %c0_18, %c0_19] : memref<9x16x64xbf16, #tpu.memory_space<vmem>>, vector<1x16x64xbf16>
    %42 = vector.shape_cast %41 : vector<1x16x64xbf16> to vector<16x64xbf16>
    %cst_20 = arith.constant dense<0.000000e+00> : vector<80x64xf32>
    %43 = tpu.matmul %28, %42, %cst_20 {dimension_numbers = #tpu.dot_dimension_numbers<[1], [0], [0], [1], [0, 0, 1, 1], [], []>} : vector<80x16xbf16>, vector<16x64xbf16>, vector<80x64xf32> -> vector<80x64xf32>
    %44 = vector.shape_cast %43 : vector<80x64xf32> to vector<8x10x64xf32>
    %45 = vector.extract_strided_slice %44 {offsets = [0, 2, 0], sizes = [8, 8, 64], strides = [1, 1, 1]} : vector<8x10x64xf32> to vector<8x8x64xf32>
    %46 = arith.addf %40, %45 : vector<8x8x64xf32>
    %47 = vector.extract_strided_slice %25 {offsets = [1, 0, 0], sizes = [8, 10, 16], strides = [1, 1, 1]} : vector<10x10x16xbf16> to vector<8x10x16xbf16>
    %48 = vector.shape_cast %47 : vector<8x10x16xbf16> to vector<80x16xbf16>
    %c3 = arith.constant 3 : index
    %c0_21 = arith.constant 0 : index
    %c0_22 = arith.constant 0 : index
    %49 = vector.load %arg4[%c3, %c0_21, %c0_22] : memref<9x16x64xbf16, #tpu.memory_space<vmem>>, vector<1x16x64xbf16>
    %50 = vector.shape_cast %49 : vector<1x16x64xbf16> to vector<16x64xbf16>
    %cst_23 = arith.constant dense<0.000000e+00> : vector<80x64xf32>
    %51 = tpu.matmul %48, %50, %cst_23 {dimension_numbers = #tpu.dot_dimension_numbers<[1], [0], [0], [1], [0, 0, 1, 1], [], []>} : vector<80x16xbf16>, vector<16x64xbf16>, vector<80x64xf32> -> vector<80x64xf32>
    %52 = vector.shape_cast %51 : vector<80x64xf32> to vector<8x10x64xf32>
    %53 = vector.extract_strided_slice %52 {offsets = [0, 0, 0], sizes = [8, 8, 64], strides = [1, 1, 1]} : vector<8x10x64xf32> to vector<8x8x64xf32>
    %54 = arith.addf %46, %53 : vector<8x8x64xf32>
    %c4 = arith.constant 4 : index
    %c0_24 = arith.constant 0 : index
    %c0_25 = arith.constant 0 : index
    %55 = vector.load %arg4[%c4, %c0_24, %c0_25] : memref<9x16x64xbf16, #tpu.memory_space<vmem>>, vector<1x16x64xbf16>
    %56 = vector.shape_cast %55 : vector<1x16x64xbf16> to vector<16x64xbf16>
    %cst_26 = arith.constant dense<0.000000e+00> : vector<80x64xf32>
    %57 = tpu.matmul %48, %56, %cst_26 {dimension_numbers = #tpu.dot_dimension_numbers<[1], [0], [0], [1], [0, 0, 1, 1], [], []>} : vector<80x16xbf16>, vector<16x64xbf16>, vector<80x64xf32> -> vector<80x64xf32>
    %58 = vector.shape_cast %57 : vector<80x64xf32> to vector<8x10x64xf32>
    %59 = vector.extract_strided_slice %58 {offsets = [0, 1, 0], sizes = [8, 8, 64], strides = [1, 1, 1]} : vector<8x10x64xf32> to vector<8x8x64xf32>
    %60 = arith.addf %54, %59 : vector<8x8x64xf32>
    %c5 = arith.constant 5 : index
    %c0_27 = arith.constant 0 : index
    %c0_28 = arith.constant 0 : index
    %61 = vector.load %arg4[%c5, %c0_27, %c0_28] : memref<9x16x64xbf16, #tpu.memory_space<vmem>>, vector<1x16x64xbf16>
    %62 = vector.shape_cast %61 : vector<1x16x64xbf16> to vector<16x64xbf16>
    %cst_29 = arith.constant dense<0.000000e+00> : vector<80x64xf32>
    %63 = tpu.matmul %48, %62, %cst_29 {dimension_numbers = #tpu.dot_dimension_numbers<[1], [0], [0], [1], [0, 0, 1, 1], [], []>} : vector<80x16xbf16>, vector<16x64xbf16>, vector<80x64xf32> -> vector<80x64xf32>
    %64 = vector.shape_cast %63 : vector<80x64xf32> to vector<8x10x64xf32>
    %65 = vector.extract_strided_slice %64 {offsets = [0, 2, 0], sizes = [8, 8, 64], strides = [1, 1, 1]} : vector<8x10x64xf32> to vector<8x8x64xf32>
    %66 = arith.addf %60, %65 : vector<8x8x64xf32>
    %67 = vector.extract_strided_slice %25 {offsets = [2, 0, 0], sizes = [8, 10, 16], strides = [1, 1, 1]} : vector<10x10x16xbf16> to vector<8x10x16xbf16>
    %68 = vector.shape_cast %67 : vector<8x10x16xbf16> to vector<80x16xbf16>
    %c6 = arith.constant 6 : index
    %c0_30 = arith.constant 0 : index
    %c0_31 = arith.constant 0 : index
    %69 = vector.load %arg4[%c6, %c0_30, %c0_31] : memref<9x16x64xbf16, #tpu.memory_space<vmem>>, vector<1x16x64xbf16>
    %70 = vector.shape_cast %69 : vector<1x16x64xbf16> to vector<16x64xbf16>
    %cst_32 = arith.constant dense<0.000000e+00> : vector<80x64xf32>
    %71 = tpu.matmul %68, %70, %cst_32 {dimension_numbers = #tpu.dot_dimension_numbers<[1], [0], [0], [1], [0, 0, 1, 1], [], []>} : vector<80x16xbf16>, vector<16x64xbf16>, vector<80x64xf32> -> vector<80x64xf32>
    %72 = vector.shape_cast %71 : vector<80x64xf32> to vector<8x10x64xf32>
    %73 = vector.extract_strided_slice %72 {offsets = [0, 0, 0], sizes = [8, 8, 64], strides = [1, 1, 1]} : vector<8x10x64xf32> to vector<8x8x64xf32>
    %74 = arith.addf %66, %73 : vector<8x8x64xf32>
    %c7 = arith.constant 7 : index
    %c0_33 = arith.constant 0 : index
    %c0_34 = arith.constant 0 : index
    %75 = vector.load %arg4[%c7, %c0_33, %c0_34] : memref<9x16x64xbf16, #tpu.memory_space<vmem>>, vector<1x16x64xbf16>
    %76 = vector.shape_cast %75 : vector<1x16x64xbf16> to vector<16x64xbf16>
    %cst_35 = arith.constant dense<0.000000e+00> : vector<80x64xf32>
    %77 = tpu.matmul %68, %76, %cst_35 {dimension_numbers = #tpu.dot_dimension_numbers<[1], [0], [0], [1], [0, 0, 1, 1], [], []>} : vector<80x16xbf16>, vector<16x64xbf16>, vector<80x64xf32> -> vector<80x64xf32>
    %78 = vector.shape_cast %77 : vector<80x64xf32> to vector<8x10x64xf32>
    %79 = vector.extract_strided_slice %78 {offsets = [0, 1, 0], sizes = [8, 8, 64], strides = [1, 1, 1]} : vector<8x10x64xf32> to vector<8x8x64xf32>
    %80 = arith.addf %74, %79 : vector<8x8x64xf32>
    %c8 = arith.constant 8 : index
    %c0_36 = arith.constant 0 : index
    %c0_37 = arith.constant 0 : index
    %81 = vector.load %arg4[%c8, %c0_36, %c0_37] : memref<9x16x64xbf16, #tpu.memory_space<vmem>>, vector<1x16x64xbf16>
    %82 = vector.shape_cast %81 : vector<1x16x64xbf16> to vector<16x64xbf16>
    %cst_38 = arith.constant dense<0.000000e+00> : vector<80x64xf32>
    %83 = tpu.matmul %68, %82, %cst_38 {dimension_numbers = #tpu.dot_dimension_numbers<[1], [0], [0], [1], [0, 0, 1, 1], [], []>} : vector<80x16xbf16>, vector<16x64xbf16>, vector<80x64xf32> -> vector<80x64xf32>
    %84 = vector.shape_cast %83 : vector<80x64xf32> to vector<8x10x64xf32>
    %85 = vector.extract_strided_slice %84 {offsets = [0, 2, 0], sizes = [8, 8, 64], strides = [1, 1, 1]} : vector<8x10x64xf32> to vector<8x8x64xf32>
    %86 = arith.addf %80, %85 : vector<8x8x64xf32>
    %c0_39 = arith.constant 0 : index
    %c0_40 = arith.constant 0 : index
    %87 = vector.load %arg5[%c0_39, %c0_40] : memref<1x64xf32, #tpu.memory_space<vmem>>, vector<1x64xf32>
    %88 = vector.shape_cast %87 : vector<1x64xf32> to vector<1x1x64xf32>
    %89 = vector.broadcast %88 : vector<1x1x64xf32> to vector<8x8x64xf32>
    %90 = arith.addf %86, %89 : vector<8x8x64xf32>
    %c0_41 = arith.constant 0 : index
    %c0_42 = arith.constant 0 : index
    %c0_43 = arith.constant 0 : index
    %c0_44 = arith.constant 0 : index
    %91 = vector.load %arg6[%c0_41, %c0_42, %c0_43, %c0_44] : memref<1x8x8x64xf32, #tpu.memory_space<vmem>>, vector<1x8x8x64xf32>
    %92 = vector.shape_cast %91 : vector<1x8x8x64xf32> to vector<8x8x64xf32>
    %93 = vector.shape_cast %90 : vector<8x8x64xf32> to vector<1x8x8x64xf32>
    tpu.vector_store %arg6[%c0_41, %c0_42, %c0_43, %c0_44], %93 {strides = array<i32>} : memref<1x8x8x64xf32, #tpu.memory_space<vmem>>, vector<1x8x8x64xf32>,
    %94 = vector.shape_cast %90 : vector<8x8x64xf32> to vector<64x64xf32>
    %cst_45 = arith.constant dense<0.000000e+00> : vector<64xf32>
    %95 = vector.multi_reduction <add>, %94, %cst_45 [0] : vector<64x64xf32> to vector<64xf32>
    %96 = vector.shape_cast %95 : vector<64xf32> to vector<1x64xf32>
    %97 = arith.mulf %94, %94 : vector<64x64xf32>
    %cst_46 = arith.constant dense<0.000000e+00> : vector<64xf32>
    %98 = vector.multi_reduction <add>, %97, %cst_46 [0] : vector<64x64xf32> to vector<64xf32>
    %99 = vector.shape_cast %98 : vector<64xf32> to vector<1x64xf32>
    %100 = tpu.concatenate %96, %99 in 0 : vector<1x64xf32>, vector<1x64xf32> -> vector<2x64xf32>
    %c0_i32_47 = arith.constant 0 : i32
    %101 = arith.cmpi eq, %arg1, %c0_i32_47 : i32
    %102 = arith.extui %101 : i1 to i32
    %c0_i32_48 = arith.constant 0 : i32
    %103 = arith.cmpi ne, %102, %c0_i32_48 : i32
    scf.if %103 {
      %cst_55 = arith.constant 0.000000e+00 : f32
      %110 = vector.broadcast %cst_55 : f32 to vector<1x2x64xf32>
      %c0_56 = arith.constant 0 : index
      %c0_57 = arith.constant 0 : index
      %c0_58 = arith.constant 0 : index
      %111 = vector.load %arg7[%c0_56, %c0_57, %c0_58] : memref<1x2x64xf32, #tpu.memory_space<vmem>>, vector<1x2x64xf32>
      tpu.vector_store %arg7[%c0_56, %c0_57, %c0_58], %110 {strides = array<i32>} : memref<1x2x64xf32, #tpu.memory_space<vmem>>, vector<1x2x64xf32>,
    } else {
    }
    %c0_49 = arith.constant 0 : index
    %c0_50 = arith.constant 0 : index
    %c0_51 = arith.constant 0 : index
    %104 = vector.load %arg7[%c0_49, %c0_50, %c0_51] : memref<1x2x64xf32, #tpu.memory_space<vmem>>, vector<1x2x64xf32>
    %105 = vector.shape_cast %104 : vector<1x2x64xf32> to vector<2x64xf32>
    %106 = arith.addf %105, %100 : vector<2x64xf32>
    %c0_52 = arith.constant 0 : index
    %c0_53 = arith.constant 0 : index
    %c0_54 = arith.constant 0 : index
    %107 = vector.load %arg7[%c0_52, %c0_53, %c0_54] : memref<1x2x64xf32, #tpu.memory_space<vmem>>, vector<1x2x64xf32>
    %108 = vector.shape_cast %107 : vector<1x2x64xf32> to vector<2x64xf32>
    %109 = vector.shape_cast %106 : vector<2x64xf32> to vector<1x2x64xf32>
    tpu.vector_store %arg7[%c0_52, %c0_53, %c0_54], %109 {strides = array<i32>} : memref<1x2x64xf32, #tpu.memory_space<vmem>>, vector<1x2x64xf32>,
    return
  }
  func.func @transform_0(%arg0: i32, %arg1: i32) -> (i32, i32, i32, i32) {
    %c0_i32 = arith.constant 0 : i32
    %c0_i32_0 = arith.constant 0 : i32
    %c0_i32_1 = arith.constant 0 : i32
    return %arg0, %arg1, %c0_i32, %c0_i32_0 : i32, i32, i32, i32
  }
  func.func @transform_1(%arg0: i32, %arg1: i32) -> (i32, i32, i32, i32) {
    %c0_i32 = arith.constant 0 : i32
    %c0_i32_0 = arith.constant 0 : i32
    %c0_i32_1 = arith.constant 0 : i32
    return %arg0, %arg1, %c0_i32, %c0_i32_0 : i32, i32, i32, i32
  }
  func.func @transform_2(%arg0: i32, %arg1: i32) -> (i32, i32, i32) {
    %c0_i32 = arith.constant 0 : i32
    %c0_i32_0 = arith.constant 0 : i32
    %c0_i32_1 = arith.constant 0 : i32
    %c0_i32_2 = arith.constant 0 : i32
    return %c0_i32, %c0_i32_0, %c0_i32_1 : i32, i32, i32
  }
  func.func @transform_3(%arg0: i32, %arg1: i32) -> (i32, i32) {
    %c0_i32 = arith.constant 0 : i32
    %c0_i32_0 = arith.constant 0 : i32
    %c0_i32_1 = arith.constant 0 : i32
    return %c0_i32, %c0_i32_0 : i32, i32
  }
  func.func @transform_4(%arg0: i32, %arg1: i32) -> (i32, i32, i32, i32) {
    %c0_i32 = arith.constant 0 : i32
    %c0_i32_0 = arith.constant 0 : i32
    %c0_i32_1 = arith.constant 0 : i32
    return %arg0, %arg1, %c0_i32, %c0_i32_0 : i32, i32, i32, i32
  }
  func.func @transform_5(%arg0: i32, %arg1: i32) -> (i32, i32, i32) {
    %c0_i32 = arith.constant 0 : i32
    %c0_i32_0 = arith.constant 0 : i32
    %c0_i32_1 = arith.constant 0 : i32
    return %arg0, %c0_i32, %c0_i32_0 : i32, i32, i32
  }
}

</mosaic_0001>

<llo_original>
// kernel: tpu_custom_call.1
$region0: #{tpu_custom_call.1}
  #allocation0 [shape = 'u32[]', space=smem, size = 0x4, offset = 0x4, fixed_abs, tag = 'smem constant byte address 0x4 - core index']
  #allocation1 [shape = 'u32[72,128]{1,0:T(1,128)}', space=vmem, size = 0x9000, scoped, tag = 'internal scratch']
  %s0 = inlined_call_operand.hbm [shape: f32[2,8,8,16], index: 0, kind: input, shape index: {}]
  %s1 = inlined_call_operand.hbm [shape: f32[2,2,8,16], index: 1, kind: input, shape index: {}]
  %s2 = inlined_call_operand.hbm [shape: bf16[9,16,64], index: 2, kind: input, shape index: {}]
  %s3 = inlined_call_operand.vmem [shape: f32[1,64], index: 3, kind: input, shape index: {}]
  %s4 = inlined_call_operand.hbm [shape: f32[2,8,8,64], index: 4, kind: output, shape index: {0}]
  %s5 = inlined_call_operand.hbm [shape: f32[2,2,64], index: 5, kind: output, shape index: {1}]
  %6 = xla_tuple %s4, %s5
  %s7 = sld [smem:[#allocation0]]
  $region73: #{tpu_custom_call.1} parent=0
    _
  %s9 = ssub.s32 1, %s7
  %s10 = scalar_select 0, %s9, %s7
  $region1: #{tpu_custom_call.1} parent=0
    #allocation2 [shape = 'u8[65536]{0}', space=vmem, size = 0x10000, scoped, tag = 'input window, operand 0']
    #allocation3 [shape = 's32[2]{0}', space=sflag, size = 0x8, scoped, tag = 'scoped memory for tpu_custom_call.1']
    #allocation4 [shape = 's32[2]{0}', space=sflag, size = 0x8, scoped, tag = 'scoped memory for tpu_custom_call.1']
    #allocation5 [shape = 'u8[16384]{0}', space=vmem, size = 0x4000, scoped, tag = 'input window, operand 1']
    #allocation6 [shape = 's32[2]{0}', space=sflag, size = 0x8, scoped, tag = 'scoped memory for tpu_custom_call.1']
    #allocation7 [shape = 'u8[36864]{0}', space=vmem, size = 0x9000, scoped, tag = 'input window, operand 2, single buffered']
    #allocation8 [shape = 'u8[65536]{0}', space=vmem, size = 0x10000, scoped, tag = 'output window, operand 0']
    #allocation9 [shape = 'u8[2048]{0}', space=vmem, size = 0x800, scoped, tag = 'output window, operand 1']
    #allocation10 [shape = 's32[2]{0}', space=sflag, size = 0x8, scoped, tag = 'scoped memory for tpu_custom_call.1']
    %11 = vsyncpa [#allocation3], 0
    %s12 = scalar_lea.sflag [#allocation3], 1
    %13 = vsyncpa %s12, 0
    %14 = vsyncpa [#allocation6], 0
    %s15 = scalar_lea.sflag [#allocation6], 1
    %16 = vsyncpa %s15, 0
    %17 = vsyncpa [#allocation4], 0
    %s18 = scalar_lea.sflag [#allocation4], 1
    %19 = vsyncpa %s18, 0
    %20 = vsyncpa [#allocation10], 0
    %s21 = scalar_lea.sflag [#allocation10], 1
    %22 = vsyncpa %s21, 0
    loop: start=0, step=1, limit=4
    $region2: #{tpu_custom_call.1} parent=1 // loop_pre_header
      _
    $region3: #{tpu_custom_call.1} parent=1 // loop_header
      %s24 = sphi 0, %s28
      %p25 = scmp.ge.s32.totalorder %s24, 4
      %s31 = sphi 0, %s43
      %s32 = sphi 0, %s39
      %s33 = sphi 0, %s31
      %s34 = sphi 0, %s32
      %s35 = sphi 0, %s33
      %s36 = sphi 0, %s34
      %s48 = sphi 0, %s50
      %s51 = sphi 0, %s48
      %s52 = sphi 0, %s51
      %s68 = sphi 0, %s52
      %s76 = sphi 0, %s78
      %s79 = sphi 0, %s76
      %s80 = sphi 0, %s79
      %s96 = sphi 0, %s80
      %s100 = sphi 0, %s100
      %s102 = sphi 0, %s100
      %s103 = sphi 0, %s102
      %s117 = sphi 0, %s103
      %s121 = sphi 0, %s121
      %s123 = sphi 0, %s121
      %s124 = sphi 0, %s123
      %s138 = sphi 0, %s124
      %s146 = sphi 0, %s148
      %s149 = sphi 0, %s146
      %s150 = sphi 0, %s149
      %s166 = sphi 0, %s150
      %s172 = sphi 0, %s174
      %s175 = sphi 0, %s172
      %s176 = sphi 0, %s175
      %s192 = sphi 0, %s176
    $region4: #{tpu_custom_call.1} parent=1 // loop_header_branch
      %27 = sbr.rel (%p25) target = $region8
    $region5: #{tpu_custom_call.1} parent=1 // loop_body
      %s29 = ssub.s32 %s24, 1
      %s30 = ssub.s32 %s24, 2
      %s37 = sadd.s32 1, %s32
      %p38 = scmp.ge.s32.totalorder %s37, 1
      %s39 = scalar_select %p38, 0, %s37
      %s40 = sadd.s32 1, %s31
      %s41 = scalar_select %p38, %s40, %s31
      %p42 = scmp.ge.s32.totalorder %s41, 2
      %s43 = scalar_select %p42, 0, %s41
      %s44 = ssub.s32 %s31, %s43
      %s45 = ssub.s32 %s32, %s39
      %s46 = sor.u32 %s44, %s45
      %p47 = scmp.eq.s32.totalorder %s46, 0
      %s49 = sadd.s32 %s48, 1
      %s50 = scalar_select %p47, %s48, %s49
      %p53 = pneg %p47
      %p54 = scmp.eq.s32.totalorder %s24, 1
      %p55 = por %p53, %p54
      %p56 = scmp.ne.s32.totalorder %s48, %s51
      %p57 = scmp.eq.s32.totalorder %s24, 0
      %p58 = por %p56, %p57
      %p59 = scmp.ne.s32.totalorder %s48, %s51
      %p60 = scmp.eq.s32.totalorder %s29, 1
      %p61 = por %p59, %p60
      %p62 = scmp.ne.s32.totalorder %s51, %s52
      %p63 = scmp.eq.s32.totalorder %s29, 0
      %p64 = por %p62, %p63
      %p65 = scmp.ne.s32.totalorder %s51, %s52
      %p66 = scmp.eq.s32.totalorder %s30, 1
      %p67 = por %p65, %p66
      %p69 = scmp.ne.s32.totalorder %s52, %s68
      %p70 = scmp.eq.s32.totalorder %s30, 0
      %p71 = por %p69, %p70
      %s72 = ssub.s32 %s31, %s43
      %s73 = ssub.s32 %s32, %s39
      %s74 = sor.u32 %s72, %s73
      %p75 = scmp.eq.s32.totalorder %s74, 0
      %s77 = sadd.s32 %s76, 1
      %s78 = scalar_select %p75, %s76, %s77
      %p81 = pneg %p75
      %p82 = scmp.eq.s32.totalorder %s24, 1
      %p83 = por %p81, %p82
      %p84 = scmp.ne.s32.totalorder %s76, %s79
      %p85 = scmp.eq.s32.totalorder %s24, 0
      %p86 = por %p84, %p85
      %p87 = scmp.ne.s32.totalorder %s76, %s79
      %p88 = scmp.eq.s32.totalorder %s29, 1
      %p89 = por %p87, %p88
      %p90 = scmp.ne.s32.totalorder %s79, %s80
      %p91 = scmp.eq.s32.totalorder %s29, 0
      %p92 = por %p90, %p91
      %p93 = scmp.ne.s32.totalorder %s79, %s80
      %p94 = scmp.eq.s32.totalorder %s30, 1
      %p95 = por %p93, %p94
      %p97 = scmp.ne.s32.totalorder %s80, %s96
      %p98 = scmp.eq.s32.totalorder %s30, 0
      %p99 = por %p97, %p98
      %s101 = sadd.s32 %s100, 1
      %p104 = scmp.eq.s32.totalorder %s24, 1
      %p105 = scmp.ne.s32.totalorder %s100, %s102
      %p106 = scmp.eq.s32.totalorder %s24, 0
      %p107 = por %p105, %p106
      %p108 = scmp.ne.s32.totalorder %s100, %s102
      %p109 = scmp.eq.s32.totalorder %s29, 1
      %p110 = por %p108, %p109
      %p111 = scmp.ne.s32.totalorder %s102, %s103
      %p112 = scmp.eq.s32.totalorder %s29, 0
      %p113 = por %p111, %p112
      %p114 = scmp.ne.s32.totalorder %s102, %s103
      %p115 = scmp.eq.s32.totalorder %s30, 1
      %p116 = por %p114, %p115
      %p118 = scmp.ne.s32.totalorder %s103, %s117
      %p119 = scmp.eq.s32.totalorder %s30, 0
      %p120 = por %p118, %p119
      %s122 = sadd.s32 %s121, 1
      %p125 = scmp.eq.s32.totalorder %s24, 1
      %p126 = scmp.ne.s32.totalorder %s121, %s123
      %p127 = scmp.eq.s32.totalorder %s24, 0
      %p128 = por %p126, %p127
      %p129 = scmp.ne.s32.totalorder %s121, %s123
      %p130 = scmp.eq.s32.totalorder %s29, 1
      %p131 = por %p129, %p130
      %p132 = scmp.ne.s32.totalorder %s123, %s124
      %p133 = scmp.eq.s32.totalorder %s29, 0
      %p134 = por %p132, %p133
      %p135 = scmp.ne.s32.totalorder %s123, %s124
      %p136 = scmp.eq.s32.totalorder %s30, 1
      %p137 = por %p135, %p136
      %p139 = scmp.ne.s32.totalorder %s124, %s138
      %p140 = scmp.eq.s32.totalorder %s30, 0
      %p141 = por %p139, %p140
      %s142 = ssub.s32 %s31, %s43
      %s143 = ssub.s32 %s32, %s39
      %s144 = sor.u32 %s142, %s143
      %p145 = scmp.eq.s32.totalorder %s144, 0
      %s147 = sadd.s32 %s146, 1
      %s148 = scalar_select %p145, %s146, %s147
      %p151 = pneg %p145
      %p152 = scmp.eq.s32.totalorder %s24, 1
      %p153 = por %p151, %p152
      %p154 = scmp.ne.s32.totalorder %s146, %s149
      %p155 = scmp.eq.s32.totalorder %s24, 0
      %p156 = por %p154, %p155
      %p157 = scmp.ne.s32.totalorder %s146, %s149
      %p158 = scmp.eq.s32.totalorder %s29, 1
      %p159 = por %p157, %p158
      %p160 = scmp.ne.s32.totalorder %s149, %s150
      %p161 = scmp.eq.s32.totalorder %s29, 0
      %p162 = por %p160, %p161
      %p163 = scmp.ne.s32.totalorder %s149, %s150
      %p164 = scmp.eq.s32.totalorder %s30, 1
      %p165 = por %p163, %p164
      %p167 = scmp.ne.s32.totalorder %s150, %s166
      %p168 = scmp.eq.s32.totalorder %s30, 0
      %p169 = por %p167, %p168
      %s170 = ssub.s32 %s31, %s43
      %p171 = scmp.eq.s32.totalorder %s170, 0
      %s173 = sadd.s32 %s172, 1
      %s174 = scalar_select %p171, %s172, %s173
      %p177 = pneg %p171
      %p178 = scmp.eq.s32.totalorder %s24, 1
      %p179 = por %p177, %p178
      %p180 = scmp.ne.s32.totalorder %s172, %s175
      %p181 = scmp.eq.s32.totalorder %s24, 0
      %p182 = por %p180, %p181
      %p183 = scmp.ne.s32.totalorder %s172, %s175
      %p184 = scmp.eq.s32.totalorder %s29, 1
      %p185 = por %p183, %p184
      %p186 = scmp.ne.s32.totalorder %s175, %s176
      %p187 = scmp.eq.s32.totalorder %s29, 0
      %p188 = por %p186, %p187
      %p189 = scmp.ne.s32.totalorder %s175, %s176
      %p190 = scmp.eq.s32.totalorder %s30, 1
      %p191 = por %p189, %p190
      %p193 = scmp.ne.s32.totalorder %s176, %s192
      %p194 = scmp.eq.s32.totalorder %s30, 0
      %p195 = por %p193, %p194
      %p196 = scmp.le.s32.totalorder 1, %s24
      %p197 = scmp.lt.s32.totalorder %s24, 3
      %p198 = pnand %p196, %p197
      %p199 = pneg %p198
      // Predicated region
      $region9: #{tpu_custom_call.1} parent=5 // pred_check
        _
      $region10: #{tpu_custom_call.1} parent=5 // pred_check_branch
        %201 = sbr.rel (%p198) target = $region12
      $region11: #{tpu_custom_call.1} parent=5 // pred_region
        %s202 = ssub.s32 %s24, 1
        // Predicated region
        $region13: #{tpu_custom_call.1} parent=11 // pred_check
          %p203 = pneg %p113
        $region14: #{tpu_custom_call.1} parent=11 // pred_check_branch
          %205 = sbr.rel (%p203) target = $region16
        $region15: #{tpu_custom_call.1} parent=11 // pred_region
          %207 = vsyncadd [#allocation6], 0
          %s208 = sshll.u32 %s2, 4
          %s209 = int_to_ptr.hbm [resolvable:$true] %s208
          %s210 = sshll.u32 [#allocation7], 4
          %s211 = int_to_ptr.vmem [resolvable:$true] %s210
          %216 = dma.hbm_to_vmem [thread:$0]  %s209, 1152, %s211, [#allocation6], 64, 64, 4
        $region16: #{tpu_custom_call.1} parent=11 // pred_fallthru
          _
        // Predicated region
        $region17: #{tpu_custom_call.1} parent=11 // pred_check
          %p217 = pneg %p134
        $region18: #{tpu_custom_call.1} parent=11 // pred_check_branch
          %219 = sbr.rel (%p217) target = $region20
        $region19: #{tpu_custom_call.1} parent=11 // pred_region
          _
        $region20: #{tpu_custom_call.1} parent=11 // pred_fallthru
          _
      $region12: #{tpu_custom_call.1} parent=5 // pred_fallthru
        _
      %p220 = scmp.lt.s32.totalorder %s24, 2
      // Predicated region
      $region21: #{tpu_custom_call.1} parent=5 // pred_check
        %p221 = pneg %p220
      $region22: #{tpu_custom_call.1} parent=5 // pred_check_branch
        %223 = sbr.rel (%p221) target = $region24
      $region23: #{tpu_custom_call.1} parent=5 // pred_region
        // Predicated region
        $region25: #{tpu_custom_call.1} parent=23 // pred_check
          %p224 = pneg %p58
        $region26: #{tpu_custom_call.1} parent=23 // pred_check_branch
          %226 = sbr.rel (%p224) target = $region28
        $region27: #{tpu_custom_call.1} parent=23 // pred_region
          %s227 = sand.u32 %s48, 1
          %s228 = scalar_lea.sflag [#allocation3], %s227
          %s229 = sand.u32 %s48, 1
          %s230 = smul.addr %s229, 64
          %s231 = scalar_lea.vmem [#allocation2], %s230
          %s232 = smul.u32 8, %s32
          %234 = vsyncadd %s228, 0
          %s235 = smul.addr %s31, 8
          %s236 = sadd.s32 %s232, %s235
          %s237 = smul.addr %s236, 8
          %s238 = scalar_lea.hbm %s0, %s237
          %s239 = sshll.u32 %s238, 4
          %s240 = int_to_ptr.hbm [resolvable:$true] %s239
          %s241 = sshll.u32 %s231, 4
          %s242 = int_to_ptr.vmem [resolvable:$true] %s241
          %247 = dma.hbm_to_vmem [thread:$0]  %s240, 1024, %s242, %s228, 128, 128, 8
        $region28: #{tpu_custom_call.1} parent=23 // pred_fallthru
          _
        // Predicated region
        $region29: #{tpu_custom_call.1} parent=23 // pred_check
          %p248 = pneg %p86
        $region30: #{tpu_custom_call.1} parent=23 // pred_check_branch
          %250 = sbr.rel (%p248) target = $region32
        $region31: #{tpu_custom_call.1} parent=23 // pred_region
          %s251 = sand.u32 %s24, 1
          %s252 = scalar_lea.sflag [#allocation6], %s251
          %s253 = sand.u32 %s76, 1
          %s254 = smul.addr %s253, 16
          %s255 = scalar_lea.vmem [#allocation5], %s254
          %s256 = smul.u32 2, %s32
          %258 = vsyncadd %s252, 0
          %s259 = smul.addr %s31, 2
          %s260 = sadd.s32 %s256, %s259
          %s261 = smul.addr %s260, 8
          %s262 = scalar_lea.hbm %s1, %s261
          %s263 = sshll.u32 %s262, 4
          %s264 = int_to_ptr.hbm [resolvable:$true] %s263
          %s265 = sshll.u32 %s255, 4
          %s266 = int_to_ptr.vmem [resolvable:$true] %s265
          %271 = dma.hbm_to_vmem [thread:$0]  %s264, 256, %s266, %s252, 128, 128, 8
        $region32: #{tpu_custom_call.1} parent=23 // pred_fallthru
          _
      $region24: #{tpu_custom_call.1} parent=5 // pred_fallthru
        _
      %p272 = scmp.le.s32.totalorder 1, %s24
      %p273 = scmp.lt.s32.totalorder %s24, 3
      %p274 = pnand %p272, %p273
      %p275 = pneg %p274
      // Predicated region
      $region33: #{tpu_custom_call.1} parent=5 // pred_check
        _
      $region34: #{tpu_custom_call.1} parent=5 // pred_check_branch
        %277 = sbr.rel (%p274) target = $region36
      $region35: #{tpu_custom_call.1} parent=5 // pred_region
        %s278 = ssub.s32 %s24, 1
        %s279 = sand.u32 %s51, 1
        %s280 = scalar_lea.sflag [#allocation3], %s279
        %s281 = sand.u32 %s51, 1
        %s282 = smul.addr %s281, 64
        %s283 = scalar_lea.vmem [#allocation2], %s282
        // Predicated region
        $region37: #{tpu_custom_call.1} parent=35 // pred_check
          %p284 = pneg %p64
        $region38: #{tpu_custom_call.1} parent=35 // pred_check_branch
          %286 = sbr.rel (%p284) target = $region40
        $region39: #{tpu_custom_call.1} parent=35 // pred_region
          %288 = dma.done %s280, 1024
        $region40: #{tpu_custom_call.1} parent=35 // pred_fallthru
          _
        %s289 = sand.u32 %s29, 1
        %s290 = scalar_lea.sflag [#allocation6], %s289
        %s291 = sand.u32 %s79, 1
        %s292 = smul.addr %s291, 16
        %s293 = scalar_lea.vmem [#allocation5], %s292
        // Predicated region
        $region41: #{tpu_custom_call.1} parent=35 // pred_check
          %p294 = pneg %p92
        $region42: #{tpu_custom_call.1} parent=35 // pred_check_branch
          %296 = sbr.rel (%p294) target = $region44
        $region43: #{tpu_custom_call.1} parent=35 // pred_region
          %298 = dma.done %s290, 256
        $region44: #{tpu_custom_call.1} parent=35 // pred_fallthru
          _
        // Predicated region
        $region45: #{tpu_custom_call.1} parent=35 // pred_check
          %p299 = pneg %p113
        $region46: #{tpu_custom_call.1} parent=35 // pred_check_branch
          %301 = sbr.rel (%p299) target = $region48
        $region47: #{tpu_custom_call.1} parent=35 // pred_region
          %303 = dma.done [#allocation6], 1152
        $region48: #{tpu_custom_call.1} parent=35 // pred_fallthru
          _
        %s304 = sand.u32 %s51, 1
        %s305 = scalar_lea.sflag [#allocation3], %s304
        %s306 = sand.u32 %s51, 1
        %s307 = smul.addr %s306, 64
        %s308 = scalar_lea.vmem [#allocation2], %s307
        %p309 = pneg %p64
        %p310 = pneg %p61
        %s311 = sand.u32 %s29, 1
        %s312 = scalar_lea.sflag [#allocation6], %s311
        %s313 = sand.u32 %s79, 1
        %s314 = smul.addr %s313, 16
        %s315 = scalar_lea.vmem [#allocation5], %s314
        %p316 = pneg %p92
        %p317 = pneg %p89
        %p318 = pneg %p113
        %p319 = pneg %p110
        %p320 = pneg %p134
        %p321 = pneg %p131
        %p322 = pneg %p162
        %p323 = pneg %p159
        %s324 = sand.u32 %s149, 1
        %s325 = scalar_lea.sflag [#allocation4], %s324
        %s326 = sand.u32 %s149, 1
        %s327 = smul.addr %s326, 64
        %s328 = scalar_lea.vmem [#allocation8], %s327
        %p329 = pneg %p188
        %p330 = pneg %p185
        %s331 = sand.u32 %s175, 1
        %s332 = scalar_lea.sflag [#allocation10], %s331
        %s333 = sand.u32 %s175, 1
        %s334 = smul.addr %s333, 2
        %s335 = scalar_lea.vmem [#allocation9], %s334
        %s336 = smul.u32 8, %s34
        %s337 = smul.u32 2, %s34
        %s338 = smul.u32 8, %s34
        %v340 = vld [vmem:[%s283] sm:$0xff]
        %v341 = vld [vmem:[%s283 + $0x8] sm:$0xff]
        %v342 = vld [vmem:[%s283 + $0x10] sm:$0xff]
        %v343 = vld [vmem:[%s283 + $0x18] sm:$0xff]
        %v344 = vld [vmem:[%s283 + $0x20] sm:$0xff]
        %v345 = vld [vmem:[%s283 + $0x28] sm:$0xff]
        %v346 = vld [vmem:[%s283 + $0x30] sm:$0xff]
        %v347 = vld [vmem:[%s283 + $0x38] sm:$0xff]
        %v348 = vld [vmem:[%s293] sm:$0xff]
        %v349 = vld [vmem:[%s293 + $0x8] sm:$0xff]
        %v360 = vrot.slane %v348, 7
        %v361 = vrot.slane %v340, 7
        %v362 = vrot.slane %v341, 7
        %v363 = vrot.slane %v342, 7
        %v364 = vrot.slane %v343, 7
        %v365 = vrot.slane %v344, 7
        %v366 = vrot.slane %v345, 7
        %v367 = vrot.slane %v346, 7
        %v368 = vrot.slane %v347, 7
        %v369 = vrot.slane %v349, 7
        %vm380 = vcmask 1040384
        %v381 = vsel %vm380, 0.0, %v360
        %v382 = vsel %vm380, 0.0, %v361
        %v383 = vsel %vm380, 0.0, %v362
        %v384 = vsel %vm380, 0.0, %v363
        %v385 = vsel %vm380, 0.0, %v364
        %v386 = vsel %vm380, 0.0, %v365
        %v387 = vsel %vm380, 0.0, %v366
        %v388 = vsel %vm380, 0.0, %v367
        %v389 = vsel %vm380, 0.0, %v368
        %v390 = vsel %vm380, 0.0, %v369
        %v391 = vsel %vm380, %v360, 0.0
        %v392 = vsel %vm380, %v361, 0.0
        %v393 = vsel %vm380, %v362, 0.0
        %v394 = vsel %vm380, %v363, 0.0
        %v395 = vsel %vm380, %v364, 0.0
        %v396 = vsel %vm380, %v365, 0.0
        %v397 = vsel %vm380, %v366, 0.0
        %v398 = vsel %vm380, %v367, 0.0
        %v399 = vsel %vm380, %v368, 0.0
        %v400 = vsel %vm380, %v369, 0.0
        %p401 = scmp.eq.s32.totalorder %s34, 0
        %s402 = scalar_select %p401, 1, 0
        %v403 = vstv %s402
        %vm404 = vcmp.eq.s32.totalorder %v403, 1
        %v405 = vsel %vm404, 1, 0
        %vm406 = vcmp.eq.s32.totalorder %v405, 1
        %v407 = vsel %vm406, 0.0, %v381
        %v408 = vsel %vm406, 0.0, %v391
        %v409 = vsel 0, 0.0, %v382
        %v410 = vsel 0, 0.0, %v392
        %v411 = vsel 0, 0.0, %v383
        %v412 = vsel 0, 0.0, %v393
        %v413 = vsel 0, 0.0, %v384
        %v414 = vsel 0, 0.0, %v394
        %v415 = vsel 0, 0.0, %v385
        %v416 = vsel 0, 0.0, %v395
        %v417 = vsel 0, 0.0, %v386
        %v418 = vsel 0, 0.0, %v396
        %v419 = vsel 0, 0.0, %v387
        %v420 = vsel 0, 0.0, %v397
        %v421 = vsel 0, 0.0, %v388
        %v422 = vsel 0, 0.0, %v398
        %v423 = vsel 0, 0.0, %v389
        %v424 = vsel 0, 0.0, %v399
        %v425 = vsel %vm406, 0.0, %v390
        %v426 = vsel %vm406, 0.0, %v400
        %v427 = vpack.c.bf16 %v407, %v407
        %v428 = vpack.c.bf16 %v408, %v408
        %v429 = vpack.c.bf16 %v409, %v409
        %v430 = vpack.c.bf16 %v410, %v410
        %v431 = vpack.c.bf16 %v411, %v411
        %v432 = vpack.c.bf16 %v412, %v412
        %v433 = vpack.c.bf16 %v413, %v413
        %v434 = vpack.c.bf16 %v414, %v414
        %v435 = vpack.c.bf16 %v415, %v415
        %v436 = vpack.c.bf16 %v416, %v416
        %v437 = vpack.c.bf16 %v417, %v417
        %v438 = vpack.c.bf16 %v418, %v418
        %v439 = vpack.c.bf16 %v419, %v419
        %v440 = vpack.c.bf16 %v420, %v420
        %v441 = vpack.c.bf16 %v421, %v421
        %v442 = vpack.c.bf16 %v422, %v422
        %v443 = vpack.c.bf16 %v423, %v423
        %v444 = vpack.c.bf16 %v424, %v424
        %v445 = vpack.c.bf16 %v425, %v425
        %v446 = vpack.c.bf16 %v426, %v426
        %v463 = vrot.slane %v427, 3
        %v464 = vrot.slane %v428, 3
        %v465 = vrot.slane %v429, 3
        %v466 = vrot.slane %v430, 3
        %v467 = vrot.slane %v431, 3
        %v468 = vrot.slane %v432, 3
        %v469 = vrot.slane %v433, 3
        %v470 = vrot.slane %v434, 3
        %v471 = vrot.slane %v435, 3
        %v472 = vrot.slane %v436, 3
        %v473 = vrot.slane %v437, 3
        %v474 = vrot.slane %v438, 3
        %v475 = vrot.slane %v439, 3
        %v476 = vrot.slane %v440, 3
        %v477 = vrot.slane %v441, 3
        %v478 = vrot.slane %v442, 3
        %v481 = vsel %vm380, %v427, %v463
        %vm482 = vcmask 1041409
        %v483 = vsel %vm482, %v427, %v463
        %v485 = vrot.slane %v483, 1
        %vm486 = vcmask 1042434
        %v487 = vsel %vm486, %v427, %v463
        %v489 = vrot.slane %v487, 2
        %vm490 = vcmask 1043459
        %v491 = vsel %vm490, %v427, %v463
        %v493 = vrot.slane %v491, 3
        %v496 = vsel %vm380, %v428, %v464
        %v499 = vsel %vm380, %v429, %v465
        %v500 = vsel %vm482, %v429, %v465
        %v502 = vrot.slane %v500, 1
        %v503 = vsel %vm486, %v429, %v465
        %v505 = vrot.slane %v503, 2
        %v506 = vsel %vm490, %v429, %v465
        %v508 = vrot.slane %v506, 3
        %v511 = vsel %vm380, %v430, %v466
        %v514 = vsel %vm380, %v431, %v467
        %v515 = vsel %vm482, %v431, %v467
        %v517 = vrot.slane %v515, 1
        %v518 = vsel %vm486, %v431, %v467
        %v520 = vrot.slane %v518, 2
        %v521 = vsel %vm490, %v431, %v467
        %v523 = vrot.slane %v521, 3
        %v526 = vsel %vm380, %v432, %v468
        %v529 = vsel %vm380, %v433, %v469
        %v530 = vsel %vm482, %v433, %v469
        %v532 = vrot.slane %v530, 1
        %v533 = vsel %vm486, %v433, %v469
        %v535 = vrot.slane %v533, 2
        %v536 = vsel %vm490, %v433, %v469
        %v538 = vrot.slane %v536, 3
        %v541 = vsel %vm380, %v434, %v470
        %v544 = vsel %vm380, %v435, %v471
        %v545 = vsel %vm482, %v435, %v471
        %v547 = vrot.slane %v545, 1
        %v548 = vsel %vm486, %v435, %v471
        %v550 = vrot.slane %v548, 2
        %v551 = vsel %vm490, %v435, %v471
        %v553 = vrot.slane %v551, 3
        %v556 = vsel %vm380, %v436, %v472
        %v559 = vsel %vm380, %v437, %v473
        %v560 = vsel %vm482, %v437, %v473
        %v562 = vrot.slane %v560, 1
        %v563 = vsel %vm486, %v437, %v473
        %v565 = vrot.slane %v563, 2
        %v566 = vsel %vm490, %v437, %v473
        %v568 = vrot.slane %v566, 3
        %v571 = vsel %vm380, %v438, %v474
        %v574 = vsel %vm380, %v439, %v475
        %v575 = vsel %vm482, %v439, %v475
        %v577 = vrot.slane %v575, 1
        %v578 = vsel %vm486, %v439, %v475
        %v580 = vrot.slane %v578, 2
        %v581 = vsel %vm490, %v439, %v475
        %v583 = vrot.slane %v581, 3
        %v586 = vsel %vm380, %v440, %v476
        %v589 = vsel %vm380, %v441, %v477
        %v590 = vsel %vm482, %v441, %v477
        %v592 = vrot.slane %v590, 1
        %v593 = vsel %vm486, %v441, %v477
        %v595 = vrot.slane %v593, 2
        %v596 = vsel %vm490, %v441, %v477
        %v598 = vrot.slane %v596, 3
        %v601 = vsel %vm380, %v442, %v478
        %v602 = vld [vmem:[#allocation7] sm:$0xf]
        %v603 = vld [vmem:[#allocation7 + $0x4] sm:$0xf]
        %604 = vst [vmem:[#allocation1] ss:$9 sm:$0xff] %v481
        %s606 = scalar_lea.vmem [#allocation1], 1
        %607 = vst [vmem:[%s606] ss:$9 sm:$0xff] %v485
        %s609 = scalar_lea.vmem [#allocation1], 2
        %610 = vst [vmem:[%s609] ss:$9 sm:$0xff] %v489
        %s612 = scalar_lea.vmem [#allocation1], 3
        %613 = vst [vmem:[%s612] ss:$9 sm:$0xff] %v493
        %s614 = scalar_lea.vmem [#allocation1], 4
        %615 = vst [vmem:[%s614] ss:$9 sm:$0xff] %v496
        %s616 = scalar_lea.vmem [#allocation1], 5
        %617 = vst [vmem:[%s616] ss:$9 sm:$0xff] %v499
        %s619 = scalar_lea.vmem [#allocation1], 6
        %620 = vst [vmem:[%s619] ss:$9 sm:$0xff] %v502
        %s622 = scalar_lea.vmem [#allocation1], 7
        %623 = vst [vmem:[%s622] ss:$9 sm:$0xff] %v505
        %v624 = vld [vmem:[#allocation1] sm:$0xff]
        %626 = vst [vmem:[#allocation1] ss:$9 sm:$0xff] %v508
        %627 = vst [vmem:[%s606] ss:$9 sm:$0xff] %v511
        %628 = vst [vmem:[%s609] ss:$9 sm:$0xff] %v514
        %630 = vst [vmem:[%s612] ss:$9 sm:$0xff] %v517
        %632 = vst [vmem:[%s614] ss:$9 sm:$0xff] %v520
        %634 = vst [vmem:[%s616] ss:$9 sm:$0xff] %v523
        %635 = vst [vmem:[%s619] ss:$9 sm:$0xff] %v526
        %636 = vst [vmem:[%s622] ss:$9 sm:$0xff] %v529
        %v637 = vld [vmem:[#allocation1] sm:$0xff]
        %639 = vst [vmem:[#allocation1] ss:$9 sm:$0xff] %v532
        %641 = vst [vmem:[%s606] ss:$9 sm:$0xff] %v535
        %643 = vst [vmem:[%s609] ss:$9 sm:$0xff] %v538
        %644 = vst [vmem:[%s612] ss:$9 sm:$0xff] %v541
        %645 = vst [vmem:[%s614] ss:$9 sm:$0xff] %v544
        %647 = vst [vmem:[%s616] ss:$9 sm:$0xff] %v547
        %649 = vst [vmem:[%s619] ss:$9 sm:$0xff] %v550
        %651 = vst [vmem:[%s622] ss:$9 sm:$0xff] %v553
        %v652 = vld [vmem:[#allocation1] sm:$0xff]
        %653 = vst [vmem:[#allocation1] ss:$9 sm:$0xff] %v556
        %654 = vst [vmem:[%s606] ss:$9 sm:$0xff] %v559
        %656 = vst [vmem:[%s609] ss:$9 sm:$0xff] %v562
        %658 = vst [vmem:[%s612] ss:$9 sm:$0xff] %v565
        %660 = vst [vmem:[%s614] ss:$9 sm:$0xff] %v568
        %661 = vst [vmem:[%s616] ss:$9 sm:$0xff] %v571
        %662 = vst [vmem:[%s619] ss:$9 sm:$0xff] %v574
        %664 = vst [vmem:[%s622] ss:$9 sm:$0xff] %v577
        %v665 = vld [vmem:[#allocation1] sm:$0xff]
        %667 = vst [vmem:[#allocation1] ss:$9 sm:$0xff] %v580
        %669 = vst [vmem:[%s606] ss:$9 sm:$0xff] %v583
        %670 = vst [vmem:[%s609] ss:$9 sm:$0xff] %v586
        %671 = vst [vmem:[%s612] ss:$9 sm:$0xff] %v589
        %673 = vst [vmem:[%s614] ss:$9 sm:$0xff] %v592
        %675 = vst [vmem:[%s616] ss:$9 sm:$0xff] %v595
        %677 = vst [vmem:[%s619] ss:$9 sm:$0xff] %v598
        %678 = vst [vmem:[%s622] ss:$9 sm:$0xff] %v601
        %v679 = vld [vmem:[#allocation1] sm:$0xff]
        %v682 = vunpack.c.l.b16 %v602
        %v683 = vunpack.c.l.b16 %v603
        %v684 = vpack.c.b16 %v683, %v682
        %vm686 = vcmask 130048
        %v687 = vsel %vm686, %v624, 0
        %v689 = vsel %vm686, %v637, 0
        %v691 = vsel %vm686, %v652, 0
        %v693 = vsel %vm686, %v665, 0
        %v695 = vsel %vm686, %v679, 0
        %697 = vmatpush.bf16.msra.mxu0 0
        %698 = vmatpush.bf16.msra.mxu0 0
        %699 = vmatpush.bf16.msra.mxu0 0
        %700 = vmatpush.bf16.msra.mxu0 0
        %701 = vmatpush.bf16.msra.mxu0 0
        %702 = vmatpush.bf16.msra.mxu0 0
        %703 = vmatpush.bf16.msra.mxu0 0
        %704 = vmatpush.bf16.msra.mxu0 %v684
        %705 = vmatmul.bf16.gmra.mxu0 %v687
        %v706 = vpop.f32.mrf.mxu0
        %v707 = vadd.f32 0.0, %v706
        %v708 = vpop.f32.mrf.mxu0
        %v709 = vadd.f32 0.0, %v708
        %710 = vmatmul.bf16.gmra.mxu0 %v689
        %v711 = vpop.f32.mrf.mxu0
        %v712 = vadd.f32 0.0, %v711
        %v713 = vpop.f32.mrf.mxu0
        %v714 = vadd.f32 0.0, %v713
        %715 = vmatmul.bf16.gmra.mxu0 %v691
        %v716 = vpop.f32.mrf.mxu0
        %v717 = vadd.f32 0.0, %v716
        %v718 = vpop.f32.mrf.mxu0
        %v719 = vadd.f32 0.0, %v718
        %720 = vmatmul.bf16.gmra.mxu0 %v693
        %v721 = vpop.f32.mrf.mxu0
        %v722 = vadd.f32 0.0, %v721
        %v723 = vpop.f32.mrf.mxu0
        %v724 = vadd.f32 0.0, %v723
        %725 = vmatmul.bf16.gmra.mxu0 %v695
        %v726 = vpop.f32.mrf.mxu0
        %v727 = vadd.f32 0.0, %v726
        %v728 = vpop.f32.mrf.mxu0
        %v729 = vadd.f32 0.0, %v728
        %730 = vdwg.mxu0
        %v741 = vrot.slane %v707, 2
        %v742 = vrot.slane %v707, 4
        %v743 = vrot.slane %v707, 6
        %v744 = vrot.slane %v709, 2
        %v745 = vrot.slane %v709, 4
        %v746 = vrot.slane %v709, 6
        %v747 = vrot.slane %v712, 4
        %v748 = vrot.slane %v712, 6
        %v749 = vrot.slane %v714, 2
        %v750 = vrot.slane %v714, 6
        %v751 = vrot.slane %v717, 2
        %v752 = vrot.slane %v717, 4
        %v753 = vrot.slane %v719, 2
        %v754 = vrot.slane %v719, 4
        %v755 = vrot.slane %v719, 6
        %v756 = vrot.slane %v722, 2
        %v757 = vrot.slane %v722, 4
        %v758 = vrot.slane %v722, 6
        %v759 = vrot.slane %v724, 4
        %v760 = vrot.slane %v724, 6
        %v761 = vrot.slane %v727, 2
        %v762 = vrot.slane %v727, 6
        %v763 = vrot.slane %v729, 2
        %v764 = vrot.slane %v729, 4
        %v789 = vadd.f32 %v707, 0.0
        %v790 = vadd.f32 %v741, 0.0
        %v791 = vadd.f32 %v742, 0.0
        %v792 = vadd.f32 %v743, 0.0
        %v793 = vadd.f32 %v744, 0.0
        %v794 = vadd.f32 %v745, 0.0
        %v795 = vadd.f32 %v746, 0.0
        %v796 = vadd.f32 %v712, 0.0
        %v797 = vadd.f32 %v747, 0.0
        %v798 = vadd.f32 %v748, 0.0
        %v799 = vadd.f32 %v714, 0.0
        %v800 = vadd.f32 %v749, 0.0
        %v801 = vadd.f32 %v750, 0.0
        %v802 = vadd.f32 %v717, 0.0
        %v803 = vadd.f32 %v751, 0.0
        %v804 = vadd.f32 %v752, 0.0
        %v805 = vadd.f32 %v719, 0.0
        %v806 = vadd.f32 %v753, 0.0
        %v807 = vadd.f32 %v754, 0.0
        %v808 = vadd.f32 %v755, 0.0
        %v809 = vadd.f32 %v756, 0.0
        %v810 = vadd.f32 %v757, 0.0
        %v811 = vadd.f32 %v758, 0.0
        %v812 = vadd.f32 %v724, 0.0
        %v813 = vadd.f32 %v759, 0.0
        %v814 = vadd.f32 %v760, 0.0
        %v815 = vadd.f32 %v727, 0.0
        %v816 = vadd.f32 %v761, 0.0
        %v817 = vadd.f32 %v762, 0.0
        %v818 = vadd.f32 %v729, 0.0
        %v819 = vadd.f32 %v763, 0.0
        %v820 = vadd.f32 %v764, 0.0
        %s821 = scalar_lea.vmem [#allocation7], 8
        %v822 = vld [vmem:[%s821] sm:$0xf]
        %v823 = vld [vmem:[%s821 + $0x4] sm:$0xf]
        %824 = vst [vmem:[#allocation1] ss:$9 sm:$0xff] %v481
        %s825 = scalar_lea.vmem [#allocation1], 1
        %826 = vst [vmem:[%s825] ss:$9 sm:$0xff] %v485
        %s827 = scalar_lea.vmem [#allocation1], 2
        %828 = vst [vmem:[%s827] ss:$9 sm:$0xff] %v489
        %s829 = scalar_lea.vmem [#allocation1], 3
        %830 = vst [vmem:[%s829] ss:$9 sm:$0xff] %v493
        %s831 = scalar_lea.vmem [#allocation1], 4
        %832 = vst [vmem:[%s831] ss:$9 sm:$0xff] %v496
        %s833 = scalar_lea.vmem [#allocation1], 5
        %834 = vst [vmem:[%s833] ss:$9 sm:$0xff] %v499
        %s835 = scalar_lea.vmem [#allocation1], 6
        %836 = vst [vmem:[%s835] ss:$9 sm:$0xff] %v502
        %s837 = scalar_lea.vmem [#allocation1], 7
        %838 = vst [vmem:[%s837] ss:$9 sm:$0xff] %v505
        %v839 = vld [vmem:[#allocation1] sm:$0xff]
        %840 = vst [vmem:[#allocation1] ss:$9 sm:$0xff] %v508
        %841 = vst [vmem:[%s825] ss:$9 sm:$0xff] %v511
        %842 = vst [vmem:[%s827] ss:$9 sm:$0xff] %v514
        %843 = vst [vmem:[%s829] ss:$9 sm:$0xff] %v517
        %844 = vst [vmem:[%s831] ss:$9 sm:$0xff] %v520
        %845 = vst [vmem:[%s833] ss:$9 sm:$0xff] %v523
        %846 = vst [vmem:[%s835] ss:$9 sm:$0xff] %v526
        %847 = vst [vmem:[%s837] ss:$9 sm:$0xff] %v529
        %v848 = vld [vmem:[#allocation1] sm:$0xff]
        %849 = vst [vmem:[#allocation1] ss:$9 sm:$0xff] %v532
        %850 = vst [vmem:[%s825] ss:$9 sm:$0xff] %v535
        %851 = vst [vmem:[%s827] ss:$9 sm:$0xff] %v538
        %852 = vst [vmem:[%s829] ss:$9 sm:$0xff] %v541
        %853 = vst [vmem:[%s831] ss:$9 sm:$0xff] %v544
        %854 = vst [vmem:[%s833] ss:$9 sm:$0xff] %v547
        %855 = vst [vmem:[%s835] ss:$9 sm:$0xff] %v550
        %856 = vst [vmem:[%s837] ss:$9 sm:$0xff] %v553
        %v857 = vld [vmem:[#allocation1] sm:$0xff]
        %858 = vst [vmem:[#allocation1] ss:$9 sm:$0xff] %v556
        %859 = vst [vmem:[%s825] ss:$9 sm:$0xff] %v559
        %860 = vst [vmem:[%s827] ss:$9 sm:$0xff] %v562
        %861 = vst [vmem:[%s829] ss:$9 sm:$0xff] %v565
        %862 = vst [vmem:[%s831] ss:$9 sm:$0xff] %v568
        %863 = vst [vmem:[%s833] ss:$9 sm:$0xff] %v571
        %864 = vst [vmem:[%s835] ss:$9 sm:$0xff] %v574
        %865 = vst [vmem:[%s837] ss:$9 sm:$0xff] %v577
        %v866 = vld [vmem:[#allocation1] sm:$0xff]
        %867 = vst [vmem:[#allocation1] ss:$9 sm:$0xff] %v580
        %868 = vst [vmem:[%s825] ss:$9 sm:$0xff] %v583
        %869 = vst [vmem:[%s827] ss:$9 sm:$0xff] %v586
        %870 = vst [vmem:[%s829] ss:$9 sm:$0xff] %v589
        %871 = vst [vmem:[%s831] ss:$9 sm:$0xff] %v592
        %872 = vst [vmem:[%s833] ss:$9 sm:$0xff] %v595
        %873 = vst [vmem:[%s835] ss:$9 sm:$0xff] %v598
        %874 = vst [vmem:[%s837] ss:$9 sm:$0xff] %v601
        %v875 = vld [vmem:[#allocation1] sm:$0xff]
        %v878 = vunpack.c.l.b16 %v822
        %v879 = vunpack.c.l.b16 %v823
        %v880 = vpack.c.b16 %v879, %v878
        %v882 = vsel %vm686, %v839, 0
        %v884 = vsel %vm686, %v848, 0
        %v886 = vsel %vm686, %v857, 0
        %v888 = vsel %vm686, %v866, 0
        %v890 = vsel %vm686, %v875, 0
        %892 = vmatpush.bf16.msra.mxu0 0
        %893 = vmatpush.bf16.msra.mxu0 0
        %894 = vmatpush.bf16.msra.mxu0 0
        %895 = vmatpush.bf16.msra.mxu0 0
        %896 = vmatpush.bf16.msra.mxu0 0
        %897 = vmatpush.bf16.msra.mxu0 0
        %898 = vmatpush.bf16.msra.mxu0 0
        %899 = vmatpush.bf16.msra.mxu0 %v880
        %900 = vmatmul.bf16.gmra.mxu0 %v882
        %v901 = vpop.f32.mrf.mxu0
        %v902 = vadd.f32 0.0, %v901
        %v903 = vpop.f32.mrf.mxu0
        %v904 = vadd.f32 0.0, %v903
        %905 = vmatmul.bf16.gmra.mxu0 %v884
        %v906 = vpop.f32.mrf.mxu0
        %v907 = vadd.f32 0.0, %v906
        %v908 = vpop.f32.mrf.mxu0
        %v909 = vadd.f32 0.0, %v908
        %910 = vmatmul.bf16.gmra.mxu0 %v886
        %v911 = vpop.f32.mrf.mxu0
        %v912 = vadd.f32 0.0, %v911
        %v913 = vpop.f32.mrf.mxu0
        %v914 = vadd.f32 0.0, %v913
        %915 = vmatmul.bf16.gmra.mxu0 %v888
        %v916 = vpop.f32.mrf.mxu0
        %v917 = vadd.f32 0.0, %v916
        %v918 = vpop.f32.mrf.mxu0
        %v919 = vadd.f32 0.0, %v918
        %920 = vmatmul.bf16.gmra.mxu0 %v890
        %v921 = vpop.f32.mrf.mxu0
        %v922 = vadd.f32 0.0, %v921
        %v923 = vpop.f32.mrf.mxu0
        %v924 = vadd.f32 0.0, %v923
        %925 = vdwg.mxu0
        %v936 = vrot.slane %v902, 2
        %v937 = vrot.slane %v902, 4
        %v938 = vrot.slane %v902, 6
        %v939 = vrot.slane %v904, 2
        %v940 = vrot.slane %v904, 4
        %v941 = vrot.slane %v904, 6
        %v942 = vrot.slane %v907, 2
        %v943 = vrot.slane %v907, 4
        %v944 = vrot.slane %v907, 6
        %v945 = vrot.slane %v909, 2
        %v946 = vrot.slane %v909, 4
        %v947 = vrot.slane %v909, 6
        %v948 = vrot.slane %v912, 2
        %v949 = vrot.slane %v912, 4
        %v950 = vrot.slane %v912, 6
        %v951 = vrot.slane %v914, 2
        %v952 = vrot.slane %v914, 4
        %v953 = vrot.slane %v914, 6
        %v954 = vrot.slane %v917, 2
        %v955 = vrot.slane %v917, 4
        %v956 = vrot.slane %v917, 6
        %v957 = vrot.slane %v919, 2
        %v958 = vrot.slane %v919, 4
        %v959 = vrot.slane %v919, 6
        %v960 = vrot.slane %v922, 2
        %v961 = vrot.slane %v922, 4
        %v962 = vrot.slane %v922, 6
        %v963 = vrot.slane %v924, 2
        %v964 = vrot.slane %v924, 4
        %v965 = vrot.slane %v924, 6
        %vm966 = vmor %vm380, %vm486
        %vm967 = vcmask 1044484
        %vm968 = vmor %vm966, %vm967
        %vm969 = vcmask 1046534
        %vm970 = vmor %vm968, %vm969
        %v971 = vrot.slane %v902, 7
        %v972 = vrot.slane %v971, 2
        %v973 = vrot.slane %v936, 7
        %v974 = vsel %vm970, %v972, %v973
        %v975 = vrot.slane %v973, 2
        %v976 = vrot.slane %v937, 7
        %v977 = vsel %vm970, %v975, %v976
        %v978 = vrot.slane %v976, 2
        %v979 = vrot.slane %v938, 7
        %v980 = vsel %vm970, %v978, %v979
        %v981 = vrot.slane %v979, 2
        %v982 = vrot.slane %v904, 7
        %v983 = vsel %vm970, %v981, %v982
        %v984 = vrot.slane %v939, 7
        %v985 = vrot.slane %v984, 2
        %v986 = vrot.slane %v940, 7
        %v987 = vsel %vm970, %v985, %v986
        %v988 = vrot.slane %v986, 2
        %v989 = vrot.slane %v941, 7
        %v990 = vsel %vm970, %v988, %v989
        %v991 = vrot.slane %v989, 2
        %v992 = vrot.slane %v907, 7
        %v993 = vsel %vm970, %v991, %v992
        %v994 = vrot.slane %v992, 2
        %v995 = vrot.slane %v942, 7
        %v996 = vsel %vm970, %v994, %v995
        %v997 = vrot.slane %v943, 7
        %v998 = vrot.slane %v997, 2
        %v999 = vrot.slane %v944, 7
        %v1000 = vsel %vm970, %v998, %v999
        %v1001 = vrot.slane %v999, 2
        %v1002 = vrot.slane %v909, 7
        %v1003 = vsel %vm970, %v1001, %v1002
        %v1004 = vrot.slane %v1002, 2
        %v1005 = vrot.slane %v945, 7
        %v1006 = vsel %vm970, %v1004, %v1005
        %v1007 = vrot.slane %v1005, 2
        %v1008 = vrot.slane %v946, 7
        %v1009 = vsel %vm970, %v1007, %v1008
        %v1010 = vrot.slane %v947, 7
        %v1011 = vrot.slane %v1010, 2
        %v1012 = vrot.slane %v912, 7
        %v1013 = vsel %vm970, %v1011, %v1012
        %v1014 = vrot.slane %v1012, 2
        %v1015 = vrot.slane %v948, 7
        %v1016 = vsel %vm970, %v1014, %v1015
        %v1017 = vrot.slane %v1015, 2
        %v1018 = vrot.slane %v949, 7
        %v1019 = vsel %vm970, %v1017, %v1018
        %v1020 = vrot.slane %v1018, 2
        %v1021 = vrot.slane %v950, 7
        %v1022 = vsel %vm970, %v1020, %v1021
        %v1023 = vrot.slane %v914, 7
        %v1024 = vrot.slane %v1023, 2
        %v1025 = vrot.slane %v951, 7
        %v1026 = vsel %vm970, %v1024, %v1025
        %v1027 = vrot.slane %v1025, 2
        %v1028 = vrot.slane %v952, 7
        %v1029 = vsel %vm970, %v1027, %v1028
        %v1030 = vrot.slane %v1028, 2
        %v1031 = vrot.slane %v953, 7
        %v1032 = vsel %vm970, %v1030, %v1031
        %v1033 = vrot.slane %v1031, 2
        %v1034 = vrot.slane %v917, 7
        %v1035 = vsel %vm970, %v1033, %v1034
        %v1036 = vrot.slane %v954, 7
        %v1037 = vrot.slane %v1036, 2
        %v1038 = vrot.slane %v955, 7
        %v1039 = vsel %vm970, %v1037, %v1038
        %v1040 = vrot.slane %v1038, 2
        %v1041 = vrot.slane %v956, 7
        %v1042 = vsel %vm970, %v1040, %v1041
        %v1043 = vrot.slane %v1041, 2
        %v1044 = vrot.slane %v919, 7
        %v1045 = vsel %vm970, %v1043, %v1044
        %v1046 = vrot.slane %v1044, 2
        %v1047 = vrot.slane %v957, 7
        %v1048 = vsel %vm970, %v1046, %v1047
        %v1049 = vrot.slane %v958, 7
        %v1050 = vrot.slane %v1049, 2
        %v1051 = vrot.slane %v959, 7
        %v1052 = vsel %vm970, %v1050, %v1051
        %v1053 = vrot.slane %v1051, 2
        %v1054 = vrot.slane %v922, 7
        %v1055 = vsel %vm970, %v1053, %v1054
        %v1056 = vrot.slane %v1054, 2
        %v1057 = vrot.slane %v960, 7
        %v1058 = vsel %vm970, %v1056, %v1057
        %v1059 = vrot.slane %v1057, 2
        %v1060 = vrot.slane %v961, 7
        %v1061 = vsel %vm970, %v1059, %v1060
        %v1062 = vrot.slane %v962, 7
        %v1063 = vrot.slane %v1062, 2
        %v1064 = vrot.slane %v924, 7
        %v1065 = vsel %vm970, %v1063, %v1064
        %v1066 = vrot.slane %v1064, 2
        %v1067 = vrot.slane %v963, 7
        %v1068 = vsel %vm970, %v1066, %v1067
        %v1069 = vrot.slane %v1067, 2
        %v1070 = vrot.slane %v964, 7
        %v1071 = vsel %vm970, %v1069, %v1070
        %v1072 = vrot.slane %v1070, 2
        %v1073 = vrot.slane %v965, 7
        %v1074 = vsel %vm970, %v1072, %v1073
        %v1107 = vadd.f32 %v789, %v974
        %v1108 = vadd.f32 %v790, %v977
        %v1109 = vadd.f32 %v791, %v980
        %v1110 = vadd.f32 %v792, %v983
        %v1111 = vadd.f32 %v793, %v987
        %v1112 = vadd.f32 %v794, %v990
        %v1113 = vadd.f32 %v795, %v993
        %v1114 = vadd.f32 %v796, %v996
        %v1115 = vadd.f32 %v797, %v1000
        %v1116 = vadd.f32 %v798, %v1003
        %v1117 = vadd.f32 %v799, %v1006
        %v1118 = vadd.f32 %v800, %v1009
        %v1119 = vadd.f32 %v801, %v1013
        %v1120 = vadd.f32 %v802, %v1016
        %v1121 = vadd.f32 %v803, %v1019
        %v1122 = vadd.f32 %v804, %v1022
        %v1123 = vadd.f32 %v805, %v1026
        %v1124 = vadd.f32 %v806, %v1029
        %v1125 = vadd.f32 %v807, %v1032
        %v1126 = vadd.f32 %v808, %v1035
        %v1127 = vadd.f32 %v809, %v1039
        %v1128 = vadd.f32 %v810, %v1042
        %v1129 = vadd.f32 %v811, %v1045
        %v1130 = vadd.f32 %v812, %v1048
        %v1131 = vadd.f32 %v813, %v1052
        %v1132 = vadd.f32 %v814, %v1055
        %v1133 = vadd.f32 %v815, %v1058
        %v1134 = vadd.f32 %v816, %v1061
        %v1135 = vadd.f32 %v817, %v1065
        %v1136 = vadd.f32 %v818, %v1068
        %v1137 = vadd.f32 %v819, %v1071
        %v1138 = vadd.f32 %v820, %v1074
        %s1139 = scalar_lea.vmem [#allocation7], 16
        %v1140 = vld [vmem:[%s1139] sm:$0xf]
        %v1141 = vld [vmem:[%s1139 + $0x4] sm:$0xf]
        %1142 = vst [vmem:[#allocation1] ss:$9 sm:$0xff] %v481
        %s1143 = scalar_lea.vmem [#allocation1], 1
        %1144 = vst [vmem:[%s1143] ss:$9 sm:$0xff] %v485
        %s1145 = scalar_lea.vmem [#allocation1], 2
        %1146 = vst [vmem:[%s1145] ss:$9 sm:$0xff] %v489
        %s1147 = scalar_lea.vmem [#allocation1], 3
        %1148 = vst [vmem:[%s1147] ss:$9 sm:$0xff] %v493
        %s1149 = scalar_lea.vmem [#allocation1], 4
        %1150 = vst [vmem:[%s1149] ss:$9 sm:$0xff] %v496
        %s1151 = scalar_lea.vmem [#allocation1], 5
        %1152 = vst [vmem:[%s1151] ss:$9 sm:$0xff] %v499
        %s1153 = scalar_lea.vmem [#allocation1], 6
        %1154 = vst [vmem:[%s1153] ss:$9 sm:$0xff] %v502
        %s1155 = scalar_lea.vmem [#allocation1], 7
        %1156 = vst [vmem:[%s1155] ss:$9 sm:$0xff] %v505
        %v1157 = vld [vmem:[#allocation1] sm:$0xff]
        %1158 = vst [vmem:[#allocation1] ss:$9 sm:$0xff] %v508
        %1159 = vst [vmem:[%s1143] ss:$9 sm:$0xff] %v511
        %1160 = vst [vmem:[%s1145] ss:$9 sm:$0xff] %v514
        %1161 = vst [vmem:[%s1147] ss:$9 sm:$0xff] %v517
        %1162 = vst [vmem:[%s1149] ss:$9 sm:$0xff] %v520
        %1163 = vst [vmem:[%s1151] ss:$9 sm:$0xff] %v523
        %1164 = vst [vmem:[%s1153] ss:$9 sm:$0xff] %v526
        %1165 = vst [vmem:[%s1155] ss:$9 sm:$0xff] %v529
        %v1166 = vld [vmem:[#allocation1] sm:$0xff]
        %1167 = vst [vmem:[#allocation1] ss:$9 sm:$0xff] %v532
        %1168 = vst [vmem:[%s1143] ss:$9 sm:$0xff] %v535
        %1169 = vst [vmem:[%s1145] ss:$9 sm:$0xff] %v538
        %1170 = vst [vmem:[%s1147] ss:$9 sm:$0xff] %v541
        %1171 = vst [vmem:[%s1149] ss:$9 sm:$0xff] %v544
        %1172 = vst [vmem:[%s1151] ss:$9 sm:$0xff] %v547
        %1173 = vst [vmem:[%s1153] ss:$9 sm:$0xff] %v550
        %1174 = vst [vmem:[%s1155] ss:$9 sm:$0xff] %v553
        %v1175 = vld [vmem:[#allocation1] sm:$0xff]
        %1176 = vst [vmem:[#allocation1] ss:$9 sm:$0xff] %v556
        %1177 = vst [vmem:[%s1143] ss:$9 sm:$0xff] %v559
        %1178 = vst [vmem:[%s1145] ss:$9 sm:$0xff] %v562
        %1179 = vst [vmem:[%s1147] ss:$9 sm:$0xff] %v565
        %1180 = vst [vmem:[%s1149] ss:$9 sm:$0xff] %v568
        %1181 = vst [vmem:[%s1151] ss:$9 sm:$0xff] %v571
        %1182 = vst [vmem:[%s1153] ss:$9 sm:$0xff] %v574
        %1183 = vst [vmem:[%s1155] ss:$9 sm:$0xff] %v577
        %v1184 = vld [vmem:[#allocation1] sm:$0xff]
        %1185 = vst [vmem:[#allocation1] ss:$9 sm:$0xff] %v580
        %1186 = vst [vmem:[%s1143] ss:$9 sm:$0xff] %v583
        %1187 = vst [vmem:[%s1145] ss:$9 sm:$0xff] %v586
        %1188 = vst [vmem:[%s1147] ss:$9 sm:$0xff] %v589
        %1189 = vst [vmem:[%s1149] ss:$9 sm:$0xff] %v592
        %1190 = vst [vmem:[%s1151] ss:$9 sm:$0xff] %v595
        %1191 = vst [vmem:[%s1153] ss:$9 sm:$0xff] %v598
        %1192 = vst [vmem:[%s1155] ss:$9 sm:$0xff] %v601
        %v1193 = vld [vmem:[#allocation1] sm:$0xff]
        %v1196 = vunpack.c.l.b16 %v1140
        %v1197 = vunpack.c.l.b16 %v1141
        %v1198 = vpack.c.b16 %v1197, %v1196
        %v1200 = vsel %vm686, %v1157, 0
        %v1202 = vsel %vm686, %v1166, 0
        %v1204 = vsel %vm686, %v1175, 0
        %v1206 = vsel %vm686, %v1184, 0
        %v1208 = vsel %vm686, %v1193, 0
        %1210 = vmatpush.bf16.msra.mxu0 0
        %1211 = vmatpush.bf16.msra.mxu0 0
        %1212 = vmatpush.bf16.msra.mxu0 0
        %1213 = vmatpush.bf16.msra.mxu0 0
        %1214 = vmatpush.bf16.msra.mxu0 0
        %1215 = vmatpush.bf16.msra.mxu0 0
        %1216 = vmatpush.bf16.msra.mxu0 0
        %1217 = vmatpush.bf16.msra.mxu0 %v1198
        %1218 = vmatmul.bf16.gmra.mxu0 %v1200
        %v1219 = vpop.f32.mrf.mxu0
        %v1220 = vadd.f32 0.0, %v1219
        %v1221 = vpop.f32.mrf.mxu0
        %v1222 = vadd.f32 0.0, %v1221
        %1223 = vmatmul.bf16.gmra.mxu0 %v1202
        %v1224 = vpop.f32.mrf.mxu0
        %v1225 = vadd.f32 0.0, %v1224
        %v1226 = vpop.f32.mrf.mxu0
        %v1227 = vadd.f32 0.0, %v1226
        %1228 = vmatmul.bf16.gmra.mxu0 %v1204
        %v1229 = vpop.f32.mrf.mxu0
        %v1230 = vadd.f32 0.0, %v1229
        %v1231 = vpop.f32.mrf.mxu0
        %v1232 = vadd.f32 0.0, %v1231
        %1233 = vmatmul.bf16.gmra.mxu0 %v1206
        %v1234 = vpop.f32.mrf.mxu0
        %v1235 = vadd.f32 0.0, %v1234
        %v1236 = vpop.f32.mrf.mxu0
        %v1237 = vadd.f32 0.0, %v1236
        %1238 = vmatmul.bf16.gmra.mxu0 %v1208
        %v1239 = vpop.f32.mrf.mxu0
        %v1240 = vadd.f32 0.0, %v1239
        %v1241 = vpop.f32.mrf.mxu0
        %v1242 = vadd.f32 0.0, %v1241
        %1243 = vdwg.mxu0
        %v1254 = vrot.slane %v1220, 2
        %v1255 = vrot.slane %v1220, 4
        %v1256 = vrot.slane %v1220, 6
        %v1257 = vrot.slane %v1222, 4
        %v1258 = vrot.slane %v1222, 6
        %v1259 = vrot.slane %v1225, 2
        %v1260 = vrot.slane %v1225, 6
        %v1261 = vrot.slane %v1227, 2
        %v1262 = vrot.slane %v1227, 4
        %v1263 = vrot.slane %v1230, 2
        %v1264 = vrot.slane %v1230, 4
        %v1265 = vrot.slane %v1230, 6
        %v1266 = vrot.slane %v1232, 2
        %v1267 = vrot.slane %v1232, 4
        %v1268 = vrot.slane %v1232, 6
        %v1269 = vrot.slane %v1235, 4
        %v1270 = vrot.slane %v1235, 6
        %v1271 = vrot.slane %v1237, 2
        %v1272 = vrot.slane %v1237, 6
        %v1273 = vrot.slane %v1240, 2
        %v1274 = vrot.slane %v1240, 4
        %v1275 = vrot.slane %v1242, 2
        %v1276 = vrot.slane %v1242, 4
        %v1277 = vrot.slane %v1242, 6
        %v1302 = vadd.f32 %v1107, %v1254
        %v1303 = vadd.f32 %v1108, %v1255
        %v1304 = vadd.f32 %v1109, %v1256
        %v1305 = vadd.f32 %v1110, %v1222
        %v1306 = vadd.f32 %v1111, %v1257
        %v1307 = vadd.f32 %v1112, %v1258
        %v1308 = vadd.f32 %v1113, %v1225
        %v1309 = vadd.f32 %v1114, %v1259
        %v1310 = vadd.f32 %v1115, %v1260
        %v1311 = vadd.f32 %v1116, %v1227
        %v1312 = vadd.f32 %v1117, %v1261
        %v1313 = vadd.f32 %v1118, %v1262
        %v1314 = vadd.f32 %v1119, %v1230
        %v1315 = vadd.f32 %v1120, %v1263
        %v1316 = vadd.f32 %v1121, %v1264
        %v1317 = vadd.f32 %v1122, %v1265
        %v1318 = vadd.f32 %v1123, %v1266
        %v1319 = vadd.f32 %v1124, %v1267
        %v1320 = vadd.f32 %v1125, %v1268
        %v1321 = vadd.f32 %v1126, %v1235
        %v1322 = vadd.f32 %v1127, %v1269
        %v1323 = vadd.f32 %v1128, %v1270
        %v1324 = vadd.f32 %v1129, %v1237
        %v1325 = vadd.f32 %v1130, %v1271
        %v1326 = vadd.f32 %v1131, %v1272
        %v1327 = vadd.f32 %v1132, %v1240
        %v1328 = vadd.f32 %v1133, %v1273
        %v1329 = vadd.f32 %v1134, %v1274
        %v1330 = vadd.f32 %v1135, %v1242
        %v1331 = vadd.f32 %v1136, %v1275
        %v1332 = vadd.f32 %v1137, %v1276
        %v1333 = vadd.f32 %v1138, %v1277
        %v1336 = vrot.slane %v443, 3
        %v1337 = vrot.slane %v444, 3
        %v1340 = vsel %vm380, %v443, %v1336
        %v1341 = vsel %vm482, %v443, %v1336
        %v1343 = vrot.slane %v1341, 1
        %v1344 = vsel %vm486, %v443, %v1336
        %v1346 = vrot.slane %v1344, 2
        %v1347 = vsel %vm490, %v443, %v1336
        %v1349 = vrot.slane %v1347, 3
        %v1352 = vsel %vm380, %v444, %v1337
        %s1353 = scalar_lea.vmem [#allocation7], 24
        %v1354 = vld [vmem:[%s1353] sm:$0xf]
        %v1355 = vld [vmem:[%s1353 + $0x4] sm:$0xf]
        %1356 = vst [vmem:[#allocation1] ss:$9 sm:$0xff] %v499
        %s1357 = scalar_lea.vmem [#allocation1], 1
        %1358 = vst [vmem:[%s1357] ss:$9 sm:$0xff] %v502
        %s1359 = scalar_lea.vmem [#allocation1], 2
        %1360 = vst [vmem:[%s1359] ss:$9 sm:$0xff] %v505
        %s1361 = scalar_lea.vmem [#allocation1], 3
        %1362 = vst [vmem:[%s1361] ss:$9 sm:$0xff] %v508
        %s1363 = scalar_lea.vmem [#allocation1], 4
        %1364 = vst [vmem:[%s1363] ss:$9 sm:$0xff] %v511
        %s1365 = scalar_lea.vmem [#allocation1], 5
        %1366 = vst [vmem:[%s1365] ss:$9 sm:$0xff] %v514
        %s1367 = scalar_lea.vmem [#allocation1], 6
        %1368 = vst [vmem:[%s1367] ss:$9 sm:$0xff] %v517
        %s1369 = scalar_lea.vmem [#allocation1], 7
        %1370 = vst [vmem:[%s1369] ss:$9 sm:$0xff] %v520
        %v1371 = vld [vmem:[#allocation1] sm:$0xff]
        %1372 = vst [vmem:[#allocation1] ss:$9 sm:$0xff] %v523
        %1373 = vst [vmem:[%s1357] ss:$9 sm:$0xff] %v526
        %1374 = vst [vmem:[%s1359] ss:$9 sm:$0xff] %v529
        %1375 = vst [vmem:[%s1361] ss:$9 sm:$0xff] %v532
        %1376 = vst [vmem:[%s1363] ss:$9 sm:$0xff] %v535
        %1377 = vst [vmem:[%s1365] ss:$9 sm:$0xff] %v538
        %1378 = vst [vmem:[%s1367] ss:$9 sm:$0xff] %v541
        %1379 = vst [vmem:[%s1369] ss:$9 sm:$0xff] %v544
        %v1380 = vld [vmem:[#allocation1] sm:$0xff]
        %1381 = vst [vmem:[#allocation1] ss:$9 sm:$0xff] %v547
        %1382 = vst [vmem:[%s1357] ss:$9 sm:$0xff] %v550
        %1383 = vst [vmem:[%s1359] ss:$9 sm:$0xff] %v553
        %1384 = vst [vmem:[%s1361] ss:$9 sm:$0xff] %v556
        %1385 = vst [vmem:[%s1363] ss:$9 sm:$0xff] %v559
        %1386 = vst [vmem:[%s1365] ss:$9 sm:$0xff] %v562
        %1387 = vst [vmem:[%s1367] ss:$9 sm:$0xff] %v565
        %1388 = vst [vmem:[%s1369] ss:$9 sm:$0xff] %v568
        %v1389 = vld [vmem:[#allocation1] sm:$0xff]
        %1390 = vst [vmem:[#allocation1] ss:$9 sm:$0xff] %v571
        %1391 = vst [vmem:[%s1357] ss:$9 sm:$0xff] %v574
        %1392 = vst [vmem:[%s1359] ss:$9 sm:$0xff] %v577
        %1393 = vst [vmem:[%s1361] ss:$9 sm:$0xff] %v580
        %1394 = vst [vmem:[%s1363] ss:$9 sm:$0xff] %v583
        %1395 = vst [vmem:[%s1365] ss:$9 sm:$0xff] %v586
        %1396 = vst [vmem:[%s1367] ss:$9 sm:$0xff] %v589
        %1397 = vst [vmem:[%s1369] ss:$9 sm:$0xff] %v592
        %v1398 = vld [vmem:[#allocation1] sm:$0xff]
        %1399 = vst [vmem:[#allocation1] ss:$9 sm:$0xff] %v595
        %1400 = vst [vmem:[%s1357] ss:$9 sm:$0xff] %v598
        %1401 = vst [vmem:[%s1359] ss:$9 sm:$0xff] %v601
        %1402 = vst [vmem:[%s1361] ss:$9 sm:$0xff] %v1340
        %1404 = vst [vmem:[%s1363] ss:$9 sm:$0xff] %v1343
        %1406 = vst [vmem:[%s1365] ss:$9 sm:$0xff] %v1346
        %1408 = vst [vmem:[%s1367] ss:$9 sm:$0xff] %v1349
        %1409 = vst [vmem:[%s1369] ss:$9 sm:$0xff] %v1352
        %v1410 = vld [vmem:[#allocation1] sm:$0xff]
        %v1413 = vunpack.c.l.b16 %v1354
        %v1414 = vunpack.c.l.b16 %v1355
        %v1415 = vpack.c.b16 %v1414, %v1413
        %v1417 = vsel %vm686, %v1371, 0
        %v1419 = vsel %vm686, %v1380, 0
        %v1421 = vsel %vm686, %v1389, 0
        %v1423 = vsel %vm686, %v1398, 0
        %v1425 = vsel %vm686, %v1410, 0
        %1427 = vmatpush.bf16.msra.mxu0 0
        %1428 = vmatpush.bf16.msra.mxu0 0
        %1429 = vmatpush.bf16.msra.mxu0 0
        %1430 = vmatpush.bf16.msra.mxu0 0
        %1431 = vmatpush.bf16.msra.mxu0 0
        %1432 = vmatpush.bf16.msra.mxu0 0
        %1433 = vmatpush.bf16.msra.mxu0 0
        %1434 = vmatpush.bf16.msra.mxu0 %v1415
        %1435 = vmatmul.bf16.gmra.mxu0 %v1417
        %v1436 = vpop.f32.mrf.mxu0
        %v1437 = vadd.f32 0.0, %v1436
        %v1438 = vpop.f32.mrf.mxu0
        %v1439 = vadd.f32 0.0, %v1438
        %1440 = vmatmul.bf16.gmra.mxu0 %v1419
        %v1441 = vpop.f32.mrf.mxu0
        %v1442 = vadd.f32 0.0, %v1441
        %v1443 = vpop.f32.mrf.mxu0
        %v1444 = vadd.f32 0.0, %v1443
        %1445 = vmatmul.bf16.gmra.mxu0 %v1421
        %v1446 = vpop.f32.mrf.mxu0
        %v1447 = vadd.f32 0.0, %v1446
        %v1448 = vpop.f32.mrf.mxu0
        %v1449 = vadd.f32 0.0, %v1448
        %1450 = vmatmul.bf16.gmra.mxu0 %v1423
        %v1451 = vpop.f32.mrf.mxu0
        %v1452 = vadd.f32 0.0, %v1451
        %v1453 = vpop.f32.mrf.mxu0
        %v1454 = vadd.f32 0.0, %v1453
        %1455 = vmatmul.bf16.gmra.mxu0 %v1425
        %v1456 = vpop.f32.mrf.mxu0
        %v1457 = vadd.f32 0.0, %v1456
        %v1458 = vpop.f32.mrf.mxu0
        %v1459 = vadd.f32 0.0, %v1458
        %1460 = vdwg.mxu0
        %v1471 = vrot.slane %v1437, 2
        %v1472 = vrot.slane %v1437, 4
        %v1473 = vrot.slane %v1437, 6
        %v1474 = vrot.slane %v1439, 2
        %v1475 = vrot.slane %v1439, 4
        %v1476 = vrot.slane %v1439, 6
        %v1477 = vrot.slane %v1442, 4
        %v1478 = vrot.slane %v1442, 6
        %v1479 = vrot.slane %v1444, 2
        %v1480 = vrot.slane %v1444, 6
        %v1481 = vrot.slane %v1447, 2
        %v1482 = vrot.slane %v1447, 4
        %v1483 = vrot.slane %v1449, 2
        %v1484 = vrot.slane %v1449, 4
        %v1485 = vrot.slane %v1449, 6
        %v1486 = vrot.slane %v1452, 2
        %v1487 = vrot.slane %v1452, 4
        %v1488 = vrot.slane %v1452, 6
        %v1489 = vrot.slane %v1454, 4
        %v1490 = vrot.slane %v1454, 6
        %v1491 = vrot.slane %v1457, 2
        %v1492 = vrot.slane %v1457, 6
        %v1493 = vrot.slane %v1459, 2
        %v1494 = vrot.slane %v1459, 4
        %v1519 = vadd.f32 %v1302, %v1437
        %v1520 = vadd.f32 %v1303, %v1471
        %v1521 = vadd.f32 %v1304, %v1472
        %v1522 = vadd.f32 %v1305, %v1473
        %v1523 = vadd.f32 %v1306, %v1474
        %v1524 = vadd.f32 %v1307, %v1475
        %v1525 = vadd.f32 %v1308, %v1476
        %v1526 = vadd.f32 %v1309, %v1442
        %v1527 = vadd.f32 %v1310, %v1477
        %v1528 = vadd.f32 %v1311, %v1478
        %v1529 = vadd.f32 %v1312, %v1444
        %v1530 = vadd.f32 %v1313, %v1479
        %v1531 = vadd.f32 %v1314, %v1480
        %v1532 = vadd.f32 %v1315, %v1447
        %v1533 = vadd.f32 %v1316, %v1481
        %v1534 = vadd.f32 %v1317, %v1482
        %v1535 = vadd.f32 %v1318, %v1449
        %v1536 = vadd.f32 %v1319, %v1483
        %v1537 = vadd.f32 %v1320, %v1484
        %v1538 = vadd.f32 %v1321, %v1485
        %v1539 = vadd.f32 %v1322, %v1486
        %v1540 = vadd.f32 %v1323, %v1487
        %v1541 = vadd.f32 %v1324, %v1488
        %v1542 = vadd.f32 %v1325, %v1454
        %v1543 = vadd.f32 %v1326, %v1489
        %v1544 = vadd.f32 %v1327, %v1490
        %v1545 = vadd.f32 %v1328, %v1457
        %v1546 = vadd.f32 %v1329, %v1491
        %v1547 = vadd.f32 %v1330, %v1492
        %v1548 = vadd.f32 %v1331, %v1459
        %v1549 = vadd.f32 %v1332, %v1493
        %v1550 = vadd.f32 %v1333, %v1494
        %s1551 = scalar_lea.vmem [#allocation7], 32
        %v1552 = vld [vmem:[%s1551] sm:$0xf]
        %v1553 = vld [vmem:[%s1551 + $0x4] sm:$0xf]
        %1554 = vst [vmem:[#allocation1] ss:$9 sm:$0xff] %v499
        %s1555 = scalar_lea.vmem [#allocation1], 1
        %1556 = vst [vmem:[%s1555] ss:$9 sm:$0xff] %v502
        %s1557 = scalar_lea.vmem [#allocation1], 2
        %1558 = vst [vmem:[%s1557] ss:$9 sm:$0xff] %v505
        %s1559 = scalar_lea.vmem [#allocation1], 3
        %1560 = vst [vmem:[%s1559] ss:$9 sm:$0xff] %v508
        %s1561 = scalar_lea.vmem [#allocation1], 4
        %1562 = vst [vmem:[%s1561] ss:$9 sm:$0xff] %v511
        %s1563 = scalar_lea.vmem [#allocation1], 5
        %1564 = vst [vmem:[%s1563] ss:$9 sm:$0xff] %v514
        %s1565 = scalar_lea.vmem [#allocation1], 6
        %1566 = vst [vmem:[%s1565] ss:$9 sm:$0xff] %v517
        %s1567 = scalar_lea.vmem [#allocation1], 7
        %1568 = vst [vmem:[%s1567] ss:$9 sm:$0xff] %v520
        %v1569 = vld [vmem:[#allocation1] sm:$0xff]
        %1570 = vst [vmem:[#allocation1] ss:$9 sm:$0xff] %v523
        %1571 = vst [vmem:[%s1555] ss:$9 sm:$0xff] %v526
        %1572 = vst [vmem:[%s1557] ss:$9 sm:$0xff] %v529
        %1573 = vst [vmem:[%s1559] ss:$9 sm:$0xff] %v532
        %1574 = vst [vmem:[%s1561] ss:$9 sm:$0xff] %v535
        %1575 = vst [vmem:[%s1563] ss:$9 sm:$0xff] %v538
        %1576 = vst [vmem:[%s1565] ss:$9 sm:$0xff] %v541
        %1577 = vst [vmem:[%s1567] ss:$9 sm:$0xff] %v544
        %v1578 = vld [vmem:[#allocation1] sm:$0xff]
        %1579 = vst [vmem:[#allocation1] ss:$9 sm:$0xff] %v547
        %1580 = vst [vmem:[%s1555] ss:$9 sm:$0xff] %v550
        %1581 = vst [vmem:[%s1557] ss:$9 sm:$0xff] %v553
        %1582 = vst [vmem:[%s1559] ss:$9 sm:$0xff] %v556
        %1583 = vst [vmem:[%s1561] ss:$9 sm:$0xff] %v559
        %1584 = vst [vmem:[%s1563] ss:$9 sm:$0xff] %v562
        %1585 = vst [vmem:[%s1565] ss:$9 sm:$0xff] %v565
        %1586 = vst [vmem:[%s1567] ss:$9 sm:$0xff] %v568
        %v1587 = vld [vmem:[#allocation1] sm:$0xff]
        %1588 = vst [vmem:[#allocation1] ss:$9 sm:$0xff] %v571
        %1589 = vst [vmem:[%s1555] ss:$9 sm:$0xff] %v574
        %1590 = vst [vmem:[%s1557] ss:$9 sm:$0xff] %v577
        %1591 = vst [vmem:[%s1559] ss:$9 sm:$0xff] %v580
        %1592 = vst [vmem:[%s1561] ss:$9 sm:$0xff] %v583
        %1593 = vst [vmem:[%s1563] ss:$9 sm:$0xff] %v586
        %1594 = vst [vmem:[%s1565] ss:$9 sm:$0xff] %v589
        %1595 = vst [vmem:[%s1567] ss:$9 sm:$0xff] %v592
        %v1596 = vld [vmem:[#allocation1] sm:$0xff]
        %1597 = vst [vmem:[#allocation1] ss:$9 sm:$0xff] %v595
        %1598 = vst [vmem:[%s1555] ss:$9 sm:$0xff] %v598
        %1599 = vst [vmem:[%s1557] ss:$9 sm:$0xff] %v601
        %1600 = vst [vmem:[%s1559] ss:$9 sm:$0xff] %v1340
        %1601 = vst [vmem:[%s1561] ss:$9 sm:$0xff] %v1343
        %1602 = vst [vmem:[%s1563] ss:$9 sm:$0xff] %v1346
        %1603 = vst [vmem:[%s1565] ss:$9 sm:$0xff] %v1349
        %1604 = vst [vmem:[%s1567] ss:$9 sm:$0xff] %v1352
        %v1605 = vld [vmem:[#allocation1] sm:$0xff]
        %v1608 = vunpack.c.l.b16 %v1552
        %v1609 = vunpack.c.l.b16 %v1553
        %v1610 = vpack.c.b16 %v1609, %v1608
        %v1612 = vsel %vm686, %v1569, 0
        %v1614 = vsel %vm686, %v1578, 0
        %v1616 = vsel %vm686, %v1587, 0
        %v1618 = vsel %vm686, %v1596, 0
        %v1620 = vsel %vm686, %v1605, 0
        %1622 = vmatpush.bf16.msra.mxu0 0
        %1623 = vmatpush.bf16.msra.mxu0 0
        %1624 = vmatpush.bf16.msra.mxu0 0
        %1625 = vmatpush.bf16.msra.mxu0 0
        %1626 = vmatpush.bf16.msra.mxu0 0
        %1627 = vmatpush.bf16.msra.mxu0 0
        %1628 = vmatpush.bf16.msra.mxu0 0
        %1629 = vmatpush.bf16.msra.mxu0 %v1610
        %1630 = vmatmul.bf16.gmra.mxu0 %v1612
        %v1631 = vpop.f32.mrf.mxu0
        %v1632 = vadd.f32 0.0, %v1631
        %v1633 = vpop.f32.mrf.mxu0
        %v1634 = vadd.f32 0.0, %v1633
        %1635 = vmatmul.bf16.gmra.mxu0 %v1614
        %v1636 = vpop.f32.mrf.mxu0
        %v1637 = vadd.f32 0.0, %v1636
        %v1638 = vpop.f32.mrf.mxu0
        %v1639 = vadd.f32 0.0, %v1638
        %1640 = vmatmul.bf16.gmra.mxu0 %v1616
        %v1641 = vpop.f32.mrf.mxu0
        %v1642 = vadd.f32 0.0, %v1641
        %v1643 = vpop.f32.mrf.mxu0
        %v1644 = vadd.f32 0.0, %v1643
        %1645 = vmatmul.bf16.gmra.mxu0 %v1618
        %v1646 = vpop.f32.mrf.mxu0
        %v1647 = vadd.f32 0.0, %v1646
        %v1648 = vpop.f32.mrf.mxu0
        %v1649 = vadd.f32 0.0, %v1648
        %1650 = vmatmul.bf16.gmra.mxu0 %v1620
        %v1651 = vpop.f32.mrf.mxu0
        %v1652 = vadd.f32 0.0, %v1651
        %v1653 = vpop.f32.mrf.mxu0
        %v1654 = vadd.f32 0.0, %v1653
        %1655 = vdwg.mxu0
        %v1666 = vrot.slane %v1632, 2
        %v1667 = vrot.slane %v1632, 4
        %v1668 = vrot.slane %v1632, 6
        %v1669 = vrot.slane %v1634, 2
        %v1670 = vrot.slane %v1634, 4
        %v1671 = vrot.slane %v1634, 6
        %v1672 = vrot.slane %v1637, 2
        %v1673 = vrot.slane %v1637, 4
        %v1674 = vrot.slane %v1637, 6
        %v1675 = vrot.slane %v1639, 2
        %v1676 = vrot.slane %v1639, 4
        %v1677 = vrot.slane %v1639, 6
        %v1678 = vrot.slane %v1642, 2
        %v1679 = vrot.slane %v1642, 4
        %v1680 = vrot.slane %v1642, 6
        %v1681 = vrot.slane %v1644, 2
        %v1682 = vrot.slane %v1644, 4
        %v1683 = vrot.slane %v1644, 6
        %v1684 = vrot.slane %v1647, 2
        %v1685 = vrot.slane %v1647, 4
        %v1686 = vrot.slane %v1647, 6
        %v1687 = vrot.slane %v1649, 2
        %v1688 = vrot.slane %v1649, 4
        %v1689 = vrot.slane %v1649, 6
        %v1690 = vrot.slane %v1652, 2
        %v1691 = vrot.slane %v1652, 4
        %v1692 = vrot.slane %v1652, 6
        %v1693 = vrot.slane %v1654, 2
        %v1694 = vrot.slane %v1654, 4
        %v1695 = vrot.slane %v1654, 6
        %v1696 = vrot.slane %v1632, 7
        %v1697 = vrot.slane %v1696, 2
        %v1698 = vrot.slane %v1666, 7
        %v1699 = vsel %vm970, %v1697, %v1698
        %v1700 = vrot.slane %v1698, 2
        %v1701 = vrot.slane %v1667, 7
        %v1702 = vsel %vm970, %v1700, %v1701
        %v1703 = vrot.slane %v1701, 2
        %v1704 = vrot.slane %v1668, 7
        %v1705 = vsel %vm970, %v1703, %v1704
        %v1706 = vrot.slane %v1704, 2
        %v1707 = vrot.slane %v1634, 7
        %v1708 = vsel %vm970, %v1706, %v1707
        %v1709 = vrot.slane %v1669, 7
        %v1710 = vrot.slane %v1709, 2
        %v1711 = vrot.slane %v1670, 7
        %v1712 = vsel %vm970, %v1710, %v1711
        %v1713 = vrot.slane %v1711, 2
        %v1714 = vrot.slane %v1671, 7
        %v1715 = vsel %vm970, %v1713, %v1714
        %v1716 = vrot.slane %v1714, 2
        %v1717 = vrot.slane %v1637, 7
        %v1718 = vsel %vm970, %v1716, %v1717
        %v1719 = vrot.slane %v1717, 2
        %v1720 = vrot.slane %v1672, 7
        %v1721 = vsel %vm970, %v1719, %v1720
        %v1722 = vrot.slane %v1673, 7
        %v1723 = vrot.slane %v1722, 2
        %v1724 = vrot.slane %v1674, 7
        %v1725 = vsel %vm970, %v1723, %v1724
        %v1726 = vrot.slane %v1724, 2
        %v1727 = vrot.slane %v1639, 7
        %v1728 = vsel %vm970, %v1726, %v1727
        %v1729 = vrot.slane %v1727, 2
        %v1730 = vrot.slane %v1675, 7
        %v1731 = vsel %vm970, %v1729, %v1730
        %v1732 = vrot.slane %v1730, 2
        %v1733 = vrot.slane %v1676, 7
        %v1734 = vsel %vm970, %v1732, %v1733
        %v1735 = vrot.slane %v1677, 7
        %v1736 = vrot.slane %v1735, 2
        %v1737 = vrot.slane %v1642, 7
        %v1738 = vsel %vm970, %v1736, %v1737
        %v1739 = vrot.slane %v1737, 2
        %v1740 = vrot.slane %v1678, 7
        %v1741 = vsel %vm970, %v1739, %v1740
        %v1742 = vrot.slane %v1740, 2
        %v1743 = vrot.slane %v1679, 7
        %v1744 = vsel %vm970, %v1742, %v1743
        %v1745 = vrot.slane %v1743, 2
        %v1746 = vrot.slane %v1680, 7
        %v1747 = vsel %vm970, %v1745, %v1746
        %v1748 = vrot.slane %v1644, 7
        %v1749 = vrot.slane %v1748, 2
        %v1750 = vrot.slane %v1681, 7
        %v1751 = vsel %vm970, %v1749, %v1750
        %v1752 = vrot.slane %v1750, 2
        %v1753 = vrot.slane %v1682, 7
        %v1754 = vsel %vm970, %v1752, %v1753
        %v1755 = vrot.slane %v1753, 2
        %v1756 = vrot.slane %v1683, 7
        %v1757 = vsel %vm970, %v1755, %v1756
        %v1758 = vrot.slane %v1756, 2
        %v1759 = vrot.slane %v1647, 7
        %v1760 = vsel %vm970, %v1758, %v1759
        %v1761 = vrot.slane %v1684, 7
        %v1762 = vrot.slane %v1761, 2
        %v1763 = vrot.slane %v1685, 7
        %v1764 = vsel %vm970, %v1762, %v1763
        %v1765 = vrot.slane %v1763, 2
        %v1766 = vrot.slane %v1686, 7
        %v1767 = vsel %vm970, %v1765, %v1766
        %v1768 = vrot.slane %v1766, 2
        %v1769 = vrot.slane %v1649, 7
        %v1770 = vsel %vm970, %v1768, %v1769
        %v1771 = vrot.slane %v1769, 2
        %v1772 = vrot.slane %v1687, 7
        %v1773 = vsel %vm970, %v1771, %v1772
        %v1774 = vrot.slane %v1688, 7
        %v1775 = vrot.slane %v1774, 2
        %v1776 = vrot.slane %v1689, 7
        %v1777 = vsel %vm970, %v1775, %v1776
        %v1778 = vrot.slane %v1776, 2
        %v1779 = vrot.slane %v1652, 7
        %v1780 = vsel %vm970, %v1778, %v1779
        %v1781 = vrot.slane %v1779, 2
        %v1782 = vrot.slane %v1690, 7
        %v1783 = vsel %vm970, %v1781, %v1782
        %v1784 = vrot.slane %v1782, 2
        %v1785 = vrot.slane %v1691, 7
        %v1786 = vsel %vm970, %v1784, %v1785
        %v1787 = vrot.slane %v1692, 7
        %v1788 = vrot.slane %v1787, 2
        %v1789 = vrot.slane %v1654, 7
        %v1790 = vsel %vm970, %v1788, %v1789
        %v1791 = vrot.slane %v1789, 2
        %v1792 = vrot.slane %v1693, 7
        %v1793 = vsel %vm970, %v1791, %v1792
        %v1794 = vrot.slane %v1792, 2
        %v1795 = vrot.slane %v1694, 7
        %v1796 = vsel %vm970, %v1794, %v1795
        %v1797 = vrot.slane %v1795, 2
        %v1798 = vrot.slane %v1695, 7
        %v1799 = vsel %vm970, %v1797, %v1798
        %v1832 = vadd.f32 %v1519, %v1699
        %v1833 = vadd.f32 %v1520, %v1702
        %v1834 = vadd.f32 %v1521, %v1705
        %v1835 = vadd.f32 %v1522, %v1708
        %v1836 = vadd.f32 %v1523, %v1712
        %v1837 = vadd.f32 %v1524, %v1715
        %v1838 = vadd.f32 %v1525, %v1718
        %v1839 = vadd.f32 %v1526, %v1721
        %v1840 = vadd.f32 %v1527, %v1725
        %v1841 = vadd.f32 %v1528, %v1728
        %v1842 = vadd.f32 %v1529, %v1731
        %v1843 = vadd.f32 %v1530, %v1734
        %v1844 = vadd.f32 %v1531, %v1738
        %v1845 = vadd.f32 %v1532, %v1741
        %v1846 = vadd.f32 %v1533, %v1744
        %v1847 = vadd.f32 %v1534, %v1747
        %v1848 = vadd.f32 %v1535, %v1751
        %v1849 = vadd.f32 %v1536, %v1754
        %v1850 = vadd.f32 %v1537, %v1757
        %v1851 = vadd.f32 %v1538, %v1760
        %v1852 = vadd.f32 %v1539, %v1764
        %v1853 = vadd.f32 %v1540, %v1767
        %v1854 = vadd.f32 %v1541, %v1770
        %v1855 = vadd.f32 %v1542, %v1773
        %v1856 = vadd.f32 %v1543, %v1777
        %v1857 = vadd.f32 %v1544, %v1780
        %v1858 = vadd.f32 %v1545, %v1783
        %v1859 = vadd.f32 %v1546, %v1786
        %v1860 = vadd.f32 %v1547, %v1790
        %v1861 = vadd.f32 %v1548, %v1793
        %v1862 = vadd.f32 %v1549, %v1796
        %v1863 = vadd.f32 %v1550, %v1799
        %s1864 = scalar_lea.vmem [#allocation7], 40
        %v1865 = vld [vmem:[%s1864] sm:$0xf]
        %v1866 = vld [vmem:[%s1864 + $0x4] sm:$0xf]
        %1867 = vst [vmem:[#allocation1] ss:$9 sm:$0xff] %v499
        %s1868 = scalar_lea.vmem [#allocation1], 1
        %1869 = vst [vmem:[%s1868] ss:$9 sm:$0xff] %v502
        %s1870 = scalar_lea.vmem [#allocation1], 2
        %1871 = vst [vmem:[%s1870] ss:$9 sm:$0xff] %v505
        %s1872 = scalar_lea.vmem [#allocation1], 3
        %1873 = vst [vmem:[%s1872] ss:$9 sm:$0xff] %v508
        %s1874 = scalar_lea.vmem [#allocation1], 4
        %1875 = vst [vmem:[%s1874] ss:$9 sm:$0xff] %v511
        %s1876 = scalar_lea.vmem [#allocation1], 5
        %1877 = vst [vmem:[%s1876] ss:$9 sm:$0xff] %v514
        %s1878 = scalar_lea.vmem [#allocation1], 6
        %1879 = vst [vmem:[%s1878] ss:$9 sm:$0xff] %v517
        %s1880 = scalar_lea.vmem [#allocation1], 7
        %1881 = vst [vmem:[%s1880] ss:$9 sm:$0xff] %v520
        %v1882 = vld [vmem:[#allocation1] sm:$0xff]
        %1883 = vst [vmem:[#allocation1] ss:$9 sm:$0xff] %v523
        %1884 = vst [vmem:[%s1868] ss:$9 sm:$0xff] %v526
        %1885 = vst [vmem:[%s1870] ss:$9 sm:$0xff] %v529
        %1886 = vst [vmem:[%s1872] ss:$9 sm:$0xff] %v532
        %1887 = vst [vmem:[%s1874] ss:$9 sm:$0xff] %v535
        %1888 = vst [vmem:[%s1876] ss:$9 sm:$0xff] %v538
        %1889 = vst [vmem:[%s1878] ss:$9 sm:$0xff] %v541
        %1890 = vst [vmem:[%s1880] ss:$9 sm:$0xff] %v544
        %v1891 = vld [vmem:[#allocation1] sm:$0xff]
        %1892 = vst [vmem:[#allocation1] ss:$9 sm:$0xff] %v547
        %1893 = vst [vmem:[%s1868] ss:$9 sm:$0xff] %v550
        %1894 = vst [vmem:[%s1870] ss:$9 sm:$0xff] %v553
        %1895 = vst [vmem:[%s1872] ss:$9 sm:$0xff] %v556
        %1896 = vst [vmem:[%s1874] ss:$9 sm:$0xff] %v559
        %1897 = vst [vmem:[%s1876] ss:$9 sm:$0xff] %v562
        %1898 = vst [vmem:[%s1878] ss:$9 sm:$0xff] %v565
        %1899 = vst [vmem:[%s1880] ss:$9 sm:$0xff] %v568
        %v1900 = vld [vmem:[#allocation1] sm:$0xff]
        %1901 = vst [vmem:[#allocation1] ss:$9 sm:$0xff] %v571
        %1902 = vst [vmem:[%s1868] ss:$9 sm:$0xff] %v574
        %1903 = vst [vmem:[%s1870] ss:$9 sm:$0xff] %v577
        %1904 = vst [vmem:[%s1872] ss:$9 sm:$0xff] %v580
        %1905 = vst [vmem:[%s1874] ss:$9 sm:$0xff] %v583
        %1906 = vst [vmem:[%s1876] ss:$9 sm:$0xff] %v586
        %1907 = vst [vmem:[%s1878] ss:$9 sm:$0xff] %v589
        %1908 = vst [vmem:[%s1880] ss:$9 sm:$0xff] %v592
        %v1909 = vld [vmem:[#allocation1] sm:$0xff]
        %1910 = vst [vmem:[#allocation1] ss:$9 sm:$0xff] %v595
        %1911 = vst [vmem:[%s1868] ss:$9 sm:$0xff] %v598
        %1912 = vst [vmem:[%s1870] ss:$9 sm:$0xff] %v601
        %1913 = vst [vmem:[%s1872] ss:$9 sm:$0xff] %v1340
        %1914 = vst [vmem:[%s1874] ss:$9 sm:$0xff] %v1343
        %1915 = vst [vmem:[%s1876] ss:$9 sm:$0xff] %v1346
        %1916 = vst [vmem:[%s1878] ss:$9 sm:$0xff] %v1349
        %1917 = vst [vmem:[%s1880] ss:$9 sm:$0xff] %v1352
        %v1918 = vld [vmem:[#allocation1] sm:$0xff]
        %v1921 = vunpack.c.l.b16 %v1865
        %v1922 = vunpack.c.l.b16 %v1866
        %v1923 = vpack.c.b16 %v1922, %v1921
        %v1925 = vsel %vm686, %v1882, 0
        %v1927 = vsel %vm686, %v1891, 0
        %v1929 = vsel %vm686, %v1900, 0
        %v1931 = vsel %vm686, %v1909, 0
        %v1933 = vsel %vm686, %v1918, 0
        %1935 = vmatpush.bf16.msra.mxu0 0
        %1936 = vmatpush.bf16.msra.mxu0 0
        %1937 = vmatpush.bf16.msra.mxu0 0
        %1938 = vmatpush.bf16.msra.mxu0 0
        %1939 = vmatpush.bf16.msra.mxu0 0
        %1940 = vmatpush.bf16.msra.mxu0 0
        %1941 = vmatpush.bf16.msra.mxu0 0
        %1942 = vmatpush.bf16.msra.mxu0 %v1923
        %1943 = vmatmul.bf16.gmra.mxu0 %v1925
        %v1944 = vpop.f32.mrf.mxu0
        %v1945 = vadd.f32 0.0, %v1944
        %v1946 = vpop.f32.mrf.mxu0
        %v1947 = vadd.f32 0.0, %v1946
        %1948 = vmatmul.bf16.gmra.mxu0 %v1927
        %v1949 = vpop.f32.mrf.mxu0
        %v1950 = vadd.f32 0.0, %v1949
        %v1951 = vpop.f32.mrf.mxu0
        %v1952 = vadd.f32 0.0, %v1951
        %1953 = vmatmul.bf16.gmra.mxu0 %v1929
        %v1954 = vpop.f32.mrf.mxu0
        %v1955 = vadd.f32 0.0, %v1954
        %v1956 = vpop.f32.mrf.mxu0
        %v1957 = vadd.f32 0.0, %v1956
        %1958 = vmatmul.bf16.gmra.mxu0 %v1931
        %v1959 = vpop.f32.mrf.mxu0
        %v1960 = vadd.f32 0.0, %v1959
        %v1961 = vpop.f32.mrf.mxu0
        %v1962 = vadd.f32 0.0, %v1961
        %1963 = vmatmul.bf16.gmra.mxu0 %v1933
        %v1964 = vpop.f32.mrf.mxu0
        %v1965 = vadd.f32 0.0, %v1964
        %v1966 = vpop.f32.mrf.mxu0
        %v1967 = vadd.f32 0.0, %v1966
        %1968 = vdwg.mxu0
        %v1979 = vrot.slane %v1945, 2
        %v1980 = vrot.slane %v1945, 4
        %v1981 = vrot.slane %v1945, 6
        %v1982 = vrot.slane %v1947, 4
        %v1983 = vrot.slane %v1947, 6
        %v1984 = vrot.slane %v1950, 2
        %v1985 = vrot.slane %v1950, 6
        %v1986 = vrot.slane %v1952, 2
        %v1987 = vrot.slane %v1952, 4
        %v1988 = vrot.slane %v1955, 2
        %v1989 = vrot.slane %v1955, 4
        %v1990 = vrot.slane %v1955, 6
        %v1991 = vrot.slane %v1957, 2
        %v1992 = vrot.slane %v1957, 4
        %v1993 = vrot.slane %v1957, 6
        %v1994 = vrot.slane %v1960, 4
        %v1995 = vrot.slane %v1960, 6
        %v1996 = vrot.slane %v1962, 2
        %v1997 = vrot.slane %v1962, 6
        %v1998 = vrot.slane %v1965, 2
        %v1999 = vrot.slane %v1965, 4
        %v2000 = vrot.slane %v1967, 2
        %v2001 = vrot.slane %v1967, 4
        %v2002 = vrot.slane %v1967, 6
        %v2027 = vadd.f32 %v1832, %v1979
        %v2028 = vadd.f32 %v1833, %v1980
        %v2029 = vadd.f32 %v1834, %v1981
        %v2030 = vadd.f32 %v1835, %v1947
        %v2031 = vadd.f32 %v1836, %v1982
        %v2032 = vadd.f32 %v1837, %v1983
        %v2033 = vadd.f32 %v1838, %v1950
        %v2034 = vadd.f32 %v1839, %v1984
        %v2035 = vadd.f32 %v1840, %v1985
        %v2036 = vadd.f32 %v1841, %v1952
        %v2037 = vadd.f32 %v1842, %v1986
        %v2038 = vadd.f32 %v1843, %v1987
        %v2039 = vadd.f32 %v1844, %v1955
        %v2040 = vadd.f32 %v1845, %v1988
        %v2041 = vadd.f32 %v1846, %v1989
        %v2042 = vadd.f32 %v1847, %v1990
        %v2043 = vadd.f32 %v1848, %v1991
        %v2044 = vadd.f32 %v1849, %v1992
        %v2045 = vadd.f32 %v1850, %v1993
        %v2046 = vadd.f32 %v1851, %v1960
        %v2047 = vadd.f32 %v1852, %v1994
        %v2048 = vadd.f32 %v1853, %v1995
        %v2049 = vadd.f32 %v1854, %v1962
        %v2050 = vadd.f32 %v1855, %v1996
        %v2051 = vadd.f32 %v1856, %v1997
        %v2052 = vadd.f32 %v1857, %v1965
        %v2053 = vadd.f32 %v1858, %v1998
        %v2054 = vadd.f32 %v1859, %v1999
        %v2055 = vadd.f32 %v1860, %v1967
        %v2056 = vadd.f32 %v1861, %v2000
        %v2057 = vadd.f32 %v1862, %v2001
        %v2058 = vadd.f32 %v1863, %v2002
        %v2061 = vrot.slane %v445, 3
        %v2062 = vrot.slane %v446, 3
        %v2065 = vsel %vm380, %v445, %v2061
        %v2066 = vsel %vm482, %v445, %v2061
        %v2068 = vrot.slane %v2066, 1
        %v2069 = vsel %vm486, %v445, %v2061
        %v2071 = vrot.slane %v2069, 2
        %v2072 = vsel %vm490, %v445, %v2061
        %v2074 = vrot.slane %v2072, 3
        %v2077 = vsel %vm380, %v446, %v2062
        %s2078 = scalar_lea.vmem [#allocation7], 48
        %v2079 = vld [vmem:[%s2078] sm:$0xf]
        %v2080 = vld [vmem:[%s2078 + $0x4] sm:$0xf]
        %2081 = vst [vmem:[#allocation1] ss:$9 sm:$0xff] %v514
        %s2082 = scalar_lea.vmem [#allocation1], 1
        %2083 = vst [vmem:[%s2082] ss:$9 sm:$0xff] %v517
        %s2084 = scalar_lea.vmem [#allocation1], 2
        %2085 = vst [vmem:[%s2084] ss:$9 sm:$0xff] %v520
        %s2086 = scalar_lea.vmem [#allocation1], 3
        %2087 = vst [vmem:[%s2086] ss:$9 sm:$0xff] %v523
        %s2088 = scalar_lea.vmem [#allocation1], 4
        %2089 = vst [vmem:[%s2088] ss:$9 sm:$0xff] %v526
        %s2090 = scalar_lea.vmem [#allocation1], 5
        %2091 = vst [vmem:[%s2090] ss:$9 sm:$0xff] %v529
        %s2092 = scalar_lea.vmem [#allocation1], 6
        %2093 = vst [vmem:[%s2092] ss:$9 sm:$0xff] %v532
        %s2094 = scalar_lea.vmem [#allocation1], 7
        %2095 = vst [vmem:[%s2094] ss:$9 sm:$0xff] %v535
        %v2096 = vld [vmem:[#allocation1] sm:$0xff]
        %2097 = vst [vmem:[#allocation1] ss:$9 sm:$0xff] %v538
        %2098 = vst [vmem:[%s2082] ss:$9 sm:$0xff] %v541
        %2099 = vst [vmem:[%s2084] ss:$9 sm:$0xff] %v544
        %2100 = vst [vmem:[%s2086] ss:$9 sm:$0xff] %v547
        %2101 = vst [vmem:[%s2088] ss:$9 sm:$0xff] %v550
        %2102 = vst [vmem:[%s2090] ss:$9 sm:$0xff] %v553
        %2103 = vst [vmem:[%s2092] ss:$9 sm:$0xff] %v556
        %2104 = vst [vmem:[%s2094] ss:$9 sm:$0xff] %v559
        %v2105 = vld [vmem:[#allocation1] sm:$0xff]
        %2106 = vst [vmem:[#allocation1] ss:$9 sm:$0xff] %v562
        %2107 = vst [vmem:[%s2082] ss:$9 sm:$0xff] %v565
        %2108 = vst [vmem:[%s2084] ss:$9 sm:$0xff] %v568
        %2109 = vst [vmem:[%s2086] ss:$9 sm:$0xff] %v571
        %2110 = vst [vmem:[%s2088] ss:$9 sm:$0xff] %v574
        %2111 = vst [vmem:[%s2090] ss:$9 sm:$0xff] %v577
        %2112 = vst [vmem:[%s2092] ss:$9 sm:$0xff] %v580
        %2113 = vst [vmem:[%s2094] ss:$9 sm:$0xff] %v583
        %v2114 = vld [vmem:[#allocation1] sm:$0xff]
        %2115 = vst [vmem:[#allocation1] ss:$9 sm:$0xff] %v586
        %2116 = vst [vmem:[%s2082] ss:$9 sm:$0xff] %v589
        %2117 = vst [vmem:[%s2084] ss:$9 sm:$0xff] %v592
        %2118 = vst [vmem:[%s2086] ss:$9 sm:$0xff] %v595
        %2119 = vst [vmem:[%s2088] ss:$9 sm:$0xff] %v598
        %2120 = vst [vmem:[%s2090] ss:$9 sm:$0xff] %v601
        %2121 = vst [vmem:[%s2092] ss:$9 sm:$0xff] %v1340
        %2122 = vst [vmem:[%s2094] ss:$9 sm:$0xff] %v1343
        %v2123 = vld [vmem:[#allocation1] sm:$0xff]
        %2124 = vst [vmem:[#allocation1] ss:$9 sm:$0xff] %v1346
        %2125 = vst [vmem:[%s2082] ss:$9 sm:$0xff] %v1349
        %2126 = vst [vmem:[%s2084] ss:$9 sm:$0xff] %v1352
        %2127 = vst [vmem:[%s2086] ss:$9 sm:$0xff] %v2065
        %2129 = vst [vmem:[%s2088] ss:$9 sm:$0xff] %v2068
        %2131 = vst [vmem:[%s2090] ss:$9 sm:$0xff] %v2071
        %2133 = vst [vmem:[%s2092] ss:$9 sm:$0xff] %v2074
        %2134 = vst [vmem:[%s2094] ss:$9 sm:$0xff] %v2077
        %v2135 = vld [vmem:[#allocation1] sm:$0xff]
        %v2138 = vunpack.c.l.b16 %v2079
        %v2139 = vunpack.c.l.b16 %v2080
        %v2140 = vpack.c.b16 %v2139, %v2138
        %v2142 = vsel %vm686, %v2096, 0
        %v2144 = vsel %vm686, %v2105, 0
        %v2146 = vsel %vm686, %v2114, 0
        %v2148 = vsel %vm686, %v2123, 0
        %v2150 = vsel %vm686, %v2135, 0
        %2152 = vmatpush.bf16.msra.mxu0 0
        %2153 = vmatpush.bf16.msra.mxu0 0
        %2154 = vmatpush.bf16.msra.mxu0 0
        %2155 = vmatpush.bf16.msra.mxu0 0
        %2156 = vmatpush.bf16.msra.mxu0 0
        %2157 = vmatpush.bf16.msra.mxu0 0
        %2158 = vmatpush.bf16.msra.mxu0 0
        %2159 = vmatpush.bf16.msra.mxu0 %v2140
        %2160 = vmatmul.bf16.gmra.mxu0 %v2142
        %v2161 = vpop.f32.mrf.mxu0
        %v2162 = vadd.f32 0.0, %v2161
        %v2163 = vpop.f32.mrf.mxu0
        %v2164 = vadd.f32 0.0, %v2163
        %2165 = vmatmul.bf16.gmra.mxu0 %v2144
        %v2166 = vpop.f32.mrf.mxu0
        %v2167 = vadd.f32 0.0, %v2166
        %v2168 = vpop.f32.mrf.mxu0
        %v2169 = vadd.f32 0.0, %v2168
        %2170 = vmatmul.bf16.gmra.mxu0 %v2146
        %v2171 = vpop.f32.mrf.mxu0
        %v2172 = vadd.f32 0.0, %v2171
        %v2173 = vpop.f32.mrf.mxu0
        %v2174 = vadd.f32 0.0, %v2173
        %2175 = vmatmul.bf16.gmra.mxu0 %v2148
        %v2176 = vpop.f32.mrf.mxu0
        %v2177 = vadd.f32 0.0, %v2176
        %v2178 = vpop.f32.mrf.mxu0
        %v2179 = vadd.f32 0.0, %v2178
        %2180 = vmatmul.bf16.gmra.mxu0 %v2150
        %v2181 = vpop.f32.mrf.mxu0
        %v2182 = vadd.f32 0.0, %v2181
        %v2183 = vpop.f32.mrf.mxu0
        %v2184 = vadd.f32 0.0, %v2183
        %2185 = vdwg.mxu0
        %v2196 = vrot.slane %v2162, 2
        %v2197 = vrot.slane %v2162, 4
        %v2198 = vrot.slane %v2162, 6
        %v2199 = vrot.slane %v2164, 2
        %v2200 = vrot.slane %v2164, 4
        %v2201 = vrot.slane %v2164, 6
        %v2202 = vrot.slane %v2167, 4
        %v2203 = vrot.slane %v2167, 6
        %v2204 = vrot.slane %v2169, 2
        %v2205 = vrot.slane %v2169, 6
        %v2206 = vrot.slane %v2172, 2
        %v2207 = vrot.slane %v2172, 4
        %v2208 = vrot.slane %v2174, 2
        %v2209 = vrot.slane %v2174, 4
        %v2210 = vrot.slane %v2174, 6
        %v2211 = vrot.slane %v2177, 2
        %v2212 = vrot.slane %v2177, 4
        %v2213 = vrot.slane %v2177, 6
        %v2214 = vrot.slane %v2179, 4
        %v2215 = vrot.slane %v2179, 6
        %v2216 = vrot.slane %v2182, 2
        %v2217 = vrot.slane %v2182, 6
        %v2218 = vrot.slane %v2184, 2
        %v2219 = vrot.slane %v2184, 4
        %v2244 = vadd.f32 %v2027, %v2162
        %v2245 = vadd.f32 %v2028, %v2196
        %v2246 = vadd.f32 %v2029, %v2197
        %v2247 = vadd.f32 %v2030, %v2198
        %v2248 = vadd.f32 %v2031, %v2199
        %v2249 = vadd.f32 %v2032, %v2200
        %v2250 = vadd.f32 %v2033, %v2201
        %v2251 = vadd.f32 %v2034, %v2167
        %v2252 = vadd.f32 %v2035, %v2202
        %v2253 = vadd.f32 %v2036, %v2203
        %v2254 = vadd.f32 %v2037, %v2169
        %v2255 = vadd.f32 %v2038, %v2204
        %v2256 = vadd.f32 %v2039, %v2205
        %v2257 = vadd.f32 %v2040, %v2172
        %v2258 = vadd.f32 %v2041, %v2206
        %v2259 = vadd.f32 %v2042, %v2207
        %v2260 = vadd.f32 %v2043, %v2174
        %v2261 = vadd.f32 %v2044, %v2208
        %v2262 = vadd.f32 %v2045, %v2209
        %v2263 = vadd.f32 %v2046, %v2210
        %v2264 = vadd.f32 %v2047, %v2211
        %v2265 = vadd.f32 %v2048, %v2212
        %v2266 = vadd.f32 %v2049, %v2213
        %v2267 = vadd.f32 %v2050, %v2179
        %v2268 = vadd.f32 %v2051, %v2214
        %v2269 = vadd.f32 %v2052, %v2215
        %v2270 = vadd.f32 %v2053, %v2182
        %v2271 = vadd.f32 %v2054, %v2216
        %v2272 = vadd.f32 %v2055, %v2217
        %v2273 = vadd.f32 %v2056, %v2184
        %v2274 = vadd.f32 %v2057, %v2218
        %v2275 = vadd.f32 %v2058, %v2219
        %s2276 = scalar_lea.vmem [#allocation7], 56
        %v2277 = vld [vmem:[%s2276] sm:$0xf]
        %v2278 = vld [vmem:[%s2276 + $0x4] sm:$0xf]
        %2279 = vst [vmem:[#allocation1] ss:$9 sm:$0xff] %v514
        %s2280 = scalar_lea.vmem [#allocation1], 1
        %2281 = vst [vmem:[%s2280] ss:$9 sm:$0xff] %v517
        %s2282 = scalar_lea.vmem [#allocation1], 2
        %2283 = vst [vmem:[%s2282] ss:$9 sm:$0xff] %v520
        %s2284 = scalar_lea.vmem [#allocation1], 3
        %2285 = vst [vmem:[%s2284] ss:$9 sm:$0xff] %v523
        %s2286 = scalar_lea.vmem [#allocation1], 4
        %2287 = vst [vmem:[%s2286] ss:$9 sm:$0xff] %v526
        %s2288 = scalar_lea.vmem [#allocation1], 5
        %2289 = vst [vmem:[%s2288] ss:$9 sm:$0xff] %v529
        %s2290 = scalar_lea.vmem [#allocation1], 6
        %2291 = vst [vmem:[%s2290] ss:$9 sm:$0xff] %v532
        %s2292 = scalar_lea.vmem [#allocation1], 7
        %2293 = vst [vmem:[%s2292] ss:$9 sm:$0xff] %v535
        %v2294 = vld [vmem:[#allocation1] sm:$0xff]
        %2295 = vst [vmem:[#allocation1] ss:$9 sm:$0xff] %v538
        %2296 = vst [vmem:[%s2280] ss:$9 sm:$0xff] %v541
        %2297 = vst [vmem:[%s2282] ss:$9 sm:$0xff] %v544
        %2298 = vst [vmem:[%s2284] ss:$9 sm:$0xff] %v547
        %2299 = vst [vmem:[%s2286] ss:$9 sm:$0xff] %v550
        %2300 = vst [vmem:[%s2288] ss:$9 sm:$0xff] %v553
        %2301 = vst [vmem:[%s2290] ss:$9 sm:$0xff] %v556
        %2302 = vst [vmem:[%s2292] ss:$9 sm:$0xff] %v559
        %v2303 = vld [vmem:[#allocation1] sm:$0xff]
        %2304 = vst [vmem:[#allocation1] ss:$9 sm:$0xff] %v562
        %2305 = vst [vmem:[%s2280] ss:$9 sm:$0xff] %v565
        %2306 = vst [vmem:[%s2282] ss:$9 sm:$0xff] %v568
        %2307 = vst [vmem:[%s2284] ss:$9 sm:$0xff] %v571
        %2308 = vst [vmem:[%s2286] ss:$9 sm:$0xff] %v574
        %2309 = vst [vmem:[%s2288] ss:$9 sm:$0xff] %v577
        %2310 = vst [vmem:[%s2290] ss:$9 sm:$0xff] %v580
        %2311 = vst [vmem:[%s2292] ss:$9 sm:$0xff] %v583
        %v2312 = vld [vmem:[#allocation1] sm:$0xff]
        %2313 = vst [vmem:[#allocation1] ss:$9 sm:$0xff] %v586
        %2314 = vst [vmem:[%s2280] ss:$9 sm:$0xff] %v589
        %2315 = vst [vmem:[%s2282] ss:$9 sm:$0xff] %v592
        %2316 = vst [vmem:[%s2284] ss:$9 sm:$0xff] %v595
        %2317 = vst [vmem:[%s2286] ss:$9 sm:$0xff] %v598
        %2318 = vst [vmem:[%s2288] ss:$9 sm:$0xff] %v601
        %2319 = vst [vmem:[%s2290] ss:$9 sm:$0xff] %v1340
        %2320 = vst [vmem:[%s2292] ss:$9 sm:$0xff] %v1343
        %v2321 = vld [vmem:[#allocation1] sm:$0xff]
        %2322 = vst [vmem:[#allocation1] ss:$9 sm:$0xff] %v1346
        %2323 = vst [vmem:[%s2280] ss:$9 sm:$0xff] %v1349
        %2324 = vst [vmem:[%s2282] ss:$9 sm:$0xff] %v1352
        %2325 = vst [vmem:[%s2284] ss:$9 sm:$0xff] %v2065
        %2326 = vst [vmem:[%s2286] ss:$9 sm:$0xff] %v2068
        %2327 = vst [vmem:[%s2288] ss:$9 sm:$0xff] %v2071
        %2328 = vst [vmem:[%s2290] ss:$9 sm:$0xff] %v2074
        %2329 = vst [vmem:[%s2292] ss:$9 sm:$0xff] %v2077
        %v2330 = vld [vmem:[#allocation1] sm:$0xff]
        %v2333 = vunpack.c.l.b16 %v2277
        %v2334 = vunpack.c.l.b16 %v2278
        %v2335 = vpack.c.b16 %v2334, %v2333
        %v2337 = vsel %vm686, %v2294, 0
        %v2339 = vsel %vm686, %v2303, 0
        %v2341 = vsel %vm686, %v2312, 0
        %v2343 = vsel %vm686, %v2321, 0
        %v2345 = vsel %vm686, %v2330, 0
        %2347 = vmatpush.bf16.msra.mxu0 0
        %2348 = vmatpush.bf16.msra.mxu0 0
        %2349 = vmatpush.bf16.msra.mxu0 0
        %2350 = vmatpush.bf16.msra.mxu0 0
        %2351 = vmatpush.bf16.msra.mxu0 0
        %2352 = vmatpush.bf16.msra.mxu0 0
        %2353 = vmatpush.bf16.msra.mxu0 0
        %2354 = vmatpush.bf16.msra.mxu0 %v2335
        %2355 = vmatmul.bf16.gmra.mxu0 %v2337
        %v2356 = vpop.f32.mrf.mxu0
        %v2357 = vadd.f32 0.0, %v2356
        %v2358 = vpop.f32.mrf.mxu0
        %v2359 = vadd.f32 0.0, %v2358
        %2360 = vmatmul.bf16.gmra.mxu0 %v2339
        %v2361 = vpop.f32.mrf.mxu0
        %v2362 = vadd.f32 0.0, %v2361
        %v2363 = vpop.f32.mrf.mxu0
        %v2364 = vadd.f32 0.0, %v2363
        %2365 = vmatmul.bf16.gmra.mxu0 %v2341
        %v2366 = vpop.f32.mrf.mxu0
        %v2367 = vadd.f32 0.0, %v2366
        %v2368 = vpop.f32.mrf.mxu0
        %v2369 = vadd.f32 0.0, %v2368
        %2370 = vmatmul.bf16.gmra.mxu0 %v2343
        %v2371 = vpop.f32.mrf.mxu0
        %v2372 = vadd.f32 0.0, %v2371
        %v2373 = vpop.f32.mrf.mxu0
        %v2374 = vadd.f32 0.0, %v2373
        %2375 = vmatmul.bf16.gmra.mxu0 %v2345
        %v2376 = vpop.f32.mrf.mxu0
        %v2377 = vadd.f32 0.0, %v2376
        %v2378 = vpop.f32.mrf.mxu0
        %v2379 = vadd.f32 0.0, %v2378
        %2380 = vdwg.mxu0
        %v2391 = vrot.slane %v2357, 2
        %v2392 = vrot.slane %v2357, 4
        %v2393 = vrot.slane %v2357, 6
        %v2394 = vrot.slane %v2359, 2
        %v2395 = vrot.slane %v2359, 4
        %v2396 = vrot.slane %v2359, 6
        %v2397 = vrot.slane %v2362, 2
        %v2398 = vrot.slane %v2362, 4
        %v2399 = vrot.slane %v2362, 6
        %v2400 = vrot.slane %v2364, 2
        %v2401 = vrot.slane %v2364, 4
        %v2402 = vrot.slane %v2364, 6
        %v2403 = vrot.slane %v2367, 2
        %v2404 = vrot.slane %v2367, 4
        %v2405 = vrot.slane %v2367, 6
        %v2406 = vrot.slane %v2369, 2
        %v2407 = vrot.slane %v2369, 4
        %v2408 = vrot.slane %v2369, 6
        %v2409 = vrot.slane %v2372, 2
        %v2410 = vrot.slane %v2372, 4
        %v2411 = vrot.slane %v2372, 6
        %v2412 = vrot.slane %v2374, 2
        %v2413 = vrot.slane %v2374, 4
        %v2414 = vrot.slane %v2374, 6
        %v2415 = vrot.slane %v2377, 2
        %v2416 = vrot.slane %v2377, 4
        %v2417 = vrot.slane %v2377, 6
        %v2418 = vrot.slane %v2379, 2
        %v2419 = vrot.slane %v2379, 4
        %v2420 = vrot.slane %v2379, 6
        %v2421 = vrot.slane %v2357, 7
        %v2422 = vrot.slane %v2421, 2
        %v2423 = vrot.slane %v2391, 7
        %v2424 = vsel %vm970, %v2422, %v2423
        %v2425 = vrot.slane %v2423, 2
        %v2426 = vrot.slane %v2392, 7
        %v2427 = vsel %vm970, %v2425, %v2426
        %v2428 = vrot.slane %v2426, 2
        %v2429 = vrot.slane %v2393, 7
        %v2430 = vsel %vm970, %v2428, %v2429
        %v2431 = vrot.slane %v2429, 2
        %v2432 = vrot.slane %v2359, 7
        %v2433 = vsel %vm970, %v2431, %v2432
        %v2434 = vrot.slane %v2394, 7
        %v2435 = vrot.slane %v2434, 2
        %v2436 = vrot.slane %v2395, 7
        %v2437 = vsel %vm970, %v2435, %v2436
        %v2438 = vrot.slane %v2436, 2
        %v2439 = vrot.slane %v2396, 7
        %v2440 = vsel %vm970, %v2438, %v2439
        %v2441 = vrot.slane %v2439, 2
        %v2442 = vrot.slane %v2362, 7
        %v2443 = vsel %vm970, %v2441, %v2442
        %v2444 = vrot.slane %v2442, 2
        %v2445 = vrot.slane %v2397, 7
        %v2446 = vsel %vm970, %v2444, %v2445
        %v2447 = vrot.slane %v2398, 7
        %v2448 = vrot.slane %v2447, 2
        %v2449 = vrot.slane %v2399, 7
        %v2450 = vsel %vm970, %v2448, %v2449
        %v2451 = vrot.slane %v2449, 2
        %v2452 = vrot.slane %v2364, 7
        %v2453 = vsel %vm970, %v2451, %v2452
        %v2454 = vrot.slane %v2452, 2
        %v2455 = vrot.slane %v2400, 7
        %v2456 = vsel %vm970, %v2454, %v2455
        %v2457 = vrot.slane %v2455, 2
        %v2458 = vrot.slane %v2401, 7
        %v2459 = vsel %vm970, %v2457, %v2458
        %v2460 = vrot.slane %v2402, 7
        %v2461 = vrot.slane %v2460, 2
        %v2462 = vrot.slane %v2367, 7
        %v2463 = vsel %vm970, %v2461, %v2462
        %v2464 = vrot.slane %v2462, 2
        %v2465 = vrot.slane %v2403, 7
        %v2466 = vsel %vm970, %v2464, %v2465
        %v2467 = vrot.slane %v2465, 2
        %v2468 = vrot.slane %v2404, 7
        %v2469 = vsel %vm970, %v2467, %v2468
        %v2470 = vrot.slane %v2468, 2
        %v2471 = vrot.slane %v2405, 7
        %v2472 = vsel %vm970, %v2470, %v2471
        %v2473 = vrot.slane %v2369, 7
        %v2474 = vrot.slane %v2473, 2
        %v2475 = vrot.slane %v2406, 7
        %v2476 = vsel %vm970, %v2474, %v2475
        %v2477 = vrot.slane %v2475, 2
        %v2478 = vrot.slane %v2407, 7
        %v2479 = vsel %vm970, %v2477, %v2478
        %v2480 = vrot.slane %v2478, 2
        %v2481 = vrot.slane %v2408, 7
        %v2482 = vsel %vm970, %v2480, %v2481
        %v2483 = vrot.slane %v2481, 2
        %v2484 = vrot.slane %v2372, 7
        %v2485 = vsel %vm970, %v2483, %v2484
        %v2486 = vrot.slane %v2409, 7
        %v2487 = vrot.slane %v2486, 2
        %v2488 = vrot.slane %v2410, 7
        %v2489 = vsel %vm970, %v2487, %v2488
        %v2490 = vrot.slane %v2488, 2
        %v2491 = vrot.slane %v2411, 7
        %v2492 = vsel %vm970, %v2490, %v2491
        %v2493 = vrot.slane %v2491, 2
        %v2494 = vrot.slane %v2374, 7
        %v2495 = vsel %vm970, %v2493, %v2494
        %v2496 = vrot.slane %v2494, 2
        %v2497 = vrot.slane %v2412, 7
        %v2498 = vsel %vm970, %v2496, %v2497
        %v2499 = vrot.slane %v2413, 7
        %v2500 = vrot.slane %v2499, 2
        %v2501 = vrot.slane %v2414, 7
        %v2502 = vsel %vm970, %v2500, %v2501
        %v2503 = vrot.slane %v2501, 2
        %v2504 = vrot.slane %v2377, 7
        %v2505 = vsel %vm970, %v2503, %v2504
        %v2506 = vrot.slane %v2504, 2
        %v2507 = vrot.slane %v2415, 7
        %v2508 = vsel %vm970, %v2506, %v2507
        %v2509 = vrot.slane %v2507, 2
        %v2510 = vrot.slane %v2416, 7
        %v2511 = vsel %vm970, %v2509, %v2510
        %v2512 = vrot.slane %v2417, 7
        %v2513 = vrot.slane %v2512, 2
        %v2514 = vrot.slane %v2379, 7
        %v2515 = vsel %vm970, %v2513, %v2514
        %v2516 = vrot.slane %v2514, 2
        %v2517 = vrot.slane %v2418, 7
        %v2518 = vsel %vm970, %v2516, %v2517
        %v2519 = vrot.slane %v2517, 2
        %v2520 = vrot.slane %v2419, 7
        %v2521 = vsel %vm970, %v2519, %v2520
        %v2522 = vrot.slane %v2520, 2
        %v2523 = vrot.slane %v2420, 7
        %v2524 = vsel %vm970, %v2522, %v2523
        %v2557 = vadd.f32 %v2244, %v2424
        %v2558 = vadd.f32 %v2245, %v2427
        %v2559 = vadd.f32 %v2246, %v2430
        %v2560 = vadd.f32 %v2247, %v2433
        %v2561 = vadd.f32 %v2248, %v2437
        %v2562 = vadd.f32 %v2249, %v2440
        %v2563 = vadd.f32 %v2250, %v2443
        %v2564 = vadd.f32 %v2251, %v2446
        %v2565 = vadd.f32 %v2252, %v2450
        %v2566 = vadd.f32 %v2253, %v2453
        %v2567 = vadd.f32 %v2254, %v2456
        %v2568 = vadd.f32 %v2255, %v2459
        %v2569 = vadd.f32 %v2256, %v2463
        %v2570 = vadd.f32 %v2257, %v2466
        %v2571 = vadd.f32 %v2258, %v2469
        %v2572 = vadd.f32 %v2259, %v2472
        %v2573 = vadd.f32 %v2260, %v2476
        %v2574 = vadd.f32 %v2261, %v2479
        %v2575 = vadd.f32 %v2262, %v2482
        %v2576 = vadd.f32 %v2263, %v2485
        %v2577 = vadd.f32 %v2264, %v2489
        %v2578 = vadd.f32 %v2265, %v2492
        %v2579 = vadd.f32 %v2266, %v2495
        %v2580 = vadd.f32 %v2267, %v2498
        %v2581 = vadd.f32 %v2268, %v2502
        %v2582 = vadd.f32 %v2269, %v2505
        %v2583 = vadd.f32 %v2270, %v2508
        %v2584 = vadd.f32 %v2271, %v2511
        %v2585 = vadd.f32 %v2272, %v2515
        %v2586 = vadd.f32 %v2273, %v2518
        %v2587 = vadd.f32 %v2274, %v2521
        %v2588 = vadd.f32 %v2275, %v2524
        %s2589 = scalar_lea.vmem [#allocation7], 64
        %v2590 = vld [vmem:[%s2589] sm:$0xf]
        %v2591 = vld [vmem:[%s2589 + $0x4] sm:$0xf]
        %2592 = vst [vmem:[#allocation1] ss:$9 sm:$0xff] %v514
        %s2593 = scalar_lea.vmem [#allocation1], 1
        %2594 = vst [vmem:[%s2593] ss:$9 sm:$0xff] %v517
        %s2595 = scalar_lea.vmem [#allocation1], 2
        %2596 = vst [vmem:[%s2595] ss:$9 sm:$0xff] %v520
        %s2597 = scalar_lea.vmem [#allocation1], 3
        %2598 = vst [vmem:[%s2597] ss:$9 sm:$0xff] %v523
        %s2599 = scalar_lea.vmem [#allocation1], 4
        %2600 = vst [vmem:[%s2599] ss:$9 sm:$0xff] %v526
        %s2601 = scalar_lea.vmem [#allocation1], 5
        %2602 = vst [vmem:[%s2601] ss:$9 sm:$0xff] %v529
        %s2603 = scalar_lea.vmem [#allocation1], 6
        %2604 = vst [vmem:[%s2603] ss:$9 sm:$0xff] %v532
        %s2605 = scalar_lea.vmem [#allocation1], 7
        %2606 = vst [vmem:[%s2605] ss:$9 sm:$0xff] %v535
        %v2607 = vld [vmem:[#allocation1] sm:$0xff]
        %2608 = vst [vmem:[#allocation1] ss:$9 sm:$0xff] %v538
        %2609 = vst [vmem:[%s2593] ss:$9 sm:$0xff] %v541
        %2610 = vst [vmem:[%s2595] ss:$9 sm:$0xff] %v544
        %2611 = vst [vmem:[%s2597] ss:$9 sm:$0xff] %v547
        %2612 = vst [vmem:[%s2599] ss:$9 sm:$0xff] %v550
        %2613 = vst [vmem:[%s2601] ss:$9 sm:$0xff] %v553
        %2614 = vst [vmem:[%s2603] ss:$9 sm:$0xff] %v556
        %2615 = vst [vmem:[%s2605] ss:$9 sm:$0xff] %v559
        %v2616 = vld [vmem:[#allocation1] sm:$0xff]
        %2617 = vst [vmem:[#allocation1] ss:$9 sm:$0xff] %v562
        %2618 = vst [vmem:[%s2593] ss:$9 sm:$0xff] %v565
        %2619 = vst [vmem:[%s2595] ss:$9 sm:$0xff] %v568
        %2620 = vst [vmem:[%s2597] ss:$9 sm:$0xff] %v571
        %2621 = vst [vmem:[%s2599] ss:$9 sm:$0xff] %v574
        %2622 = vst [vmem:[%s2601] ss:$9 sm:$0xff] %v577
        %2623 = vst [vmem:[%s2603] ss:$9 sm:$0xff] %v580
        %2624 = vst [vmem:[%s2605] ss:$9 sm:$0xff] %v583
        %v2625 = vld [vmem:[#allocation1] sm:$0xff]
        %2626 = vst [vmem:[#allocation1] ss:$9 sm:$0xff] %v586
        %2627 = vst [vmem:[%s2593] ss:$9 sm:$0xff] %v589
        %2628 = vst [vmem:[%s2595] ss:$9 sm:$0xff] %v592
        %2629 = vst [vmem:[%s2597] ss:$9 sm:$0xff] %v595
        %2630 = vst [vmem:[%s2599] ss:$9 sm:$0xff] %v598
        %2631 = vst [vmem:[%s2601] ss:$9 sm:$0xff] %v601
        %2632 = vst [vmem:[%s2603] ss:$9 sm:$0xff] %v1340
        %2633 = vst [vmem:[%s2605] ss:$9 sm:$0xff] %v1343
        %v2634 = vld [vmem:[#allocation1] sm:$0xff]
        %2635 = vst [vmem:[#allocation1] ss:$9 sm:$0xff] %v1346
        %2636 = vst [vmem:[%s2593] ss:$9 sm:$0xff] %v1349
        %2637 = vst [vmem:[%s2595] ss:$9 sm:$0xff] %v1352
        %2638 = vst [vmem:[%s2597] ss:$9 sm:$0xff] %v2065
        %2639 = vst [vmem:[%s2599] ss:$9 sm:$0xff] %v2068
        %2640 = vst [vmem:[%s2601] ss:$9 sm:$0xff] %v2071
        %2641 = vst [vmem:[%s2603] ss:$9 sm:$0xff] %v2074
        %2642 = vst [vmem:[%s2605] ss:$9 sm:$0xff] %v2077
        %v2643 = vld [vmem:[#allocation1] sm:$0xff]
        %v2646 = vunpack.c.l.b16 %v2590
        %v2647 = vunpack.c.l.b16 %v2591
        %v2648 = vpack.c.b16 %v2647, %v2646
        %v2650 = vsel %vm686, %v2607, 0
        %v2652 = vsel %vm686, %v2616, 0
        %v2654 = vsel %vm686, %v2625, 0
        %v2656 = vsel %vm686, %v2634, 0
        %v2658 = vsel %vm686, %v2643, 0
        %2660 = vmatpush.bf16.msra.mxu0 0
        %2661 = vmatpush.bf16.msra.mxu0 0
        %2662 = vmatpush.bf16.msra.mxu0 0
        %2663 = vmatpush.bf16.msra.mxu0 0
        %2664 = vmatpush.bf16.msra.mxu0 0
        %2665 = vmatpush.bf16.msra.mxu0 0
        %2666 = vmatpush.bf16.msra.mxu0 0
        %2667 = vmatpush.bf16.msra.mxu0 %v2648
        %2668 = vmatmul.bf16.gmra.mxu0 %v2650
        %v2669 = vpop.f32.mrf.mxu0
        %v2670 = vadd.f32 0.0, %v2669
        %v2671 = vpop.f32.mrf.mxu0
        %v2672 = vadd.f32 0.0, %v2671
        %2673 = vmatmul.bf16.gmra.mxu0 %v2652
        %v2674 = vpop.f32.mrf.mxu0
        %v2675 = vadd.f32 0.0, %v2674
        %v2676 = vpop.f32.mrf.mxu0
        %v2677 = vadd.f32 0.0, %v2676
        %2678 = vmatmul.bf16.gmra.mxu0 %v2654
        %v2679 = vpop.f32.mrf.mxu0
        %v2680 = vadd.f32 0.0, %v2679
        %v2681 = vpop.f32.mrf.mxu0
        %v2682 = vadd.f32 0.0, %v2681
        %2683 = vmatmul.bf16.gmra.mxu0 %v2656
        %v2684 = vpop.f32.mrf.mxu0
        %v2685 = vadd.f32 0.0, %v2684
        %v2686 = vpop.f32.mrf.mxu0
        %v2687 = vadd.f32 0.0, %v2686
        %2688 = vmatmul.bf16.gmra.mxu0 %v2658
        %v2689 = vpop.f32.mrf.mxu0
        %v2690 = vadd.f32 0.0, %v2689
        %v2691 = vpop.f32.mrf.mxu0
        %v2692 = vadd.f32 0.0, %v2691
        %2693 = vdwg.mxu0
        %v2704 = vrot.slane %v2670, 2
        %v2705 = vrot.slane %v2670, 4
        %v2706 = vrot.slane %v2670, 6
        %v2707 = vrot.slane %v2672, 4
        %v2708 = vrot.slane %v2672, 6
        %v2709 = vrot.slane %v2675, 2
        %v2710 = vrot.slane %v2675, 6
        %v2711 = vrot.slane %v2677, 2
        %v2712 = vrot.slane %v2677, 4
        %v2713 = vrot.slane %v2680, 2
        %v2714 = vrot.slane %v2680, 4
        %v2715 = vrot.slane %v2680, 6
        %v2716 = vrot.slane %v2682, 2
        %v2717 = vrot.slane %v2682, 4
        %v2718 = vrot.slane %v2682, 6
        %v2719 = vrot.slane %v2685, 4
        %v2720 = vrot.slane %v2685, 6
        %v2721 = vrot.slane %v2687, 2
        %v2722 = vrot.slane %v2687, 6
        %v2723 = vrot.slane %v2690, 2
        %v2724 = vrot.slane %v2690, 4
        %v2725 = vrot.slane %v2692, 2
        %v2726 = vrot.slane %v2692, 4
        %v2727 = vrot.slane %v2692, 6
        %v2752 = vadd.f32 %v2557, %v2704
        %v2753 = vadd.f32 %v2558, %v2705
        %v2754 = vadd.f32 %v2559, %v2706
        %v2755 = vadd.f32 %v2560, %v2672
        %v2756 = vadd.f32 %v2561, %v2707
        %v2757 = vadd.f32 %v2562, %v2708
        %v2758 = vadd.f32 %v2563, %v2675
        %v2759 = vadd.f32 %v2564, %v2709
        %v2760 = vadd.f32 %v2565, %v2710
        %v2761 = vadd.f32 %v2566, %v2677
        %v2762 = vadd.f32 %v2567, %v2711
        %v2763 = vadd.f32 %v2568, %v2712
        %v2764 = vadd.f32 %v2569, %v2680
        %v2765 = vadd.f32 %v2570, %v2713
        %v2766 = vadd.f32 %v2571, %v2714
        %v2767 = vadd.f32 %v2572, %v2715
        %v2768 = vadd.f32 %v2573, %v2716
        %v2769 = vadd.f32 %v2574, %v2717
        %v2770 = vadd.f32 %v2575, %v2718
        %v2771 = vadd.f32 %v2576, %v2685
        %v2772 = vadd.f32 %v2577, %v2719
        %v2773 = vadd.f32 %v2578, %v2720
        %v2774 = vadd.f32 %v2579, %v2687
        %v2775 = vadd.f32 %v2580, %v2721
        %v2776 = vadd.f32 %v2581, %v2722
        %v2777 = vadd.f32 %v2582, %v2690
        %v2778 = vadd.f32 %v2583, %v2723
        %v2779 = vadd.f32 %v2584, %v2724
        %v2780 = vadd.f32 %v2585, %v2692
        %v2781 = vadd.f32 %v2586, %v2725
        %v2782 = vadd.f32 %v2587, %v2726
        %v2783 = vadd.f32 %v2588, %v2727
        %v2784 = vld [vmem:[%s3] sm:$0x1]
        %v2786 = vperm.slane %v2784, 0
        %v2788 = vrot.slane %v2786, 2
        %v2789 = vrot.slane %v2786, 4
        %v2790 = vrot.slane %v2786, 6
        %v2794 = vadd.f32 %v2752, %v2786
        %v2795 = vadd.f32 %v2753, %v2788
        %v2796 = vadd.f32 %v2754, %v2789
        %v2797 = vadd.f32 %v2755, %v2790
        %v2798 = vadd.f32 %v2756, %v2786
        %v2799 = vadd.f32 %v2757, %v2788
        %v2800 = vadd.f32 %v2758, %v2789
        %v2801 = vadd.f32 %v2759, %v2790
        %v2802 = vadd.f32 %v2760, %v2786
        %v2803 = vadd.f32 %v2761, %v2788
        %v2804 = vadd.f32 %v2762, %v2789
        %v2805 = vadd.f32 %v2763, %v2790
        %v2806 = vadd.f32 %v2764, %v2786
        %v2807 = vadd.f32 %v2765, %v2788
        %v2808 = vadd.f32 %v2766, %v2789
        %v2809 = vadd.f32 %v2767, %v2790
        %v2810 = vadd.f32 %v2768, %v2786
        %v2811 = vadd.f32 %v2769, %v2788
        %v2812 = vadd.f32 %v2770, %v2789
        %v2813 = vadd.f32 %v2771, %v2790
        %v2814 = vadd.f32 %v2772, %v2786
        %v2815 = vadd.f32 %v2773, %v2788
        %v2816 = vadd.f32 %v2774, %v2789
        %v2817 = vadd.f32 %v2775, %v2790
        %v2818 = vadd.f32 %v2776, %v2786
        %v2819 = vadd.f32 %v2777, %v2788
        %v2820 = vadd.f32 %v2778, %v2789
        %v2821 = vadd.f32 %v2779, %v2790
        %v2822 = vadd.f32 %v2780, %v2786
        %v2823 = vadd.f32 %v2781, %v2788
        %v2824 = vadd.f32 %v2782, %v2789
        %v2825 = vadd.f32 %v2783, %v2790
        %2858 = vst [vmem:[#allocation1] ss:$4 sm:$0xff] %v2794
        %s2859 = scalar_lea.vmem [#allocation1], 1
        %2860 = vst [vmem:[%s2859] ss:$4 sm:$0xff] %v2795
        %s2861 = scalar_lea.vmem [#allocation1], 2
        %2862 = vst [vmem:[%s2861] ss:$4 sm:$0xff] %v2796
        %s2863 = scalar_lea.vmem [#allocation1], 3
        %2864 = vst [vmem:[%s2863] ss:$4 sm:$0xff] %v2797
        %v2865 = vld.sshfl [vmem:[#allocation1] sm:$0xff pattern:$0x73625140]
        %s2866 = scalar_lea.vmem [#allocation1], 32
        %2867 = vst [vmem:[%s2866] ss:$4 sm:$0xff] %v2798
        %s2868 = scalar_lea.vmem [#allocation1], 33
        %2869 = vst [vmem:[%s2868] ss:$4 sm:$0xff] %v2799
        %s2870 = scalar_lea.vmem [#allocation1], 34
        %2871 = vst [vmem:[%s2870] ss:$4 sm:$0xff] %v2800
        %s2872 = scalar_lea.vmem [#allocation1], 35
        %2873 = vst [vmem:[%s2872] ss:$4 sm:$0xff] %v2801
        %v2874 = vld.sshfl [vmem:[#allocation1 + $0x20] sm:$0xff pattern:$0x73625140]
        %2875 = vst [vmem:[#allocation1] ss:$4 sm:$0xff] %v2802
        %2876 = vst [vmem:[%s2859] ss:$4 sm:$0xff] %v2803
        %2877 = vst [vmem:[%s2861] ss:$4 sm:$0xff] %v2804
        %2878 = vst [vmem:[%s2863] ss:$4 sm:$0xff] %v2805
        %v2879 = vld.sshfl [vmem:[#allocation1] sm:$0xff pattern:$0x73625140]
        %2880 = vst [vmem:[%s2866] ss:$4 sm:$0xff] %v2806
        %2881 = vst [vmem:[%s2868] ss:$4 sm:$0xff] %v2807
        %2882 = vst [vmem:[%s2870] ss:$4 sm:$0xff] %v2808
        %2883 = vst [vmem:[%s2872] ss:$4 sm:$0xff] %v2809
        %v2884 = vld.sshfl [vmem:[#allocation1 + $0x20] sm:$0xff pattern:$0x73625140]
        %2885 = vst [vmem:[#allocation1] ss:$4 sm:$0xff] %v2810
        %2886 = vst [vmem:[%s2859] ss:$4 sm:$0xff] %v2811
        %2887 = vst [vmem:[%s2861] ss:$4 sm:$0xff] %v2812
        %2888 = vst [vmem:[%s2863] ss:$4 sm:$0xff] %v2813
        %v2889 = vld.sshfl [vmem:[#allocation1] sm:$0xff pattern:$0x73625140]
        %2890 = vst [vmem:[%s2866] ss:$4 sm:$0xff] %v2814
        %2891 = vst [vmem:[%s2868] ss:$4 sm:$0xff] %v2815
        %2892 = vst [vmem:[%s2870] ss:$4 sm:$0xff] %v2816
        %2893 = vst [vmem:[%s2872] ss:$4 sm:$0xff] %v2817
        %v2894 = vld.sshfl [vmem:[#allocation1 + $0x20] sm:$0xff pattern:$0x73625140]
        %2895 = vst [vmem:[#allocation1] ss:$4 sm:$0xff] %v2818
        %2896 = vst [vmem:[%s2859] ss:$4 sm:$0xff] %v2819
        %2897 = vst [vmem:[%s2861] ss:$4 sm:$0xff] %v2820
        %2898 = vst [vmem:[%s2863] ss:$4 sm:$0xff] %v2821
        %v2899 = vld.sshfl [vmem:[#allocation1] sm:$0xff pattern:$0x73625140]
        %2900 = vst [vmem:[%s2866] ss:$4 sm:$0xff] %v2822
        %2901 = vst [vmem:[%s2868] ss:$4 sm:$0xff] %v2823
        %2902 = vst [vmem:[%s2870] ss:$4 sm:$0xff] %v2824
        %2903 = vst [vmem:[%s2872] ss:$4 sm:$0xff] %v2825
        %v2904 = vld.sshfl [vmem:[#allocation1 + $0x20] sm:$0xff pattern:$0x73625140]
        %vm2913 = vcmask 523264
        %2914 = vst.msk [vmem:[%s328] sm:$0xff] %vm2913, %v2865
        %2915 = vst.msk [vmem:[%s328 + $0x8] sm:$0xff] %vm2913, %v2874
        %2916 = vst.msk [vmem:[%s328 + $0x10] sm:$0xff] %vm2913, %v2879
        %2917 = vst.msk [vmem:[%s328 + $0x18] sm:$0xff] %vm2913, %v2884
        %2918 = vst.msk [vmem:[%s328 + $0x20] sm:$0xff] %vm2913, %v2889
        %2919 = vst.msk [vmem:[%s328 + $0x28] sm:$0xff] %vm2913, %v2894
        %2920 = vst.msk [vmem:[%s328 + $0x30] sm:$0xff] %vm2913, %v2899
        %2921 = vst.msk [vmem:[%s328 + $0x38] sm:$0xff] %vm2913, %v2904
        %2922 = vst [vmem:[#allocation1] ss:$4 sm:$0xff] %v2794
        %s2923 = scalar_lea.vmem [#allocation1], 1
        %2924 = vst [vmem:[%s2923] ss:$4 sm:$0xff] %v2795
        %s2925 = scalar_lea.vmem [#allocation1], 2
        %2926 = vst [vmem:[%s2925] ss:$4 sm:$0xff] %v2796
        %s2927 = scalar_lea.vmem [#allocation1], 3
        %2928 = vst [vmem:[%s2927] ss:$4 sm:$0xff] %v2797
        %s2929 = scalar_lea.vmem [#allocation1], 32
        %2930 = vst [vmem:[%s2929] ss:$4 sm:$0xff] %v2798
        %s2931 = scalar_lea.vmem [#allocation1], 33
        %2932 = vst [vmem:[%s2931] ss:$4 sm:$0xff] %v2799
        %s2933 = scalar_lea.vmem [#allocation1], 34
        %2934 = vst [vmem:[%s2933] ss:$4 sm:$0xff] %v2800
        %s2935 = scalar_lea.vmem [#allocation1], 35
        %2936 = vst [vmem:[%s2935] ss:$4 sm:$0xff] %v2801
        %v2937 = vld.sshfl [vmem:[#allocation1] sm:$0xff pattern:$0x73625140]
        %v2938 = vld.sshfl [vmem:[#allocation1 + $0x20] sm:$0xff pattern:$0x73625140]
        %2939 = vst [vmem:[#allocation1] ss:$4 sm:$0xff] %v2802
        %2940 = vst [vmem:[%s2923] ss:$4 sm:$0xff] %v2803
        %2941 = vst [vmem:[%s2925] ss:$4 sm:$0xff] %v2804
        %2942 = vst [vmem:[%s2927] ss:$4 sm:$0xff] %v2805
        %2943 = vst [vmem:[%s2929] ss:$4 sm:$0xff] %v2806
        %2944 = vst [vmem:[%s2931] ss:$4 sm:$0xff] %v2807
        %2945 = vst [vmem:[%s2933] ss:$4 sm:$0xff] %v2808
        %2946 = vst [vmem:[%s2935] ss:$4 sm:$0xff] %v2809
        %v2947 = vld.sshfl [vmem:[#allocation1] sm:$0xff pattern:$0x73625140]
        %v2948 = vld.sshfl [vmem:[#allocation1 + $0x20] sm:$0xff pattern:$0x73625140]
        %2949 = vst [vmem:[#allocation1] ss:$4 sm:$0xff] %v2810
        %2950 = vst [vmem:[%s2923] ss:$4 sm:$0xff] %v2811
        %2951 = vst [vmem:[%s2925] ss:$4 sm:$0xff] %v2812
        %2952 = vst [vmem:[%s2927] ss:$4 sm:$0xff] %v2813
        %2953 = vst [vmem:[%s2929] ss:$4 sm:$0xff] %v2814
        %2954 = vst [vmem:[%s2931] ss:$4 sm:$0xff] %v2815
        %2955 = vst [vmem:[%s2933] ss:$4 sm:$0xff] %v2816
        %2956 = vst [vmem:[%s2935] ss:$4 sm:$0xff] %v2817
        %v2957 = vld.sshfl [vmem:[#allocation1] sm:$0xff pattern:$0x73625140]
        %v2958 = vld.sshfl [vmem:[#allocation1 + $0x20] sm:$0xff pattern:$0x73625140]
        %2959 = vst [vmem:[#allocation1] ss:$4 sm:$0xff] %v2818
        %2960 = vst [vmem:[%s2923] ss:$4 sm:$0xff] %v2819
        %2961 = vst [vmem:[%s2925] ss:$4 sm:$0xff] %v2820
        %2962 = vst [vmem:[%s2927] ss:$4 sm:$0xff] %v2821
        %2963 = vst [vmem:[%s2929] ss:$4 sm:$0xff] %v2822
        %2964 = vst [vmem:[%s2931] ss:$4 sm:$0xff] %v2823
        %2965 = vst [vmem:[%s2933] ss:$4 sm:$0xff] %v2824
        %2966 = vst [vmem:[%s2935] ss:$4 sm:$0xff] %v2825
        %v2967 = vld.sshfl [vmem:[#allocation1] sm:$0xff pattern:$0x73625140]
        %v2968 = vld.sshfl [vmem:[#allocation1 + $0x20] sm:$0xff pattern:$0x73625140]
        %v2977 = vsel %vm2913, %v2937, 0.0
        %v2978 = vsel %vm2913, %v2938, 0.0
        %v2979 = vadd.f32 %v2977, %v2978
        %v2980 = vsel %vm2913, %v2947, 0.0
        %v2981 = vadd.f32 %v2979, %v2980
        %v2982 = vsel %vm2913, %v2948, 0.0
        %v2983 = vadd.f32 %v2981, %v2982
        %v2984 = vsel %vm2913, %v2957, 0.0
        %v2985 = vadd.f32 %v2983, %v2984
        %v2986 = vsel %vm2913, %v2958, 0.0
        %v2987 = vadd.f32 %v2985, %v2986
        %v2988 = vsel %vm2913, %v2967, 0.0
        %v2989 = vadd.f32 %v2987, %v2988
        %v2990 = vsel %vm2913, %v2968, 0.0
        %v2991 = vadd.f32 %v2989, %v2990
        %v2992 = vrot.slane %v2991, 4
        %v2993 = vadd.f32 %v2991, %v2992
        %v2994 = vrot.slane %v2993, 2
        %v2995 = vadd.f32 %v2993, %v2994
        %v2996 = vrot.slane %v2995, 1
        %v2997 = vadd.f32 %v2995, %v2996
        %v2998 = vmul.f32 %v2794, %v2794
        %v2999 = vmul.f32 %v2795, %v2795
        %v3000 = vmul.f32 %v2796, %v2796
        %v3001 = vmul.f32 %v2797, %v2797
        %v3002 = vmul.f32 %v2798, %v2798
        %v3003 = vmul.f32 %v2799, %v2799
        %v3004 = vmul.f32 %v2800, %v2800
        %v3005 = vmul.f32 %v2801, %v2801
        %v3006 = vmul.f32 %v2802, %v2802
        %v3007 = vmul.f32 %v2803, %v2803
        %v3008 = vmul.f32 %v2804, %v2804
        %v3009 = vmul.f32 %v2805, %v2805
        %v3010 = vmul.f32 %v2806, %v2806
        %v3011 = vmul.f32 %v2807, %v2807
        %v3012 = vmul.f32 %v2808, %v2808
        %v3013 = vmul.f32 %v2809, %v2809
        %v3014 = vmul.f32 %v2810, %v2810
        %v3015 = vmul.f32 %v2811, %v2811
        %v3016 = vmul.f32 %v2812, %v2812
        %v3017 = vmul.f32 %v2813, %v2813
        %v3018 = vmul.f32 %v2814, %v2814
        %v3019 = vmul.f32 %v2815, %v2815
        %v3020 = vmul.f32 %v2816, %v2816
        %v3021 = vmul.f32 %v2817, %v2817
        %v3022 = vmul.f32 %v2818, %v2818
        %v3023 = vmul.f32 %v2819, %v2819
        %v3024 = vmul.f32 %v2820, %v2820
        %v3025 = vmul.f32 %v2821, %v2821
        %v3026 = vmul.f32 %v2822, %v2822
        %v3027 = vmul.f32 %v2823, %v2823
        %v3028 = vmul.f32 %v2824, %v2824
        %v3029 = vmul.f32 %v2825, %v2825
        %3062 = vst [vmem:[#allocation1] ss:$4 sm:$0xff] %v2998
        %s3063 = scalar_lea.vmem [#allocation1], 1
        %3064 = vst [vmem:[%s3063] ss:$4 sm:$0xff] %v2999
        %s3065 = scalar_lea.vmem [#allocation1], 2
        %3066 = vst [vmem:[%s3065] ss:$4 sm:$0xff] %v3000
        %s3067 = scalar_lea.vmem [#allocation1], 3
        %3068 = vst [vmem:[%s3067] ss:$4 sm:$0xff] %v3001
        %s3069 = scalar_lea.vmem [#allocation1], 32
        %3070 = vst [vmem:[%s3069] ss:$4 sm:$0xff] %v3002
        %s3071 = scalar_lea.vmem [#allocation1], 33
        %3072 = vst [vmem:[%s3071] ss:$4 sm:$0xff] %v3003
        %s3073 = scalar_lea.vmem [#allocation1], 34
        %3074 = vst [vmem:[%s3073] ss:$4 sm:$0xff] %v3004
        %s3075 = scalar_lea.vmem [#allocation1], 35
        %3076 = vst [vmem:[%s3075] ss:$4 sm:$0xff] %v3005
        %v3077 = vld.sshfl [vmem:[#allocation1] sm:$0xff pattern:$0x73625140]
        %v3078 = vld.sshfl [vmem:[#allocation1 + $0x20] sm:$0xff pattern:$0x73625140]
        %3079 = vst [vmem:[#allocation1] ss:$4 sm:$0xff] %v3006
        %3080 = vst [vmem:[%s3063] ss:$4 sm:$0xff] %v3007
        %3081 = vst [vmem:[%s3065] ss:$4 sm:$0xff] %v3008
        %3082 = vst [vmem:[%s3067] ss:$4 sm:$0xff] %v3009
        %3083 = vst [vmem:[%s3069] ss:$4 sm:$0xff] %v3010
        %3084 = vst [vmem:[%s3071] ss:$4 sm:$0xff] %v3011
        %3085 = vst [vmem:[%s3073] ss:$4 sm:$0xff] %v3012
        %3086 = vst [vmem:[%s3075] ss:$4 sm:$0xff] %v3013
        %v3087 = vld.sshfl [vmem:[#allocation1] sm:$0xff pattern:$0x73625140]
        %v3088 = vld.sshfl [vmem:[#allocation1 + $0x20] sm:$0xff pattern:$0x73625140]
        %3089 = vst [vmem:[#allocation1] ss:$4 sm:$0xff] %v3014
        %3090 = vst [vmem:[%s3063] ss:$4 sm:$0xff] %v3015
        %3091 = vst [vmem:[%s3065] ss:$4 sm:$0xff] %v3016
        %3092 = vst [vmem:[%s3067] ss:$4 sm:$0xff] %v3017
        %3093 = vst [vmem:[%s3069] ss:$4 sm:$0xff] %v3018
        %3094 = vst [vmem:[%s3071] ss:$4 sm:$0xff] %v3019
        %3095 = vst [vmem:[%s3073] ss:$4 sm:$0xff] %v3020
        %3096 = vst [vmem:[%s3075] ss:$4 sm:$0xff] %v3021
        %v3097 = vld.sshfl [vmem:[#allocation1] sm:$0xff pattern:$0x73625140]
        %v3098 = vld.sshfl [vmem:[#allocation1 + $0x20] sm:$0xff pattern:$0x73625140]
        %3099 = vst [vmem:[#allocation1] ss:$4 sm:$0xff] %v3022
        %3100 = vst [vmem:[%s3063] ss:$4 sm:$0xff] %v3023
        %3101 = vst [vmem:[%s3065] ss:$4 sm:$0xff] %v3024
        %3102 = vst [vmem:[%s3067] ss:$4 sm:$0xff] %v3025
        %3103 = vst [vmem:[%s3069] ss:$4 sm:$0xff] %v3026
        %3104 = vst [vmem:[%s3071] ss:$4 sm:$0xff] %v3027
        %3105 = vst [vmem:[%s3073] ss:$4 sm:$0xff] %v3028
        %3106 = vst [vmem:[%s3075] ss:$4 sm:$0xff] %v3029
        %v3107 = vld.sshfl [vmem:[#allocation1] sm:$0xff pattern:$0x73625140]
        %v3108 = vld.sshfl [vmem:[#allocation1 + $0x20] sm:$0xff pattern:$0x73625140]
        %v3117 = vsel %vm2913, %v3077, 0.0
        %v3118 = vsel %vm2913, %v3078, 0.0
        %v3119 = vadd.f32 %v3117, %v3118
        %v3120 = vsel %vm2913, %v3087, 0.0
        %v3121 = vadd.f32 %v3119, %v3120
        %v3122 = vsel %vm2913, %v3088, 0.0
        %v3123 = vadd.f32 %v3121, %v3122
        %v3124 = vsel %vm2913, %v3097, 0.0
        %v3125 = vadd.f32 %v3123, %v3124
        %v3126 = vsel %vm2913, %v3098, 0.0
        %v3127 = vadd.f32 %v3125, %v3126
        %v3128 = vsel %vm2913, %v3107, 0.0
        %v3129 = vadd.f32 %v3127, %v3128
        %v3130 = vsel %vm2913, %v3108, 0.0
        %v3131 = vadd.f32 %v3129, %v3130
        %v3132 = vrot.slane %v3131, 4
        %v3133 = vadd.f32 %v3131, %v3132
        %v3134 = vrot.slane %v3133, 2
        %v3135 = vadd.f32 %v3133, %v3134
        %v3136 = vrot.slane %v3135, 1
        %v3137 = vadd.f32 %v3135, %v3136
        %v3138 = vsel %vm380, %v2997, %v3137
        // Predicated region
        $region49: #{tpu_custom_call.1} parent=35 // pred_check
          %p3139 = pneg %p401
        $region50: #{tpu_custom_call.1} parent=35 // pred_check_branch
          %3141 = sbr.rel (%p3139) target = $region52
        $region51: #{tpu_custom_call.1} parent=35 // pred_region
          %vm3142 = vcmask 517120
          %3143 = vst.msk [vmem:[%s335] sm:$0x3] %vm3142, 0.0
        $region52: #{tpu_custom_call.1} parent=35 // pred_fallthru
          _
        %v3144 = vld [vmem:[%s335] sm:$0x3]
        %v3145 = vadd.f32 %v3144, %v3138
        %vm3146 = vcmask 517120
        %3147 = vst.msk [vmem:[%s335] sm:$0x3] %vm3146, %v3145
        %s3148 = sand.u32 %s149, 1
        %s3149 = scalar_lea.sflag [#allocation4], %s3148
        %s3150 = sand.u32 %s149, 1
        %s3151 = smul.addr %s3150, 64
        %s3152 = scalar_lea.vmem [#allocation8], %s3151
        %s3153 = sand.u32 %s175, 1
        %s3154 = scalar_lea.sflag [#allocation10], %s3153
        %s3155 = sand.u32 %s175, 1
        %s3156 = smul.addr %s3155, 2
        %s3157 = scalar_lea.vmem [#allocation9], %s3156
        // Predicated region
        $region53: #{tpu_custom_call.1} parent=35 // pred_check
          %p3158 = pneg %p159
        $region54: #{tpu_custom_call.1} parent=35 // pred_check_branch
          %3160 = sbr.rel (%p3158) target = $region56
        $region55: #{tpu_custom_call.1} parent=35 // pred_region
          %s3161 = smul.u32 8, %s34
          %3163 = vsyncadd %s3149, 0
          %s3164 = smul.addr %s33, 8
          %s3165 = sadd.s32 %s3161, %s3164
          %s3166 = smul.addr %s3165, 8
          %s3167 = scalar_lea.hbm %s4, %s3166
          %s3168 = sshll.u32 %s3152, 4
          %s3169 = int_to_ptr.vmem [resolvable:$true] %s3168
          %s3170 = sshll.u32 %s3167, 4
          %s3171 = int_to_ptr.hbm [resolvable:$true] %s3170
          %3176 = dma.vmem_to_hbm [thread:$0]  %s3169, 1024, %s3171, %s3149, 128, 128, 8
        $region56: #{tpu_custom_call.1} parent=35 // pred_fallthru
          _
        // Predicated region
        $region57: #{tpu_custom_call.1} parent=35 // pred_check
          %p3177 = pneg %p185
        $region58: #{tpu_custom_call.1} parent=35 // pred_check_branch
          %3179 = sbr.rel (%p3177) target = $region60
        $region59: #{tpu_custom_call.1} parent=35 // pred_region
          %3181 = vsyncadd %s3154, 0
          %s3182 = smul.addr %s33, 2
          %s3183 = scalar_lea.hbm %s5, %s3182
          %s3185 = sshll.u32 %s3157, 4
          %s3186 = int_to_ptr.vmem [resolvable:$true] %s3185
          %s3187 = sshll.u32 %s3183, 4
          %s3188 = int_to_ptr.hbm [resolvable:$true] %s3187
          %3190 = dma.vmem_to_hbm [thread:$0]  %s3186, 32, %s3188, %s3154
        $region60: #{tpu_custom_call.1} parent=35 // pred_fallthru
          _
      $region36: #{tpu_custom_call.1} parent=5 // pred_fallthru
        _
      %p3191 = scmp.le.s32.totalorder 2, %s24
      // Predicated region
      $region61: #{tpu_custom_call.1} parent=5 // pred_check
        %p3192 = pneg %p3191
      $region62: #{tpu_custom_call.1} parent=5 // pred_check_branch
        %3194 = sbr.rel (%p3192) target = $region64
      $region63: #{tpu_custom_call.1} parent=5 // pred_region
        %s3195 = ssub.s32 %s24, 2
        // Predicated region
        $region65: #{tpu_custom_call.1} parent=63 // pred_check
          %p3196 = pneg %p165
        $region66: #{tpu_custom_call.1} parent=63 // pred_check_branch
          %3198 = sbr.rel (%p3196) target = $region68
        $region67: #{tpu_custom_call.1} parent=63 // pred_region
          %s3199 = sand.u32 %s150, 1
          %s3200 = scalar_lea.sflag [#allocation4], %s3199
          %s3201 = sand.u32 %s150, 1
          %s3202 = smul.addr %s3201, 64
          %s3203 = scalar_lea.vmem [#allocation8], %s3202
          %3205 = dma.done %s3200, 1024
        $region68: #{tpu_custom_call.1} parent=63 // pred_fallthru
          _
        // Predicated region
        $region69: #{tpu_custom_call.1} parent=63 // pred_check
          %p3206 = pneg %p191
        $region70: #{tpu_custom_call.1} parent=63 // pred_check_branch
          %3208 = sbr.rel (%p3206) target = $region72
        $region71: #{tpu_custom_call.1} parent=63 // pred_region
          %s3209 = sand.u32 %s176, 1
          %s3210 = scalar_lea.sflag [#allocation10], %s3209
          %s3211 = sand.u32 %s176, 1
          %s3212 = smul.addr %s3211, 2
          %s3213 = scalar_lea.vmem [#allocation9], %s3212
          %3215 = dma.done %s3210, 32
        $region72: #{tpu_custom_call.1} parent=63 // pred_fallthru
          _
      $region64: #{tpu_custom_call.1} parent=5 // pred_fallthru
        _
    $region6: #{tpu_custom_call.1} parent=1 // loop_footer
      %s28 = sadd.s32 1, %s24
    $region7: #{tpu_custom_call.1} parent=1 // loop_footer_branch
      %23 = sbr.rel target = $region3
    $region8: #{tpu_custom_call.1} parent=1 // loop_exit
      _
    %3216 = vsyncpa [#allocation3], 1
    %s3217 = scalar_lea.sflag [#allocation3], 1
    %3218 = vsyncpa %s3217, 1
    %3219 = vsyncpa [#allocation6], 1
    %s3220 = scalar_lea.sflag [#allocation6], 1
    %3221 = vsyncpa %s3220, 1
    %3222 = vsyncpa [#allocation4], 1
    %s3223 = scalar_lea.sflag [#allocation4], 1
    %3224 = vsyncpa %s3223, 1
    %3225 = vsyncpa [#allocation10], 1
    %s3226 = scalar_lea.sflag [#allocation10], 1
    %3227 = vsyncpa %s3226, 1

</llo_original>
